<compile_context>
chip_gen: v6e
topology: v6e:2x2x1
jax: 0.10.0
libtpu: 0.0.40
codegen_flags: <defaults>
</compile_context>

<pallas_src>
import functools

import jax
import jax.numpy as jnp
import numpy as np
from jax.experimental import pallas as pl
from jax.experimental.pallas import tpu as pltpu


def _double_conv_kernel(x_ref, w1_ref, s1_ref, b1_ref, w2_ref, s2_ref, b2_ref,
                        o_ref, xpad_ref, mid_ref):
    """Fused (conv3x3 + BN + ReLU) x 2 for one image per grid step.

    x_ref:    (1, H, W, Cin)      unpadded input image (compute dtype)
    w1_ref:   (9*Cin, Cp)         im2col-flattened conv1 weights
    s1/b1:    (1, Cp) f32         folded BN1 scale / shift (conv bias included)
    w2_ref:   (9*Cp, Cp)          im2col-flattened conv2 weights
    s2/b2:    (1, Cp) f32         folded BN2 scale / shift
    o_ref:    (1, Cout, H*W)      NCHW-flat output (lane-dense, no channel padding)
    xpad_ref: (H+2, W+2, Cin)     VMEM scratch: input with zero halo
    mid_ref:  (H+2, W+2, Cp)      VMEM scratch: conv1 activation with zero halo
    """
    H = x_ref.shape[1]
    W = x_ref.shape[2]
    Cin = x_ref.shape[3]
    Cout = o_ref.shape[1]
    Cp = w1_ref.shape[1]

    def conv3x3(src_ref, w_ref, c):
        # im2col slab once, then a single big-K matmul on the MXU.
        cols = [src_ref[ky:ky + H, kx:kx + W, :]
                for ky in range(3) for kx in range(3)]
        patches = jnp.concatenate(cols, axis=-1).reshape(H * W, 9 * c)
        return jnp.dot(patches, w_ref[...], preferred_element_type=jnp.float32)

    # ---- stage 1: conv1 + folded BN + ReLU (f32 epilogue) ------------------
    xpad_ref[...] = jnp.zeros_like(xpad_ref)                       # zero halo
    xpad_ref[1:H + 1, 1:W + 1, :] = x_ref[0].astype(xpad_ref.dtype)
    acc1 = conv3x3(xpad_ref, w1_ref, Cin)                          # (H*W, Cp) f32
    y1 = jnp.maximum(acc1 * s1_ref[0] + b1_ref[0], 0.0)

    # ---- stage 2: conv2 on the VMEM-resident intermediate (no HBM trip) ----
    mid_ref[...] = jnp.zeros_like(mid_ref)
    mid_ref[1:H + 1, 1:W + 1, :] = y1.reshape(H, W, Cp).astype(mid_ref.dtype)
    acc2 = conv3x3(mid_ref, w2_ref, Cp)
    y2 = jnp.maximum(acc2 * s2_ref[0] + b2_ref[0], 0.0)           # (H*W, Cp) f32

    # ---- NCHW-flat writeback: aligned XLU transpose, drop channel padding --
    o_ref[0] = y2.T[:Cout, :].astype(o_ref.dtype)


def _round_up(x, m):
    return (x + m - 1) // m * m


def _fold_bn(conv_b, gamma, beta, running_mean, running_var, eps=1e-5):
    """Fold conv bias + eval-mode BatchNorm into per-channel (scale, shift)."""
    inv_std = 1.0 / jnp.sqrt(running_var + eps)
    scale = gamma * inv_std
    shift = (conv_b - running_mean) * scale + beta
    return scale, shift


@functools.partial(jax.jit, static_argnames=("use_bf16",))
def double_conv_forward(x_nchw, params, use_bf16=True):
    """DoubleConv forward.  Input/output: NCHW (PyTorch convention)."""
    N, Cin, H, W = x_nchw.shape
    Cout = params["conv1_w"].shape[-1]
    Cp = _round_up(Cout, 128)                # lane-dense channel tile for the MXU
    pad_c = Cp - Cout
    cdtype = jnp.bfloat16 if use_bf16 else jnp.float32

    # TODO(synk): drop this transpose if the surrounding model can stay NHWC.
    x = jnp.transpose(x_nchw, (0, 2, 3, 1)).astype(cdtype)   # NCHW -> NHWC

    s1, b1 = _fold_bn(params["conv1_b"], params["bn1_gamma"], params["bn1_beta"],
                      params["bn1_mean"], params["bn1_var"])
    s2, b2 = _fold_bn(params["conv2_b"], params["bn2_gamma"], params["bn2_beta"],
                      params["bn2_mean"], params["bn2_var"])

    # Conv1 weights (3,3,Cin,Cout) -> (9*Cin, Cp); conv2 (3,3,Cout,Cout) -> (9*Cp, Cp).
    # Padded channels are zero, so they contribute nothing; the padded output
    # channels are dropped inside the kernel before the HBM writeback.
    w1 = jnp.pad(params["conv1_w"], ((0, 0), (0, 0), (0, 0), (0, pad_c)))
    w1 = w1.reshape(9 * Cin, Cp).astype(cdtype)
    w2 = jnp.pad(params["conv2_w"], ((0, 0), (0, 0), (0, pad_c), (0, pad_c)))
    w2 = w2.reshape(9 * Cp, Cp).astype(cdtype)

    def pad_vec(v):
        return jnp.pad(v, (0, pad_c)).reshape(1, Cp).astype(jnp.float32)

    s1p, b1p, s2p, b2p = pad_vec(s1), pad_vec(b1), pad_vec(s2), pad_vec(b2)

    grid_spec = pltpu.PrefetchScalarGridSpec(
        num_scalar_prefetch=0,
        grid=(N,),
        in_specs=[
            pl.BlockSpec((1, H, W, Cin), lambda n: (n, 0, 0, 0)),
            # Grid-invariant operands: constant block index -> DMA'd once and
            # kept resident in VMEM for all grid steps.
            pl.BlockSpec((9 * Cin, Cp), lambda n: (0, 0)),
            pl.BlockSpec((1, Cp), lambda n: (0, 0)),
            pl.BlockSpec((1, Cp), lambda n: (0, 0)),
            pl.BlockSpec((9 * Cp, Cp), lambda n: (0, 0)),
            pl.BlockSpec((1, Cp), lambda n: (0, 0)),
            pl.BlockSpec((1, Cp), lambda n: (0, 0)),
        ],
        out_specs=pl.BlockSpec((1, Cout, H * W), lambda n: (n, 0, 0)),
        scratch_shapes=[
            pltpu.VMEM((H + 2, W + 2, Cin), cdtype),   # input + zero halo
            pltpu.VMEM((H + 2, W + 2, Cp), cdtype),    # conv1 activation + halo
        ],
    )

    y = pl.pallas_call(
        _double_conv_kernel,
        out_shape=jax.ShapeDtypeStruct((N, Cout, H * W), x_nchw.dtype),
        grid_spec=grid_spec,
        compiler_params=pltpu.CompilerParams(
            dimension_semantics=("parallel",),
            vmem_limit_bytes=32 * 1024 * 1024,
        ),
    )(x, w1, s1p, b1p, w2, s2p, b2p)

    return y.reshape(N, Cout, H, W)                     # NCHW, free reshape


def _reference_double_conv(x_nchw, params, use_bf16=True):
    """Plain-JAX reference (lax conv) with matching dtype handling."""
    cdtype = jnp.bfloat16 if use_bf16 else jnp.float32
    x = jnp.transpose(x_nchw, (0, 2, 3, 1))

    def block(x, w, b, g, beta, mean, var):
        xq = x.astype(cdtype).astype(jnp.float32)
        wq = w.astype(cdtype).astype(jnp.float32)
        y = jax.lax.conv_general_dilated(
            xq, wq, window_strides=(1, 1), padding=((1, 1), (1, 1)),
            dimension_numbers=("NHWC", "HWIO", "NHWC"),
            precision=jax.lax.Precision.HIGHEST)
        y = y + b
        y = (y - mean) / jnp.sqrt(var + 1e-5) * g + beta
        return jnp.maximum(y, 0.0)

    y = block(x, params["conv1_w"], params["conv1_b"], params["bn1_gamma"],
              params["bn1_beta"], params["bn1_mean"], params["bn1_var"])
    y = block(y, params["conv2_w"], params["conv2_b"], params["bn2_gamma"],
              params["bn2_beta"], params["bn2_mean"], params["bn2_var"])
    return jnp.transpose(y, (0, 3, 1, 2))


def make_params(key, in_channels, out_channels):
    ks = jax.random.split(key, 10)
    return {
        "conv1_w": 0.1 * jax.random.normal(ks[0], (3, 3, in_channels, out_channels), jnp.float32),
        "conv1_b": 0.1 * jax.random.normal(ks[1], (out_channels,), jnp.float32),
        "bn1_gamma": 1.0 + 0.1 * jax.random.normal(ks[2], (out_channels,), jnp.float32),
        "bn1_beta": 0.1 * jax.random.normal(ks[3], (out_channels,), jnp.float32),
        "bn1_mean": 0.1 * jax.random.normal(ks[4], (out_channels,), jnp.float32),
        "bn1_var": jnp.abs(1.0 + 0.1 * jax.random.normal(ks[5], (out_channels,), jnp.float32)),
        "conv2_w": 0.1 * jax.random.normal(ks[6], (3, 3, out_channels, out_channels), jnp.float32),
        "conv2_b": 0.1 * jax.random.normal(ks[7], (out_channels,), jnp.float32),
        "bn2_gamma": 1.0 + 0.1 * jax.random.normal(ks[8], (out_channels,), jnp.float32),
        "bn2_beta": 0.1 * jax.random.normal(ks[9], (out_channels,), jnp.float32),
        "bn2_mean": jnp.zeros((out_channels,), jnp.float32),
        "bn2_var": jnp.ones((out_channels,), jnp.float32),
    }


if __name__ == "__main__":
    key = jax.random.PRNGKey(0)
    k_x, k_p = jax.random.split(key)

    N, C_in, C_out, H, W = 2, 4, 8, 16, 16
    x = jax.random.normal(k_x, (N, C_in, H, W), jnp.float32)
    params = make_params(k_p, C_in, C_out)

    # bf16 MXU path (default; what you'd run on v6e / v7x).
    out = jax.block_until_ready(double_conv_forward(x, params))
    ref = jax.block_until_ready(_reference_double_conv(x, params))
    np.testing.assert_allclose(np.asarray(out), np.asarray(ref), rtol=5e-3, atol=5e-3)
    assert out.shape == (N, C_out, H, W)

    # Full-f32 path: tight-tolerance cross-check of the kernel structure.
    out32 = jax.block_until_ready(double_conv_forward(x, params, use_bf16=False))
    ref32 = jax.block_until_ready(_reference_double_conv(x, params, use_bf16=False))
    np.testing.assert_allclose(np.asarray(out32), np.asarray(ref32), rtol=1e-4, atol=1e-4)

    print("KERNEL_OK")
</pallas_src>

<mosaic_0001>
module attributes {stable_mosaic.version = 11 : i64} {
  func.func @_double_conv_kernel(%arg0: i32, %arg1: memref<1x16x16x4xbf16, #tpu.memory_space<vmem>>, %arg2: memref<36x128xbf16, #tpu.memory_space<vmem>>, %arg3: memref<1x128xf32, #tpu.memory_space<vmem>>, %arg4: memref<1x128xf32, #tpu.memory_space<vmem>>, %arg5: memref<1152x128xbf16, #tpu.memory_space<vmem>>, %arg6: memref<1x128xf32, #tpu.memory_space<vmem>>, %arg7: memref<1x128xf32, #tpu.memory_space<vmem>>, %arg8: memref<1x8x256xf32, #tpu.memory_space<vmem>>, %arg9: memref<18x18x4xbf16, #tpu.memory_space<vmem>>, %arg10: memref<18x18x128xbf16, #tpu.memory_space<vmem>>) attributes {dimension_semantics = [#tpu.dimension_semantics<parallel>], iteration_bounds = array<i64: 2>, scalar_prefetch = 0 : i64, scratch_operands = 2 : i64, tpu.core_type = #tpu.core_type<tc>, window_params = [{transform_indices = @transform_0, window_bounds = array<i64: 1, 16, 16, 4>}, {pipeline_mode = #tpu.pipeline_mode<synchronous>, transform_indices = @transform_1, window_bounds = array<i64: 36, 128>}, {pipeline_mode = #tpu.pipeline_mode<synchronous>, transform_indices = @transform_2, window_bounds = array<i64: 1, 128>}, {pipeline_mode = #tpu.pipeline_mode<synchronous>, transform_indices = @transform_3, window_bounds = array<i64: 1, 128>}, {pipeline_mode = #tpu.pipeline_mode<synchronous>, transform_indices = @transform_4, window_bounds = array<i64: 1152, 128>}, {pipeline_mode = #tpu.pipeline_mode<synchronous>, transform_indices = @transform_5, window_bounds = array<i64: 1, 128>}, {pipeline_mode = #tpu.pipeline_mode<synchronous>, transform_indices = @transform_6, window_bounds = array<i64: 1, 128>}, {transform_indices = @transform_7, window_bounds = array<i64: 1, 8, 256>}]} {
    %cst = arith.constant 0.000000e+00 : bf16
    %0 = vector.broadcast %cst : bf16 to vector<18x18x4xbf16>
    %c0 = arith.constant 0 : index
    %c0_0 = arith.constant 0 : index
    %c0_1 = arith.constant 0 : index
    %1 = vector.load %arg9[%c0, %c0_0, %c0_1] : memref<18x18x4xbf16, #tpu.memory_space<vmem>>, vector<18x18x4xbf16>
    tpu.vector_store %arg9[%c0, %c0_0, %c0_1], %0 {strides = array<i32>} : memref<18x18x4xbf16, #tpu.memory_space<vmem>>, vector<18x18x4xbf16>,
    %c0_2 = arith.constant 0 : index
    %c0_3 = arith.constant 0 : index
    %c0_4 = arith.constant 0 : index
    %c0_5 = arith.constant 0 : index
    %2 = vector.load %arg1[%c0_2, %c0_3, %c0_4, %c0_5] : memref<1x16x16x4xbf16, #tpu.memory_space<vmem>>, vector<1x16x16x4xbf16>
    %3 = vector.shape_cast %2 : vector<1x16x16x4xbf16> to vector<16x16x4xbf16>
    %c1 = arith.constant 1 : index
    %c1_6 = arith.constant 1 : index
    %c0_7 = arith.constant 0 : index
    %4 = vector.load %arg9[%c1, %c1_6, %c0_7] : memref<18x18x4xbf16, #tpu.memory_space<vmem>>, vector<16x16x4xbf16>
    tpu.vector_store %arg9[%c1, %c1_6, %c0_7], %3 {strides = array<i32>} : memref<18x18x4xbf16, #tpu.memory_space<vmem>>, vector<16x16x4xbf16>,
    %c0_8 = arith.constant 0 : index
    %c0_9 = arith.constant 0 : index
    %c0_10 = arith.constant 0 : index
    %5 = vector.load %arg9[%c0_8, %c0_9, %c0_10] : memref<18x18x4xbf16, #tpu.memory_space<vmem>>, vector<16x16x4xbf16>
    %c0_11 = arith.constant 0 : index
    %c1_12 = arith.constant 1 : index
    %c0_13 = arith.constant 0 : index
    %6 = vector.load %arg9[%c0_11, %c1_12, %c0_13] : memref<18x18x4xbf16, #tpu.memory_space<vmem>>, vector<16x16x4xbf16>
    %c0_14 = arith.constant 0 : index
    %c2 = arith.constant 2 : index
    %c0_15 = arith.constant 0 : index
    %7 = vector.load %arg9[%c0_14, %c2, %c0_15] : memref<18x18x4xbf16, #tpu.memory_space<vmem>>, vector<16x16x4xbf16>
    %c1_16 = arith.constant 1 : index
    %c0_17 = arith.constant 0 : index
    %c0_18 = arith.constant 0 : index
    %8 = vector.load %arg9[%c1_16, %c0_17, %c0_18] : memref<18x18x4xbf16, #tpu.memory_space<vmem>>, vector<16x16x4xbf16>
    %c1_19 = arith.constant 1 : index
    %c1_20 = arith.constant 1 : index
    %c0_21 = arith.constant 0 : index
    %9 = vector.load %arg9[%c1_19, %c1_20, %c0_21] : memref<18x18x4xbf16, #tpu.memory_space<vmem>>, vector<16x16x4xbf16>
    %c1_22 = arith.constant 1 : index
    %c2_23 = arith.constant 2 : index
    %c0_24 = arith.constant 0 : index
    %10 = vector.load %arg9[%c1_22, %c2_23, %c0_24] : memref<18x18x4xbf16, #tpu.memory_space<vmem>>, vector<16x16x4xbf16>
    %c2_25 = arith.constant 2 : index
    %c0_26 = arith.constant 0 : index
    %c0_27 = arith.constant 0 : index
    %11 = vector.load %arg9[%c2_25, %c0_26, %c0_27] : memref<18x18x4xbf16, #tpu.memory_space<vmem>>, vector<16x16x4xbf16>
    %c2_28 = arith.constant 2 : index
    %c1_29 = arith.constant 1 : index
    %c0_30 = arith.constant 0 : index
    %12 = vector.load %arg9[%c2_28, %c1_29, %c0_30] : memref<18x18x4xbf16, #tpu.memory_space<vmem>>, vector<16x16x4xbf16>
    %c2_31 = arith.constant 2 : index
    %c2_32 = arith.constant 2 : index
    %c0_33 = arith.constant 0 : index
    %13 = vector.load %arg9[%c2_31, %c2_32, %c0_33] : memref<18x18x4xbf16, #tpu.memory_space<vmem>>, vector<16x16x4xbf16>
    %14 = tpu.concatenate %5, %6, %7, %8, %9, %10, %11, %12, %13 in 2 : vector<16x16x4xbf16>, vector<16x16x4xbf16>, vector<16x16x4xbf16>, vector<16x16x4xbf16>, vector<16x16x4xbf16>, vector<16x16x4xbf16>, vector<16x16x4xbf16>, vector<16x16x4xbf16>, vector<16x16x4xbf16> -> vector<16x16x36xbf16>
    %15 = vector.shape_cast %14 : vector<16x16x36xbf16> to vector<256x36xbf16>
    %c0_34 = arith.constant 0 : index
    %c0_35 = arith.constant 0 : index
    %16 = vector.load %arg2[%c0_34, %c0_35] : memref<36x128xbf16, #tpu.memory_space<vmem>>, vector<36x128xbf16>
    %cst_36 = arith.constant dense<0.000000e+00> : vector<256x128xf32>
    %17 = tpu.matmul %15, %16, %cst_36 {dimension_numbers = #tpu.dot_dimension_numbers<[1], [0], [0], [1], [0, 0, 1, 1], [], []>} : vector<256x36xbf16>, vector<36x128xbf16>, vector<256x128xf32> -> vector<256x128xf32>
    %c0_37 = arith.constant 0 : index
    %c0_38 = arith.constant 0 : index
    %18 = vector.load %arg3[%c0_37, %c0_38] : memref<1x128xf32, #tpu.memory_space<vmem>>, vector<1x128xf32>
    %19 = vector.shape_cast %18 : vector<1x128xf32> to vector<128xf32>
    %20 = vector.shape_cast %19 : vector<128xf32> to vector<1x128xf32>
    %21 = vector.broadcast %20 : vector<1x128xf32> to vector<256x128xf32>
    %22 = arith.mulf %17, %21 : vector<256x128xf32>
    %c0_39 = arith.constant 0 : index
    %c0_40 = arith.constant 0 : index
    %23 = vector.load %arg4[%c0_39, %c0_40] : memref<1x128xf32, #tpu.memory_space<vmem>>, vector<1x128xf32>
    %24 = vector.shape_cast %23 : vector<1x128xf32> to vector<128xf32>
    %25 = vector.shape_cast %24 : vector<128xf32> to vector<1x128xf32>
    %26 = vector.broadcast %25 : vector<1x128xf32> to vector<256x128xf32>
    %27 = arith.addf %22, %26 : vector<256x128xf32>
    %cst_41 = arith.constant 0.000000e+00 : f32
    %28 = vector.broadcast %cst_41 : f32 to vector<256x128xf32>
    %29 = arith.maximumf %27, %28 : vector<256x128xf32>
    %cst_42 = arith.constant 0.000000e+00 : bf16
    %30 = vector.broadcast %cst_42 : bf16 to vector<18x18x128xbf16>
    %c0_43 = arith.constant 0 : index
    %c0_44 = arith.constant 0 : index
    %c0_45 = arith.constant 0 : index
    %31 = vector.load %arg10[%c0_43, %c0_44, %c0_45] : memref<18x18x128xbf16, #tpu.memory_space<vmem>>, vector<18x18x128xbf16>
    tpu.vector_store %arg10[%c0_43, %c0_44, %c0_45], %30 {strides = array<i32>} : memref<18x18x128xbf16, #tpu.memory_space<vmem>>, vector<18x18x128xbf16>,
    %32 = vector.shape_cast %29 : vector<256x128xf32> to vector<16x16x128xf32>
    %33 = arith.truncf %32 : vector<16x16x128xf32> to vector<16x16x128xbf16>
    %c1_46 = arith.constant 1 : index
    %c1_47 = arith.constant 1 : index
    %c0_48 = arith.constant 0 : index
    %34 = vector.load %arg10[%c1_46, %c1_47, %c0_48] : memref<18x18x128xbf16, #tpu.memory_space<vmem>>, vector<16x16x128xbf16>
    tpu.vector_store %arg10[%c1_46, %c1_47, %c0_48], %33 {strides = array<i32>} : memref<18x18x128xbf16, #tpu.memory_space<vmem>>, vector<16x16x128xbf16>,
    %c0_49 = arith.constant 0 : index
    %c0_50 = arith.constant 0 : index
    %c0_51 = arith.constant 0 : index
    %35 = vector.load %arg10[%c0_49, %c0_50, %c0_51] : memref<18x18x128xbf16, #tpu.memory_space<vmem>>, vector<16x16x128xbf16>
    %c0_52 = arith.constant 0 : index
    %c1_53 = arith.constant 1 : index
    %c0_54 = arith.constant 0 : index
    %36 = vector.load %arg10[%c0_52, %c1_53, %c0_54] : memref<18x18x128xbf16, #tpu.memory_space<vmem>>, vector<16x16x128xbf16>
    %c0_55 = arith.constant 0 : index
    %c2_56 = arith.constant 2 : index
    %c0_57 = arith.constant 0 : index
    %37 = vector.load %arg10[%c0_55, %c2_56, %c0_57] : memref<18x18x128xbf16, #tpu.memory_space<vmem>>, vector<16x16x128xbf16>
    %c1_58 = arith.constant 1 : index
    %c0_59 = arith.constant 0 : index
    %c0_60 = arith.constant 0 : index
    %38 = vector.load %arg10[%c1_58, %c0_59, %c0_60] : memref<18x18x128xbf16, #tpu.memory_space<vmem>>, vector<16x16x128xbf16>
    %c1_61 = arith.constant 1 : index
    %c1_62 = arith.constant 1 : index
    %c0_63 = arith.constant 0 : index
    %39 = vector.load %arg10[%c1_61, %c1_62, %c0_63] : memref<18x18x128xbf16, #tpu.memory_space<vmem>>, vector<16x16x128xbf16>
    %c1_64 = arith.constant 1 : index
    %c2_65 = arith.constant 2 : index
    %c0_66 = arith.constant 0 : index
    %40 = vector.load %arg10[%c1_64, %c2_65, %c0_66] : memref<18x18x128xbf16, #tpu.memory_space<vmem>>, vector<16x16x128xbf16>
    %c2_67 = arith.constant 2 : index
    %c0_68 = arith.constant 0 : index
    %c0_69 = arith.constant 0 : index
    %41 = vector.load %arg10[%c2_67, %c0_68, %c0_69] : memref<18x18x128xbf16, #tpu.memory_space<vmem>>, vector<16x16x128xbf16>
    %c2_70 = arith.constant 2 : index
    %c1_71 = arith.constant 1 : index
    %c0_72 = arith.constant 0 : index
    %42 = vector.load %arg10[%c2_70, %c1_71, %c0_72] : memref<18x18x128xbf16, #tpu.memory_space<vmem>>, vector<16x16x128xbf16>
    %c2_73 = arith.constant 2 : index
    %c2_74 = arith.constant 2 : index
    %c0_75 = arith.constant 0 : index
    %43 = vector.load %arg10[%c2_73, %c2_74, %c0_75] : memref<18x18x128xbf16, #tpu.memory_space<vmem>>, vector<16x16x128xbf16>
    %44 = tpu.concatenate %35, %36, %37, %38, %39, %40, %41, %42, %43 in 2 : vector<16x16x128xbf16>, vector<16x16x128xbf16>, vector<16x16x128xbf16>, vector<16x16x128xbf16>, vector<16x16x128xbf16>, vector<16x16x128xbf16>, vector<16x16x128xbf16>, vector<16x16x128xbf16>, vector<16x16x128xbf16> -> vector<16x16x1152xbf16>
    %45 = vector.shape_cast %44 : vector<16x16x1152xbf16> to vector<256x1152xbf16>
    %c0_76 = arith.constant 0 : index
    %c0_77 = arith.constant 0 : index
    %46 = vector.load %arg5[%c0_76, %c0_77] : memref<1152x128xbf16, #tpu.memory_space<vmem>>, vector<1152x128xbf16>
    %cst_78 = arith.constant dense<0.000000e+00> : vector<256x128xf32>
    %47 = tpu.matmul %45, %46, %cst_78 {dimension_numbers = #tpu.dot_dimension_numbers<[1], [0], [0], [1], [0, 0, 1, 1], [], []>} : vector<256x1152xbf16>, vector<1152x128xbf16>, vector<256x128xf32> -> vector<256x128xf32>
    %c0_79 = arith.constant 0 : index
    %c0_80 = arith.constant 0 : index
    %48 = vector.load %arg6[%c0_79, %c0_80] : memref<1x128xf32, #tpu.memory_space<vmem>>, vector<1x128xf32>
    %49 = vector.shape_cast %48 : vector<1x128xf32> to vector<128xf32>
    %50 = vector.shape_cast %49 : vector<128xf32> to vector<1x128xf32>
    %51 = vector.broadcast %50 : vector<1x128xf32> to vector<256x128xf32>
    %52 = arith.mulf %47, %51 : vector<256x128xf32>
    %c0_81 = arith.constant 0 : index
    %c0_82 = arith.constant 0 : index
    %53 = vector.load %arg7[%c0_81, %c0_82] : memref<1x128xf32, #tpu.memory_space<vmem>>, vector<1x128xf32>
    %54 = vector.shape_cast %53 : vector<1x128xf32> to vector<128xf32>
    %55 = vector.shape_cast %54 : vector<128xf32> to vector<1x128xf32>
    %56 = vector.broadcast %55 : vector<1x128xf32> to vector<256x128xf32>
    %57 = arith.addf %52, %56 : vector<256x128xf32>
    %cst_83 = arith.constant 0.000000e+00 : f32
    %58 = vector.broadcast %cst_83 : f32 to vector<256x128xf32>
    %59 = arith.maximumf %57, %58 : vector<256x128xf32>
    %60 = tpu.transpose %59, [1, 0] : vector<256x128xf32> -> vector<128x256xf32>
    %61 = vector.extract_strided_slice %60 {offsets = [0, 0], sizes = [8, 256], strides = [1, 1]} : vector<128x256xf32> to vector<8x256xf32>
    %c0_84 = arith.constant 0 : index
    %c0_85 = arith.constant 0 : index
    %c0_86 = arith.constant 0 : index
    %62 = vector.load %arg8[%c0_84, %c0_85, %c0_86] : memref<1x8x256xf32, #tpu.memory_space<vmem>>, vector<1x8x256xf32>
    %63 = vector.shape_cast %62 : vector<1x8x256xf32> to vector<8x256xf32>
    %64 = vector.shape_cast %61 : vector<8x256xf32> to vector<1x8x256xf32>
    tpu.vector_store %arg8[%c0_84, %c0_85, %c0_86], %64 {strides = array<i32>} : memref<1x8x256xf32, #tpu.memory_space<vmem>>, vector<1x8x256xf32>,
    return
  }
  func.func @transform_0(%arg0: i32) -> (i32, i32, i32, i32) {
    %c0_i32 = arith.constant 0 : i32
    %c0_i32_0 = arith.constant 0 : i32
    %c0_i32_1 = arith.constant 0 : i32
    %c0_i32_2 = arith.constant 0 : i32
    return %arg0, %c0_i32, %c0_i32_0, %c0_i32_1 : i32, i32, i32, i32
  }
  func.func @transform_1(%arg0: i32) -> (i32, i32) {
    %c0_i32 = arith.constant 0 : i32
    %c0_i32_0 = arith.constant 0 : i32
    %c0_i32_1 = arith.constant 0 : i32
    return %c0_i32, %c0_i32_0 : i32, i32
  }
  func.func @transform_2(%arg0: i32) -> (i32, i32) {
    %c0_i32 = arith.constant 0 : i32
    %c0_i32_0 = arith.constant 0 : i32
    %c0_i32_1 = arith.constant 0 : i32
    return %c0_i32, %c0_i32_0 : i32, i32
  }
  func.func @transform_3(%arg0: i32) -> (i32, i32) {
    %c0_i32 = arith.constant 0 : i32
    %c0_i32_0 = arith.constant 0 : i32
    %c0_i32_1 = arith.constant 0 : i32
    return %c0_i32, %c0_i32_0 : i32, i32
  }
  func.func @transform_4(%arg0: i32) -> (i32, i32) {
    %c0_i32 = arith.constant 0 : i32
    %c0_i32_0 = arith.constant 0 : i32
    %c0_i32_1 = arith.constant 0 : i32
    return %c0_i32, %c0_i32_0 : i32, i32
  }
  func.func @transform_5(%arg0: i32) -> (i32, i32) {
    %c0_i32 = arith.constant 0 : i32
    %c0_i32_0 = arith.constant 0 : i32
    %c0_i32_1 = arith.constant 0 : i32
    return %c0_i32, %c0_i32_0 : i32, i32
  }
  func.func @transform_6(%arg0: i32) -> (i32, i32) {
    %c0_i32 = arith.constant 0 : i32
    %c0_i32_0 = arith.constant 0 : i32
    %c0_i32_1 = arith.constant 0 : i32
    return %c0_i32, %c0_i32_0 : i32, i32
  }
  func.func @transform_7(%arg0: i32) -> (i32, i32, i32) {
    %c0_i32 = arith.constant 0 : i32
    %c0_i32_0 = arith.constant 0 : i32
    %c0_i32_1 = arith.constant 0 : i32
    return %arg0, %c0_i32, %c0_i32_0 : i32, i32, i32
  }
}

</mosaic_0001>

<llo_original>
// kernel: double_conv_forward.1
$region0: #{double_conv_forward.1}
  #allocation0 [shape = 'u32[]', space=smem, size = 0x4, offset = 0x4, fixed_abs, tag = 'smem constant byte address 0x4 - core index']
  #allocation1 [shape = 'u32[144,128]{1,0:T(1,128)}', space=vmem, size = 0x12000, scoped, tag = 'internal scratch']
  #allocation2 [shape = 'bf16[18,18,4]{2,1,0:T(8,128)(2,1)}', space=vmem, size = 0x1b000, scoped, tag = 'scratch operand']
  #allocation3 [shape = 'bf16[18,18,128]{2,1,0:T(8,128)(2,1)}', space=vmem, size = 0x1b000, scoped, tag = 'scratch operand']
  %s0 = inlined_call_operand.vmem [shape: bf16[2,16,16,4], index: 0, kind: input, shape index: {}]
  %s1 = inlined_call_operand.vmem [shape: bf16[36,128], index: 1, kind: input, shape index: {}]
  %s2 = inlined_call_operand.vmem [shape: f32[1,128], index: 2, kind: input, shape index: {}]
  %s3 = inlined_call_operand.vmem [shape: f32[1,128], index: 3, kind: input, shape index: {}]
  %s4 = inlined_call_operand.vmem [shape: bf16[1152,128], index: 4, kind: input, shape index: {}]
  %s5 = inlined_call_operand.vmem [shape: f32[1,128], index: 5, kind: input, shape index: {}]
  %s6 = inlined_call_operand.vmem [shape: f32[1,128], index: 6, kind: input, shape index: {}]
  %s7 = inlined_call_operand.vmem [shape: f32[2,8,256], index: 7, kind: output, shape index: {}]
  %s8 = sld [smem:[#allocation0]]
  $region61: #{double_conv_forward.1} parent=0
    _
  %s10 = ssub.s32 1, %s8
  %s11 = scalar_select 0, %s10, %s8
  loop: start=0, step=1, limit=4
  $region2: #{double_conv_forward.1} parent=0 // loop_pre_header
    _
  $region3: #{double_conv_forward.1} parent=0 // loop_header
    %s13 = sphi 0, %s17
    %p14 = scmp.ge.s32.totalorder %s13, 4
    %s23 = sphi 0, %s25
    %s26 = sphi 0, %s23
    %s27 = sphi 0, %s26
    %s43 = sphi 0, %s27
    %s47 = sphi 0, %s47
    %s49 = sphi 0, %s47
    %s50 = sphi 0, %s49
    %s64 = sphi 0, %s50
    %s68 = sphi 0, %s68
    %s70 = sphi 0, %s68
    %s71 = sphi 0, %s70
    %s85 = sphi 0, %s71
    %s89 = sphi 0, %s89
    %s91 = sphi 0, %s89
    %s92 = sphi 0, %s91
    %s106 = sphi 0, %s92
    %s110 = sphi 0, %s110
    %s112 = sphi 0, %s110
    %s113 = sphi 0, %s112
    %s127 = sphi 0, %s113
    %s131 = sphi 0, %s131
    %s133 = sphi 0, %s131
    %s134 = sphi 0, %s133
    %s148 = sphi 0, %s134
    %s152 = sphi 0, %s152
    %s154 = sphi 0, %s152
    %s155 = sphi 0, %s154
    %s169 = sphi 0, %s155
    %s175 = sphi 0, %s177
    %s178 = sphi 0, %s175
    %s179 = sphi 0, %s178
    %s195 = sphi 0, %s179
  $region4: #{double_conv_forward.1} parent=0 // loop_header_branch
    %16 = sbr.rel (%p14) target = $region8
  $region5: #{double_conv_forward.1} parent=0 // loop_body
    %s18 = ssub.s32 %s13, 1
    %s19 = ssub.s32 %s13, 2
    %s20 = sadd.s32 %s13, 1
    %s21 = ssub.s32 %s13, %s20
    %p22 = scmp.eq.s32.totalorder %s21, 0
    %s24 = sadd.s32 %s23, 1
    %s25 = scalar_select %p22, %s23, %s24
    %p28 = pneg %p22
    %p29 = scmp.eq.s32.totalorder %s13, 1
    %p30 = por %p28, %p29
    %p31 = scmp.ne.s32.totalorder %s23, %s26
    %p32 = scmp.eq.s32.totalorder %s13, 0
    %p33 = por %p31, %p32
    %p34 = scmp.ne.s32.totalorder %s23, %s26
    %p35 = scmp.eq.s32.totalorder %s18, 1
    %p36 = por %p34, %p35
    %p37 = scmp.ne.s32.totalorder %s26, %s27
    %p38 = scmp.eq.s32.totalorder %s18, 0
    %p39 = por %p37, %p38
    %p40 = scmp.ne.s32.totalorder %s26, %s27
    %p41 = scmp.eq.s32.totalorder %s19, 1
    %p42 = por %p40, %p41
    %p44 = scmp.ne.s32.totalorder %s27, %s43
    %p45 = scmp.eq.s32.totalorder %s19, 0
    %p46 = por %p44, %p45
    %s48 = sadd.s32 %s47, 1
    %p51 = scmp.eq.s32.totalorder %s13, 1
    %p52 = scmp.ne.s32.totalorder %s47, %s49
    %p53 = scmp.eq.s32.totalorder %s13, 0
    %p54 = por %p52, %p53
    %p55 = scmp.ne.s32.totalorder %s47, %s49
    %p56 = scmp.eq.s32.totalorder %s18, 1
    %p57 = por %p55, %p56
    %p58 = scmp.ne.s32.totalorder %s49, %s50
    %p59 = scmp.eq.s32.totalorder %s18, 0
    %p60 = por %p58, %p59
    %p61 = scmp.ne.s32.totalorder %s49, %s50
    %p62 = scmp.eq.s32.totalorder %s19, 1
    %p63 = por %p61, %p62
    %p65 = scmp.ne.s32.totalorder %s50, %s64
    %p66 = scmp.eq.s32.totalorder %s19, 0
    %p67 = por %p65, %p66
    %s69 = sadd.s32 %s68, 1
    %p72 = scmp.eq.s32.totalorder %s13, 1
    %p73 = scmp.ne.s32.totalorder %s68, %s70
    %p74 = scmp.eq.s32.totalorder %s13, 0
    %p75 = por %p73, %p74
    %p76 = scmp.ne.s32.totalorder %s68, %s70
    %p77 = scmp.eq.s32.totalorder %s18, 1
    %p78 = por %p76, %p77
    %p79 = scmp.ne.s32.totalorder %s70, %s71
    %p80 = scmp.eq.s32.totalorder %s18, 0
    %p81 = por %p79, %p80
    %p82 = scmp.ne.s32.totalorder %s70, %s71
    %p83 = scmp.eq.s32.totalorder %s19, 1
    %p84 = por %p82, %p83
    %p86 = scmp.ne.s32.totalorder %s71, %s85
    %p87 = scmp.eq.s32.totalorder %s19, 0
    %p88 = por %p86, %p87
    %s90 = sadd.s32 %s89, 1
    %p93 = scmp.eq.s32.totalorder %s13, 1
    %p94 = scmp.ne.s32.totalorder %s89, %s91
    %p95 = scmp.eq.s32.totalorder %s13, 0
    %p96 = por %p94, %p95
    %p97 = scmp.ne.s32.totalorder %s89, %s91
    %p98 = scmp.eq.s32.totalorder %s18, 1
    %p99 = por %p97, %p98
    %p100 = scmp.ne.s32.totalorder %s91, %s92
    %p101 = scmp.eq.s32.totalorder %s18, 0
    %p102 = por %p100, %p101
    %p103 = scmp.ne.s32.totalorder %s91, %s92
    %p104 = scmp.eq.s32.totalorder %s19, 1
    %p105 = por %p103, %p104
    %p107 = scmp.ne.s32.totalorder %s92, %s106
    %p108 = scmp.eq.s32.totalorder %s19, 0
    %p109 = por %p107, %p108
    %s111 = sadd.s32 %s110, 1
    %p114 = scmp.eq.s32.totalorder %s13, 1
    %p115 = scmp.ne.s32.totalorder %s110, %s112
    %p116 = scmp.eq.s32.totalorder %s13, 0
    %p117 = por %p115, %p116
    %p118 = scmp.ne.s32.totalorder %s110, %s112
    %p119 = scmp.eq.s32.totalorder %s18, 1
    %p120 = por %p118, %p119
    %p121 = scmp.ne.s32.totalorder %s112, %s113
    %p122 = scmp.eq.s32.totalorder %s18, 0
    %p123 = por %p121, %p122
    %p124 = scmp.ne.s32.totalorder %s112, %s113
    %p125 = scmp.eq.s32.totalorder %s19, 1
    %p126 = por %p124, %p125
    %p128 = scmp.ne.s32.totalorder %s113, %s127
    %p129 = scmp.eq.s32.totalorder %s19, 0
    %p130 = por %p128, %p129
    %s132 = sadd.s32 %s131, 1
    %p135 = scmp.eq.s32.totalorder %s13, 1
    %p136 = scmp.ne.s32.totalorder %s131, %s133
    %p137 = scmp.eq.s32.totalorder %s13, 0
    %p138 = por %p136, %p137
    %p139 = scmp.ne.s32.totalorder %s131, %s133
    %p140 = scmp.eq.s32.totalorder %s18, 1
    %p141 = por %p139, %p140
    %p142 = scmp.ne.s32.totalorder %s133, %s134
    %p143 = scmp.eq.s32.totalorder %s18, 0
    %p144 = por %p142, %p143
    %p145 = scmp.ne.s32.totalorder %s133, %s134
    %p146 = scmp.eq.s32.totalorder %s19, 1
    %p147 = por %p145, %p146
    %p149 = scmp.ne.s32.totalorder %s134, %s148
    %p150 = scmp.eq.s32.totalorder %s19, 0
    %p151 = por %p149, %p150
    %s153 = sadd.s32 %s152, 1
    %p156 = scmp.eq.s32.totalorder %s13, 1
    %p157 = scmp.ne.s32.totalorder %s152, %s154
    %p158 = scmp.eq.s32.totalorder %s13, 0
    %p159 = por %p157, %p158
    %p160 = scmp.ne.s32.totalorder %s152, %s154
    %p161 = scmp.eq.s32.totalorder %s18, 1
    %p162 = por %p160, %p161
    %p163 = scmp.ne.s32.totalorder %s154, %s155
    %p164 = scmp.eq.s32.totalorder %s18, 0
    %p165 = por %p163, %p164
    %p166 = scmp.ne.s32.totalorder %s154, %s155
    %p167 = scmp.eq.s32.totalorder %s19, 1
    %p168 = por %p166, %p167
    %p170 = scmp.ne.s32.totalorder %s155, %s169
    %p171 = scmp.eq.s32.totalorder %s19, 0
    %p172 = por %p170, %p171
    %s173 = ssub.s32 %s13, %s20
    %p174 = scmp.eq.s32.totalorder %s173, 0
    %s176 = sadd.s32 %s175, 1
    %s177 = scalar_select %p174, %s175, %s176
    %p180 = pneg %p174
    %p181 = scmp.eq.s32.totalorder %s13, 1
    %p182 = por %p180, %p181
    %p183 = scmp.ne.s32.totalorder %s175, %s178
    %p184 = scmp.eq.s32.totalorder %s13, 0
    %p185 = por %p183, %p184
    %p186 = scmp.ne.s32.totalorder %s175, %s178
    %p187 = scmp.eq.s32.totalorder %s18, 1
    %p188 = por %p186, %p187
    %p189 = scmp.ne.s32.totalorder %s178, %s179
    %p190 = scmp.eq.s32.totalorder %s18, 0
    %p191 = por %p189, %p190
    %p192 = scmp.ne.s32.totalorder %s178, %s179
    %p193 = scmp.eq.s32.totalorder %s19, 1
    %p194 = por %p192, %p193
    %p196 = scmp.ne.s32.totalorder %s179, %s195
    %p197 = scmp.eq.s32.totalorder %s19, 0
    %p198 = por %p196, %p197
    %p199 = scmp.le.s32.totalorder 1, %s13
    %p200 = scmp.lt.s32.totalorder %s13, 3
    %p201 = pnand %p199, %p200
    %p202 = pneg %p201
    // Predicated region
    $region9: #{double_conv_forward.1} parent=5 // pred_check
      _
    $region10: #{double_conv_forward.1} parent=5 // pred_check_branch
      %204 = sbr.rel (%p201) target = $region12
    $region11: #{double_conv_forward.1} parent=5 // pred_region
      %s205 = ssub.s32 %s13, 1
      // Predicated region
      $region13: #{double_conv_forward.1} parent=11 // pred_check
        %p206 = pneg %p60
      $region14: #{double_conv_forward.1} parent=11 // pred_check_branch
        %208 = sbr.rel (%p206) target = $region16
      $region15: #{double_conv_forward.1} parent=11 // pred_region
        _
      $region16: #{double_conv_forward.1} parent=11 // pred_fallthru
        _
      // Predicated region
      $region17: #{double_conv_forward.1} parent=11 // pred_check
        %p209 = pneg %p81
      $region18: #{double_conv_forward.1} parent=11 // pred_check_branch
        %211 = sbr.rel (%p209) target = $region20
      $region19: #{double_conv_forward.1} parent=11 // pred_region
        _
      $region20: #{double_conv_forward.1} parent=11 // pred_fallthru
        _
      // Predicated region
      $region21: #{double_conv_forward.1} parent=11 // pred_check
        %p212 = pneg %p102
      $region22: #{double_conv_forward.1} parent=11 // pred_check_branch
        %214 = sbr.rel (%p212) target = $region24
      $region23: #{double_conv_forward.1} parent=11 // pred_region
        _
      $region24: #{double_conv_forward.1} parent=11 // pred_fallthru
        _
      // Predicated region
      $region25: #{double_conv_forward.1} parent=11 // pred_check
        %p215 = pneg %p123
      $region26: #{double_conv_forward.1} parent=11 // pred_check_branch
        %217 = sbr.rel (%p215) target = $region28
      $region27: #{double_conv_forward.1} parent=11 // pred_region
        _
      $region28: #{double_conv_forward.1} parent=11 // pred_fallthru
        _
      // Predicated region
      $region29: #{double_conv_forward.1} parent=11 // pred_check
        %p218 = pneg %p144
      $region30: #{double_conv_forward.1} parent=11 // pred_check_branch
        %220 = sbr.rel (%p218) target = $region32
      $region31: #{double_conv_forward.1} parent=11 // pred_region
        _
      $region32: #{double_conv_forward.1} parent=11 // pred_fallthru
        _
      // Predicated region
      $region33: #{double_conv_forward.1} parent=11 // pred_check
        %p221 = pneg %p165
      $region34: #{double_conv_forward.1} parent=11 // pred_check_branch
        %223 = sbr.rel (%p221) target = $region36
      $region35: #{double_conv_forward.1} parent=11 // pred_region
        _
      $region36: #{double_conv_forward.1} parent=11 // pred_fallthru
        _
    $region12: #{double_conv_forward.1} parent=5 // pred_fallthru
      _
    %p224 = scmp.lt.s32.totalorder %s13, 2
    // Predicated region
    $region37: #{double_conv_forward.1} parent=5 // pred_check
      %p225 = pneg %p224
    $region38: #{double_conv_forward.1} parent=5 // pred_check_branch
      %227 = sbr.rel (%p225) target = $region40
    $region39: #{double_conv_forward.1} parent=5 // pred_region
      // Predicated region
      $region41: #{double_conv_forward.1} parent=39 // pred_check
        %p228 = pneg %p33
      $region42: #{double_conv_forward.1} parent=39 // pred_check_branch
        %230 = sbr.rel (%p228) target = $region44
      $region43: #{double_conv_forward.1} parent=39 // pred_region
        %p231 = scmp.lt.s32.totalorder %s13, 1
        %s232 = scalar_select %p231, %s13, 1
        %s233 = smul.addr %s232, 32
        %s234 = smul.addr %s233, 4
        %s235 = scalar_lea.vmem %s0, %s234
      $region44: #{double_conv_forward.1} parent=39 // pred_fallthru
        _
    $region40: #{double_conv_forward.1} parent=5 // pred_fallthru
      _
    %p236 = scmp.le.s32.totalorder 1, %s13
    %p237 = scmp.lt.s32.totalorder %s13, 3
    %p238 = pnand %p236, %p237
    %p239 = pneg %p238
    // Predicated region
    $region45: #{double_conv_forward.1} parent=5 // pred_check
      _
    $region46: #{double_conv_forward.1} parent=5 // pred_check_branch
      %241 = sbr.rel (%p238) target = $region48
    $region47: #{double_conv_forward.1} parent=5 // pred_region
      %s242 = ssub.s32 %s13, 1
      %p243 = scmp.lt.s32.totalorder %s18, 1
      %s244 = scalar_select %p243, %s18, 1
      %s245 = smul.addr %s244, 32
      %s246 = smul.addr %s245, 4
      %s247 = scalar_lea.vmem %s0, %s246
      %p248 = pneg %p39
      %p249 = pneg %p36
      %p250 = pneg %p60
      %p251 = pneg %p57
      %p252 = pneg %p81
      %p253 = pneg %p78
      %p254 = pneg %p102
      %p255 = pneg %p99
      %p256 = pneg %p123
      %p257 = pneg %p120
      %p258 = pneg %p144
      %p259 = pneg %p141
      %p260 = pneg %p165
      %p261 = pneg %p162
      %p262 = pneg %p191
      %p263 = pneg %p188
      %p264 = scmp.lt.s32.totalorder %s18, 1
      %s265 = scalar_select %p264, %s18, 1
      %s266 = smul.addr %s265, 2
      %s267 = smul.addr %s266, 8
      %s268 = scalar_lea.vmem %s7, %s267
      %p269 = scmp.lt.s32.totalorder %s18, 1
      %s270 = scalar_select %p269, %s18, 1
      %s271 = smul.addr %s270, 32
      %s272 = smul.addr %s271, 4
      %s273 = scalar_lea.vmem %s0, %s272
      %p274 = scmp.lt.s32.totalorder %s18, 1
      %s275 = scalar_select %p274, %s18, 1
      %s276 = smul.addr %s275, 2
      %s277 = smul.addr %s276, 8
      %s278 = scalar_lea.vmem %s7, %s277
      %vm280 = vcmask 27648
      %281 = vst.msk [vmem:[#allocation2] sm:$0xf] %vm280, 0
      %282 = vst.msk [vmem:[#allocation2 + $0x4] sm:$0xf] %vm280, 0
      %vm283 = vcmask 24576
      %284 = vst.msk [vmem:[#allocation2 + $0x8] sm:$0x1] %vm283, 0
      %285 = vst.msk [vmem:[#allocation2 + $0xc] sm:$0xf] %vm280, 0
      %286 = vst.msk [vmem:[#allocation2 + $0x10] sm:$0xf] %vm280, 0
      %287 = vst.msk [vmem:[#allocation2 + $0x14] sm:$0x1] %vm283, 0
      %288 = vst.msk [vmem:[#allocation2 + $0x18] sm:$0xf] %vm280, 0
      %289 = vst.msk [vmem:[#allocation2 + $0x1c] sm:$0xf] %vm280, 0
      %290 = vst.msk [vmem:[#allocation2 + $0x20] sm:$0x1] %vm283, 0
      %291 = vst.msk [vmem:[#allocation2 + $0x24] sm:$0xf] %vm280, 0
      %292 = vst.msk [vmem:[#allocation2 + $0x28] sm:$0xf] %vm280, 0
      %293 = vst.msk [vmem:[#allocation2 + $0x2c] sm:$0x1] %vm283, 0
      %294 = vst.msk [vmem:[#allocation2 + $0x30] sm:$0xf] %vm280, 0
      %295 = vst.msk [vmem:[#allocation2 + $0x34] sm:$0xf] %vm280, 0
      %296 = vst.msk [vmem:[#allocation2 + $0x38] sm:$0x1] %vm283, 0
      %297 = vst.msk [vmem:[#allocation2 + $0x3c] sm:$0xf] %vm280, 0
      %298 = vst.msk [vmem:[#allocation2 + $0x40] sm:$0xf] %vm280, 0
      %299 = vst.msk [vmem:[#allocation2 + $0x44] sm:$0x1] %vm283, 0
      %300 = vst.msk [vmem:[#allocation2 + $0x48] sm:$0xf] %vm280, 0
      %301 = vst.msk [vmem:[#allocation2 + $0x4c] sm:$0xf] %vm280, 0
      %302 = vst.msk [vmem:[#allocation2 + $0x50] sm:$0x1] %vm283, 0
      %303 = vst.msk [vmem:[#allocation2 + $0x54] sm:$0xf] %vm280, 0
      %304 = vst.msk [vmem:[#allocation2 + $0x58] sm:$0xf] %vm280, 0
      %305 = vst.msk [vmem:[#allocation2 + $0x5c] sm:$0x1] %vm283, 0
      %306 = vst.msk [vmem:[#allocation2 + $0x60] sm:$0xf] %vm280, 0
      %307 = vst.msk [vmem:[#allocation2 + $0x64] sm:$0xf] %vm280, 0
      %308 = vst.msk [vmem:[#allocation2 + $0x68] sm:$0x1] %vm283, 0
      %309 = vst.msk [vmem:[#allocation2 + $0x6c] sm:$0xf] %vm280, 0
      %310 = vst.msk [vmem:[#allocation2 + $0x70] sm:$0xf] %vm280, 0
      %311 = vst.msk [vmem:[#allocation2 + $0x74] sm:$0x1] %vm283, 0
      %312 = vst.msk [vmem:[#allocation2 + $0x78] sm:$0xf] %vm280, 0
      %313 = vst.msk [vmem:[#allocation2 + $0x7c] sm:$0xf] %vm280, 0
      %314 = vst.msk [vmem:[#allocation2 + $0x80] sm:$0x1] %vm283, 0
      %315 = vst.msk [vmem:[#allocation2 + $0x84] sm:$0xf] %vm280, 0
      %316 = vst.msk [vmem:[#allocation2 + $0x88] sm:$0xf] %vm280, 0
      %317 = vst.msk [vmem:[#allocation2 + $0x8c] sm:$0x1] %vm283, 0
      %318 = vst.msk [vmem:[#allocation2 + $0x90] sm:$0xf] %vm280, 0
      %319 = vst.msk [vmem:[#allocation2 + $0x94] sm:$0xf] %vm280, 0
      %320 = vst.msk [vmem:[#allocation2 + $0x98] sm:$0x1] %vm283, 0
      %321 = vst.msk [vmem:[#allocation2 + $0x9c] sm:$0xf] %vm280, 0
      %322 = vst.msk [vmem:[#allocation2 + $0xa0] sm:$0xf] %vm280, 0
      %323 = vst.msk [vmem:[#allocation2 + $0xa4] sm:$0x1] %vm283, 0
      %324 = vst.msk [vmem:[#allocation2 + $0xa8] sm:$0xf] %vm280, 0
      %325 = vst.msk [vmem:[#allocation2 + $0xac] sm:$0xf] %vm280, 0
      %326 = vst.msk [vmem:[#allocation2 + $0xb0] sm:$0x1] %vm283, 0
      %327 = vst.msk [vmem:[#allocation2 + $0xb4] sm:$0xf] %vm280, 0
      %328 = vst.msk [vmem:[#allocation2 + $0xb8] sm:$0xf] %vm280, 0
      %329 = vst.msk [vmem:[#allocation2 + $0xbc] sm:$0x1] %vm283, 0
      %330 = vst.msk [vmem:[#allocation2 + $0xc0] sm:$0xf] %vm280, 0
      %331 = vst.msk [vmem:[#allocation2 + $0xc4] sm:$0xf] %vm280, 0
      %332 = vst.msk [vmem:[#allocation2 + $0xc8] sm:$0x1] %vm283, 0
      %333 = vst.msk [vmem:[#allocation2 + $0xcc] sm:$0xf] %vm280, 0
      %334 = vst.msk [vmem:[#allocation2 + $0xd0] sm:$0xf] %vm280, 0
      %335 = vst.msk [vmem:[#allocation2 + $0xd4] sm:$0x1] %vm283, 0
      %v336 = vld [vmem:[%s273] sm:$0xf]
      %v337 = vld [vmem:[%s273 + $0x4] sm:$0xf]
      %v338 = vld [vmem:[%s273 + $0x8] sm:$0xf]
      %v339 = vld [vmem:[%s273 + $0xc] sm:$0xf]
      %v340 = vld [vmem:[%s273 + $0x10] sm:$0xf]
      %v341 = vld [vmem:[%s273 + $0x14] sm:$0xf]
      %v342 = vld [vmem:[%s273 + $0x18] sm:$0xf]
      %v343 = vld [vmem:[%s273 + $0x1c] sm:$0xf]
      %v344 = vld [vmem:[%s273 + $0x20] sm:$0xf]
      %v345 = vld [vmem:[%s273 + $0x24] sm:$0xf]
      %v346 = vld [vmem:[%s273 + $0x28] sm:$0xf]
      %v347 = vld [vmem:[%s273 + $0x2c] sm:$0xf]
      %v348 = vld [vmem:[%s273 + $0x30] sm:$0xf]
      %v349 = vld [vmem:[%s273 + $0x34] sm:$0xf]
      %v350 = vld [vmem:[%s273 + $0x38] sm:$0xf]
      %v351 = vld [vmem:[%s273 + $0x3c] sm:$0xf]
      %v352 = vld [vmem:[%s273 + $0x40] sm:$0xf]
      %v353 = vld [vmem:[%s273 + $0x44] sm:$0xf]
      %v354 = vld [vmem:[%s273 + $0x48] sm:$0xf]
      %v355 = vld [vmem:[%s273 + $0x4c] sm:$0xf]
      %v356 = vld [vmem:[%s273 + $0x50] sm:$0xf]
      %v357 = vld [vmem:[%s273 + $0x54] sm:$0xf]
      %v358 = vld [vmem:[%s273 + $0x58] sm:$0xf]
      %v359 = vld [vmem:[%s273 + $0x5c] sm:$0xf]
      %v360 = vld [vmem:[%s273 + $0x60] sm:$0xf]
      %v361 = vld [vmem:[%s273 + $0x64] sm:$0xf]
      %v362 = vld [vmem:[%s273 + $0x68] sm:$0xf]
      %v363 = vld [vmem:[%s273 + $0x6c] sm:$0xf]
      %v364 = vld [vmem:[%s273 + $0x70] sm:$0xf]
      %v365 = vld [vmem:[%s273 + $0x74] sm:$0xf]
      %v366 = vld [vmem:[%s273 + $0x78] sm:$0xf]
      %v367 = vld [vmem:[%s273 + $0x7c] sm:$0xf]
      %vm368 = vsmask.f32 256
      %vm369 = vsmask.f32 4368
      %vm370 = vmor %vm368, %vm369
      %v372 = vshrl.u32 %v336, 16
      %v374 = vrot.slane %v372, 7
      %v375 = vshll.u32 %v336, 16
      %v377 = vor.u32 %v374, %v375
      %v378 = vrot.slane %v374, 4
      %v380 = vshrl.u32 %v337, 16
      %v382 = vrot.slane %v380, 7
      %v383 = vshll.u32 %v337, 16
      %v385 = vor.u32 %v382, %v383
      %v386 = vsel %vm370, %v378, %v385
      %v387 = vrot.slane %v382, 4
      %v389 = vshrl.u32 %v338, 16
      %v391 = vrot.slane %v389, 7
      %v392 = vshll.u32 %v338, 16
      %v394 = vor.u32 %v391, %v392
      %v395 = vrot.slane %v391, 4
      %v397 = vshrl.u32 %v339, 16
      %v399 = vrot.slane %v397, 7
      %v400 = vshll.u32 %v339, 16
      %v402 = vor.u32 %v399, %v400
      %v403 = vsel %vm370, %v395, %v402
      %v404 = vrot.slane %v399, 4
      %v406 = vshrl.u32 %v340, 16
      %v408 = vrot.slane %v406, 7
      %v409 = vshll.u32 %v340, 16
      %v411 = vor.u32 %v408, %v409
      %v412 = vrot.slane %v408, 4
      %v414 = vshrl.u32 %v341, 16
      %v416 = vrot.slane %v414, 7
      %v417 = vshll.u32 %v341, 16
      %v419 = vor.u32 %v416, %v417
      %v420 = vsel %vm370, %v412, %v419
      %v421 = vrot.slane %v416, 4
      %v423 = vshrl.u32 %v342, 16
      %v425 = vrot.slane %v423, 7
      %v426 = vshll.u32 %v342, 16
      %v428 = vor.u32 %v425, %v426
      %v429 = vrot.slane %v425, 4
      %v431 = vshrl.u32 %v343, 16
      %v433 = vrot.slane %v431, 7
      %v434 = vshll.u32 %v343, 16
      %v436 = vor.u32 %v433, %v434
      %v437 = vsel %vm370, %v429, %v436
      %v438 = vrot.slane %v433, 4
      %v440 = vshrl.u32 %v344, 16
      %v442 = vrot.slane %v440, 7
      %v443 = vshll.u32 %v344, 16
      %v445 = vor.u32 %v442, %v443
      %v446 = vrot.slane %v442, 4
      %v448 = vshrl.u32 %v345, 16
      %v450 = vrot.slane %v448, 7
      %v451 = vshll.u32 %v345, 16
      %v453 = vor.u32 %v450, %v451
      %v454 = vsel %vm370, %v446, %v453
      %v455 = vrot.slane %v450, 4
      %v457 = vshrl.u32 %v346, 16
      %v459 = vrot.slane %v457, 7
      %v460 = vshll.u32 %v346, 16
      %v462 = vor.u32 %v459, %v460
      %v463 = vrot.slane %v459, 4
      %v465 = vshrl.u32 %v347, 16
      %v467 = vrot.slane %v465, 7
      %v468 = vshll.u32 %v347, 16
      %v470 = vor.u32 %v467, %v468
      %v471 = vsel %vm370, %v463, %v470
      %v472 = vrot.slane %v467, 4
      %v474 = vshrl.u32 %v348, 16
      %v476 = vrot.slane %v474, 7
      %v477 = vshll.u32 %v348, 16
      %v479 = vor.u32 %v476, %v477
      %v480 = vrot.slane %v476, 4
      %v482 = vshrl.u32 %v349, 16
      %v484 = vrot.slane %v482, 7
      %v485 = vshll.u32 %v349, 16
      %v487 = vor.u32 %v484, %v485
      %v488 = vsel %vm370, %v480, %v487
      %v489 = vrot.slane %v484, 4
      %v491 = vshrl.u32 %v350, 16
      %v493 = vrot.slane %v491, 7
      %v494 = vshll.u32 %v350, 16
      %v496 = vor.u32 %v493, %v494
      %v497 = vrot.slane %v493, 4
      %v499 = vshrl.u32 %v351, 16
      %v501 = vrot.slane %v499, 7
      %v502 = vshll.u32 %v351, 16
      %v504 = vor.u32 %v501, %v502
      %v505 = vsel %vm370, %v497, %v504
      %v506 = vrot.slane %v501, 4
      %v508 = vshrl.u32 %v352, 16
      %v510 = vrot.slane %v508, 7
      %v511 = vshll.u32 %v352, 16
      %v513 = vor.u32 %v510, %v511
      %v514 = vrot.slane %v510, 4
      %v516 = vshrl.u32 %v353, 16
      %v518 = vrot.slane %v516, 7
      %v519 = vshll.u32 %v353, 16
      %v521 = vor.u32 %v518, %v519
      %v522 = vsel %vm370, %v514, %v521
      %v523 = vrot.slane %v518, 4
      %v525 = vshrl.u32 %v354, 16
      %v527 = vrot.slane %v525, 7
      %v528 = vshll.u32 %v354, 16
      %v530 = vor.u32 %v527, %v528
      %v531 = vrot.slane %v527, 4
      %v533 = vshrl.u32 %v355, 16
      %v535 = vrot.slane %v533, 7
      %v536 = vshll.u32 %v355, 16
      %v538 = vor.u32 %v535, %v536
      %v539 = vsel %vm370, %v531, %v538
      %v540 = vrot.slane %v535, 4
      %v542 = vshrl.u32 %v356, 16
      %v544 = vrot.slane %v542, 7
      %v545 = vshll.u32 %v356, 16
      %v547 = vor.u32 %v544, %v545
      %v548 = vrot.slane %v544, 4
      %v550 = vshrl.u32 %v357, 16
      %v552 = vrot.slane %v550, 7
      %v553 = vshll.u32 %v357, 16
      %v555 = vor.u32 %v552, %v553
      %v556 = vsel %vm370, %v548, %v555
      %v557 = vrot.slane %v552, 4
      %v559 = vshrl.u32 %v358, 16
      %v561 = vrot.slane %v559, 7
      %v562 = vshll.u32 %v358, 16
      %v564 = vor.u32 %v561, %v562
      %v565 = vrot.slane %v561, 4
      %v567 = vshrl.u32 %v359, 16
      %v569 = vrot.slane %v567, 7
      %v570 = vshll.u32 %v359, 16
      %v572 = vor.u32 %v569, %v570
      %v573 = vsel %vm370, %v565, %v572
      %v574 = vrot.slane %v569, 4
      %v576 = vshrl.u32 %v360, 16
      %v578 = vrot.slane %v576, 7
      %v579 = vshll.u32 %v360, 16
      %v581 = vor.u32 %v578, %v579
      %v582 = vrot.slane %v578, 4
      %v584 = vshrl.u32 %v361, 16
      %v586 = vrot.slane %v584, 7
      %v587 = vshll.u32 %v361, 16
      %v589 = vor.u32 %v586, %v587
      %v590 = vsel %vm370, %v582, %v589
      %v591 = vrot.slane %v586, 4
      %v593 = vshrl.u32 %v362, 16
      %v595 = vrot.slane %v593, 7
      %v596 = vshll.u32 %v362, 16
      %v598 = vor.u32 %v595, %v596
      %v599 = vrot.slane %v595, 4
      %v601 = vshrl.u32 %v363, 16
      %v603 = vrot.slane %v601, 7
      %v604 = vshll.u32 %v363, 16
      %v606 = vor.u32 %v603, %v604
      %v607 = vsel %vm370, %v599, %v606
      %v608 = vrot.slane %v603, 4
      %v610 = vshrl.u32 %v364, 16
      %v612 = vrot.slane %v610, 7
      %v613 = vshll.u32 %v364, 16
      %v615 = vor.u32 %v612, %v613
      %v616 = vrot.slane %v612, 4
      %v618 = vshrl.u32 %v365, 16
      %v620 = vrot.slane %v618, 7
      %v621 = vshll.u32 %v365, 16
      %v623 = vor.u32 %v620, %v621
      %v624 = vsel %vm370, %v616, %v623
      %v625 = vrot.slane %v620, 4
      %v627 = vshrl.u32 %v366, 16
      %v629 = vrot.slane %v627, 7
      %v630 = vshll.u32 %v366, 16
      %v632 = vor.u32 %v629, %v630
      %v633 = vrot.slane %v629, 4
      %v635 = vshrl.u32 %v367, 16
      %v637 = vrot.slane %v635, 7
      %v638 = vshll.u32 %v367, 16
      %v640 = vor.u32 %v637, %v638
      %v641 = vsel %vm370, %v633, %v640
      %v642 = vrot.slane %v637, 4
      %s691 = scalar_lea.vmem [#allocation2], 12
      %vm692 = vcmask 27648
      %vm693 = vsmask.f32 7938
      %vm694 = vmand %vm692, %vm693
      %v695 = vld [vmem:[%s691] sm:$0xf]
      %v696 = vsel %vm694, %v377, %v695
      %697 = vst [vmem:[%s691] sm:$0xf] %v696
      %698 = vst.msk [vmem:[%s691 + $0x4] sm:$0xf] %vm280, %v386
      %vm699 = vcmask 24576
      %vm700 = vmand %vm699, %vm368
      %v701 = vld [vmem:[%s691 + $0x8] sm:$0x1]
      %v702 = vsel %vm700, %v387, %v701
      %703 = vst [vmem:[%s691 + $0x8] sm:$0x1] %v702
      %v704 = vld [vmem:[%s691 + $0xc] sm:$0xf]
      %v705 = vsel %vm694, %v394, %v704
      %706 = vst [vmem:[%s691 + $0xc] sm:$0xf] %v705
      %707 = vst.msk [vmem:[%s691 + $0x10] sm:$0xf] %vm280, %v403
      %v708 = vld [vmem:[%s691 + $0x14] sm:$0x1]
      %v709 = vsel %vm700, %v404, %v708
      %710 = vst [vmem:[%s691 + $0x14] sm:$0x1] %v709
      %v711 = vld [vmem:[%s691 + $0x18] sm:$0xf]
      %v712 = vsel %vm694, %v411, %v711
      %713 = vst [vmem:[%s691 + $0x18] sm:$0xf] %v712
      %714 = vst.msk [vmem:[%s691 + $0x1c] sm:$0xf] %vm280, %v420
      %v715 = vld [vmem:[%s691 + $0x20] sm:$0x1]
      %v716 = vsel %vm700, %v421, %v715
      %717 = vst [vmem:[%s691 + $0x20] sm:$0x1] %v716
      %v718 = vld [vmem:[%s691 + $0x24] sm:$0xf]
      %v719 = vsel %vm694, %v428, %v718
      %720 = vst [vmem:[%s691 + $0x24] sm:$0xf] %v719
      %721 = vst.msk [vmem:[%s691 + $0x28] sm:$0xf] %vm280, %v437
      %v722 = vld [vmem:[%s691 + $0x2c] sm:$0x1]
      %v723 = vsel %vm700, %v438, %v722
      %724 = vst [vmem:[%s691 + $0x2c] sm:$0x1] %v723
      %v725 = vld [vmem:[%s691 + $0x30] sm:$0xf]
      %v726 = vsel %vm694, %v445, %v725
      %727 = vst [vmem:[%s691 + $0x30] sm:$0xf] %v726
      %728 = vst.msk [vmem:[%s691 + $0x34] sm:$0xf] %vm280, %v454
      %v729 = vld [vmem:[%s691 + $0x38] sm:$0x1]
      %v730 = vsel %vm700, %v455, %v729
      %731 = vst [vmem:[%s691 + $0x38] sm:$0x1] %v730
      %v732 = vld [vmem:[%s691 + $0x3c] sm:$0xf]
      %v733 = vsel %vm694, %v462, %v732
      %734 = vst [vmem:[%s691 + $0x3c] sm:$0xf] %v733
      %735 = vst.msk [vmem:[%s691 + $0x40] sm:$0xf] %vm280, %v471
      %v736 = vld [vmem:[%s691 + $0x44] sm:$0x1]
      %v737 = vsel %vm700, %v472, %v736
      %738 = vst [vmem:[%s691 + $0x44] sm:$0x1] %v737
      %v739 = vld [vmem:[%s691 + $0x48] sm:$0xf]
      %v740 = vsel %vm694, %v479, %v739
      %741 = vst [vmem:[%s691 + $0x48] sm:$0xf] %v740
      %742 = vst.msk [vmem:[%s691 + $0x4c] sm:$0xf] %vm280, %v488
      %v743 = vld [vmem:[%s691 + $0x50] sm:$0x1]
      %v744 = vsel %vm700, %v489, %v743
      %745 = vst [vmem:[%s691 + $0x50] sm:$0x1] %v744
      %v746 = vld [vmem:[%s691 + $0x54] sm:$0xf]
      %v747 = vsel %vm694, %v496, %v746
      %748 = vst [vmem:[%s691 + $0x54] sm:$0xf] %v747
      %749 = vst.msk [vmem:[%s691 + $0x58] sm:$0xf] %vm280, %v505
      %v750 = vld [vmem:[%s691 + $0x5c] sm:$0x1]
      %v751 = vsel %vm700, %v506, %v750
      %752 = vst [vmem:[%s691 + $0x5c] sm:$0x1] %v751
      %v753 = vld [vmem:[%s691 + $0x60] sm:$0xf]
      %v754 = vsel %vm694, %v513, %v753
      %755 = vst [vmem:[%s691 + $0x60] sm:$0xf] %v754
      %756 = vst.msk [vmem:[%s691 + $0x64] sm:$0xf] %vm280, %v522
      %v757 = vld [vmem:[%s691 + $0x68] sm:$0x1]
      %v758 = vsel %vm700, %v523, %v757
      %759 = vst [vmem:[%s691 + $0x68] sm:$0x1] %v758
      %v760 = vld [vmem:[%s691 + $0x6c] sm:$0xf]
      %v761 = vsel %vm694, %v530, %v760
      %762 = vst [vmem:[%s691 + $0x6c] sm:$0xf] %v761
      %763 = vst.msk [vmem:[%s691 + $0x70] sm:$0xf] %vm280, %v539
      %v764 = vld [vmem:[%s691 + $0x74] sm:$0x1]
      %v765 = vsel %vm700, %v540, %v764
      %766 = vst [vmem:[%s691 + $0x74] sm:$0x1] %v765
      %v767 = vld [vmem:[%s691 + $0x78] sm:$0xf]
      %v768 = vsel %vm694, %v547, %v767
      %769 = vst [vmem:[%s691 + $0x78] sm:$0xf] %v768
      %770 = vst.msk [vmem:[%s691 + $0x7c] sm:$0xf] %vm280, %v556
      %v771 = vld [vmem:[%s691 + $0x80] sm:$0x1]
      %v772 = vsel %vm700, %v557, %v771
      %773 = vst [vmem:[%s691 + $0x80] sm:$0x1] %v772
      %v774 = vld [vmem:[%s691 + $0x84] sm:$0xf]
      %v775 = vsel %vm694, %v564, %v774
      %776 = vst [vmem:[%s691 + $0x84] sm:$0xf] %v775
      %777 = vst.msk [vmem:[%s691 + $0x88] sm:$0xf] %vm280, %v573
      %v778 = vld [vmem:[%s691 + $0x8c] sm:$0x1]
      %v779 = vsel %vm700, %v574, %v778
      %780 = vst [vmem:[%s691 + $0x8c] sm:$0x1] %v779
      %v781 = vld [vmem:[%s691 + $0x90] sm:$0xf]
      %v782 = vsel %vm694, %v581, %v781
      %783 = vst [vmem:[%s691 + $0x90] sm:$0xf] %v782
      %784 = vst.msk [vmem:[%s691 + $0x94] sm:$0xf] %vm280, %v590
      %v785 = vld [vmem:[%s691 + $0x98] sm:$0x1]
      %v786 = vsel %vm700, %v591, %v785
      %787 = vst [vmem:[%s691 + $0x98] sm:$0x1] %v786
      %v788 = vld [vmem:[%s691 + $0x9c] sm:$0xf]
      %v789 = vsel %vm694, %v598, %v788
      %790 = vst [vmem:[%s691 + $0x9c] sm:$0xf] %v789
      %791 = vst.msk [vmem:[%s691 + $0xa0] sm:$0xf] %vm280, %v607
      %v792 = vld [vmem:[%s691 + $0xa4] sm:$0x1]
      %v793 = vsel %vm700, %v608, %v792
      %794 = vst [vmem:[%s691 + $0xa4] sm:$0x1] %v793
      %v795 = vld [vmem:[%s691 + $0xa8] sm:$0xf]
      %v796 = vsel %vm694, %v615, %v795
      %797 = vst [vmem:[%s691 + $0xa8] sm:$0xf] %v796
      %798 = vst.msk [vmem:[%s691 + $0xac] sm:$0xf] %vm280, %v624
      %v799 = vld [vmem:[%s691 + $0xb0] sm:$0x1]
      %v800 = vsel %vm700, %v625, %v799
      %801 = vst [vmem:[%s691 + $0xb0] sm:$0x1] %v800
      %v802 = vld [vmem:[%s691 + $0xb4] sm:$0xf]
      %v803 = vsel %vm694, %v632, %v802
      %804 = vst [vmem:[%s691 + $0xb4] sm:$0xf] %v803
      %805 = vst.msk [vmem:[%s691 + $0xb8] sm:$0xf] %vm280, %v641
      %v806 = vld [vmem:[%s691 + $0xbc] sm:$0x1]
      %v807 = vsel %vm700, %v642, %v806
      %808 = vst [vmem:[%s691 + $0xbc] sm:$0x1] %v807
      %v809 = vld [vmem:[#allocation2] sm:$0xf]
      %v810 = vld [vmem:[#allocation2 + $0x4] sm:$0xf]
      %v811 = vld [vmem:[#allocation2 + $0xc] sm:$0xf]
      %v812 = vld [vmem:[#allocation2 + $0x10] sm:$0xf]
      %v813 = vld [vmem:[#allocation2 + $0x18] sm:$0xf]
      %v814 = vld [vmem:[#allocation2 + $0x1c] sm:$0xf]
      %v815 = vld [vmem:[#allocation2 + $0x24] sm:$0xf]
      %v816 = vld [vmem:[#allocation2 + $0x28] sm:$0xf]
      %v817 = vld [vmem:[#allocation2 + $0x30] sm:$0xf]
      %v818 = vld [vmem:[#allocation2 + $0x34] sm:$0xf]
      %v819 = vld [vmem:[#allocation2 + $0x3c] sm:$0xf]
      %v820 = vld [vmem:[#allocation2 + $0x40] sm:$0xf]
      %v821 = vld [vmem:[#allocation2 + $0x48] sm:$0xf]
      %v822 = vld [vmem:[#allocation2 + $0x4c] sm:$0xf]
      %v823 = vld [vmem:[#allocation2 + $0x54] sm:$0xf]
      %v824 = vld [vmem:[#allocation2 + $0x58] sm:$0xf]
      %v825 = vld [vmem:[#allocation2 + $0x60] sm:$0xf]
      %v826 = vld [vmem:[#allocation2 + $0x64] sm:$0xf]
      %v827 = vld [vmem:[#allocation2 + $0x6c] sm:$0xf]
      %v828 = vld [vmem:[#allocation2 + $0x70] sm:$0xf]
      %v829 = vld [vmem:[#allocation2 + $0x78] sm:$0xf]
      %v830 = vld [vmem:[#allocation2 + $0x7c] sm:$0xf]
      %v831 = vld [vmem:[#allocation2 + $0x84] sm:$0xf]
      %v832 = vld [vmem:[#allocation2 + $0x88] sm:$0xf]
      %v833 = vld [vmem:[#allocation2 + $0x90] sm:$0xf]
      %v834 = vld [vmem:[#allocation2 + $0x94] sm:$0xf]
      %v835 = vld [vmem:[#allocation2 + $0x9c] sm:$0xf]
      %v836 = vld [vmem:[#allocation2 + $0xa0] sm:$0xf]
      %v837 = vld [vmem:[#allocation2 + $0xa8] sm:$0xf]
      %v838 = vld [vmem:[#allocation2 + $0xac] sm:$0xf]
      %v839 = vld [vmem:[#allocation2 + $0xb4] sm:$0xf]
      %v840 = vld [vmem:[#allocation2 + $0xb8] sm:$0xf]
      %v841 = vld [vmem:[#allocation2 + $0x8] sm:$0x1]
      %v842 = vld [vmem:[#allocation2 + $0x14] sm:$0x1]
      %v843 = vld [vmem:[#allocation2 + $0x20] sm:$0x1]
      %v844 = vld [vmem:[#allocation2 + $0x2c] sm:$0x1]
      %v845 = vld [vmem:[#allocation2 + $0x38] sm:$0x1]
      %v846 = vld [vmem:[#allocation2 + $0x44] sm:$0x1]
      %v847 = vld [vmem:[#allocation2 + $0x50] sm:$0x1]
      %v848 = vld [vmem:[#allocation2 + $0x5c] sm:$0x1]
      %v849 = vld [vmem:[#allocation2 + $0x68] sm:$0x1]
      %v850 = vld [vmem:[#allocation2 + $0x74] sm:$0x1]
      %v851 = vld [vmem:[#allocation2 + $0x80] sm:$0x1]
      %v852 = vld [vmem:[#allocation2 + $0x8c] sm:$0x1]
      %v853 = vld [vmem:[#allocation2 + $0x98] sm:$0x1]
      %v854 = vld [vmem:[#allocation2 + $0xa4] sm:$0x1]
      %v855 = vld [vmem:[#allocation2 + $0xb0] sm:$0x1]
      %v856 = vld [vmem:[#allocation2 + $0xbc] sm:$0x1]
      %v857 = vld [vmem:[#allocation2] sm:$0xe]
      %v858 = vld [vmem:[#allocation2 + $0xc] sm:$0xe]
      %v859 = vld [vmem:[#allocation2 + $0x18] sm:$0xe]
      %v860 = vld [vmem:[#allocation2 + $0x24] sm:$0xe]
      %v861 = vld [vmem:[#allocation2 + $0x30] sm:$0xe]
      %v862 = vld [vmem:[#allocation2 + $0x3c] sm:$0xe]
      %v863 = vld [vmem:[#allocation2 + $0x48] sm:$0xe]
      %v864 = vld [vmem:[#allocation2 + $0x54] sm:$0xe]
      %v865 = vld [vmem:[#allocation2 + $0x60] sm:$0xe]
      %v866 = vld [vmem:[#allocation2 + $0x6c] sm:$0xe]
      %v867 = vld [vmem:[#allocation2 + $0x78] sm:$0xe]
      %v868 = vld [vmem:[#allocation2 + $0x84] sm:$0xe]
      %v869 = vld [vmem:[#allocation2 + $0x90] sm:$0xe]
      %v870 = vld [vmem:[#allocation2 + $0x9c] sm:$0xe]
      %v871 = vld [vmem:[#allocation2 + $0xa8] sm:$0xe]
      %v872 = vld [vmem:[#allocation2 + $0xb4] sm:$0xe]
      %v873 = vld [vmem:[%s691] sm:$0xf]
      %v874 = vld [vmem:[%s691 + $0x4] sm:$0xf]
      %v875 = vld [vmem:[%s691 + $0xc] sm:$0xf]
      %v876 = vld [vmem:[%s691 + $0x10] sm:$0xf]
      %v877 = vld [vmem:[%s691 + $0x18] sm:$0xf]
      %v878 = vld [vmem:[%s691 + $0x1c] sm:$0xf]
      %v879 = vld [vmem:[%s691 + $0x24] sm:$0xf]
      %v880 = vld [vmem:[%s691 + $0x28] sm:$0xf]
      %v881 = vld [vmem:[%s691 + $0x30] sm:$0xf]
      %v882 = vld [vmem:[%s691 + $0x34] sm:$0xf]
      %v883 = vld [vmem:[%s691 + $0x3c] sm:$0xf]
      %v884 = vld [vmem:[%s691 + $0x40] sm:$0xf]
      %v885 = vld [vmem:[%s691 + $0x48] sm:$0xf]
      %v886 = vld [vmem:[%s691 + $0x4c] sm:$0xf]
      %v887 = vld [vmem:[%s691 + $0x54] sm:$0xf]
      %v888 = vld [vmem:[%s691 + $0x58] sm:$0xf]
      %v889 = vld [vmem:[%s691 + $0x60] sm:$0xf]
      %v890 = vld [vmem:[%s691 + $0x64] sm:$0xf]
      %v891 = vld [vmem:[%s691 + $0x6c] sm:$0xf]
      %v892 = vld [vmem:[%s691 + $0x70] sm:$0xf]
      %v893 = vld [vmem:[%s691 + $0x78] sm:$0xf]
      %v894 = vld [vmem:[%s691 + $0x7c] sm:$0xf]
      %v895 = vld [vmem:[%s691 + $0x84] sm:$0xf]
      %v896 = vld [vmem:[%s691 + $0x88] sm:$0xf]
      %v897 = vld [vmem:[%s691 + $0x90] sm:$0xf]
      %v898 = vld [vmem:[%s691 + $0x94] sm:$0xf]
      %v899 = vld [vmem:[%s691 + $0x9c] sm:$0xf]
      %v900 = vld [vmem:[%s691 + $0xa0] sm:$0xf]
      %v901 = vld [vmem:[%s691 + $0xa8] sm:$0xf]
      %v902 = vld [vmem:[%s691 + $0xac] sm:$0xf]
      %v903 = vld [vmem:[%s691 + $0xb4] sm:$0xf]
      %v904 = vld [vmem:[%s691 + $0xb8] sm:$0xf]
      %v905 = vld [vmem:[%s691 + $0x8] sm:$0x1]
      %v906 = vld [vmem:[%s691 + $0x14] sm:$0x1]
      %v907 = vld [vmem:[%s691 + $0x20] sm:$0x1]
      %v908 = vld [vmem:[%s691 + $0x2c] sm:$0x1]
      %v909 = vld [vmem:[%s691 + $0x38] sm:$0x1]
      %v910 = vld [vmem:[%s691 + $0x44] sm:$0x1]
      %v911 = vld [vmem:[%s691 + $0x50] sm:$0x1]
      %v912 = vld [vmem:[%s691 + $0x5c] sm:$0x1]
      %v913 = vld [vmem:[%s691 + $0x68] sm:$0x1]
      %v914 = vld [vmem:[%s691 + $0x74] sm:$0x1]
      %v915 = vld [vmem:[%s691 + $0x80] sm:$0x1]
      %v916 = vld [vmem:[%s691 + $0x8c] sm:$0x1]
      %v917 = vld [vmem:[%s691 + $0x98] sm:$0x1]
      %v918 = vld [vmem:[%s691 + $0xa4] sm:$0x1]
      %v919 = vld [vmem:[%s691 + $0xb0] sm:$0x1]
      %v920 = vld [vmem:[%s691 + $0xbc] sm:$0x1]
      %v921 = vld [vmem:[%s691] sm:$0xe]
      %v922 = vld [vmem:[%s691 + $0xc] sm:$0xe]
      %v923 = vld [vmem:[%s691 + $0x18] sm:$0xe]
      %v924 = vld [vmem:[%s691 + $0x24] sm:$0xe]
      %v925 = vld [vmem:[%s691 + $0x30] sm:$0xe]
      %v926 = vld [vmem:[%s691 + $0x3c] sm:$0xe]
      %v927 = vld [vmem:[%s691 + $0x48] sm:$0xe]
      %v928 = vld [vmem:[%s691 + $0x54] sm:$0xe]
      %v929 = vld [vmem:[%s691 + $0x60] sm:$0xe]
      %v930 = vld [vmem:[%s691 + $0x6c] sm:$0xe]
      %v931 = vld [vmem:[%s691 + $0x78] sm:$0xe]
      %v932 = vld [vmem:[%s691 + $0x84] sm:$0xe]
      %v933 = vld [vmem:[%s691 + $0x90] sm:$0xe]
      %v934 = vld [vmem:[%s691 + $0x9c] sm:$0xe]
      %v935 = vld [vmem:[%s691 + $0xa8] sm:$0xe]
      %v936 = vld [vmem:[%s691 + $0xb4] sm:$0xe]
      %s937 = scalar_lea.vmem [#allocation2], 24
      %v938 = vld [vmem:[%s937] sm:$0xf]
      %v939 = vld [vmem:[%s937 + $0x4] sm:$0xf]
      %v940 = vld [vmem:[%s937 + $0xc] sm:$0xf]
      %v941 = vld [vmem:[%s937 + $0x10] sm:$0xf]
      %v942 = vld [vmem:[%s937 + $0x18] sm:$0xf]
      %v943 = vld [vmem:[%s937 + $0x1c] sm:$0xf]
      %v944 = vld [vmem:[%s937 + $0x24] sm:$0xf]
      %v945 = vld [vmem:[%s937 + $0x28] sm:$0xf]
      %v946 = vld [vmem:[%s937 + $0x30] sm:$0xf]
      %v947 = vld [vmem:[%s937 + $0x34] sm:$0xf]
      %v948 = vld [vmem:[%s937 + $0x3c] sm:$0xf]
      %v949 = vld [vmem:[%s937 + $0x40] sm:$0xf]
      %v950 = vld [vmem:[%s937 + $0x48] sm:$0xf]
      %v951 = vld [vmem:[%s937 + $0x4c] sm:$0xf]
      %v952 = vld [vmem:[%s937 + $0x54] sm:$0xf]
      %v953 = vld [vmem:[%s937 + $0x58] sm:$0xf]
      %v954 = vld [vmem:[%s937 + $0x60] sm:$0xf]
      %v955 = vld [vmem:[%s937 + $0x64] sm:$0xf]
      %v956 = vld [vmem:[%s937 + $0x6c] sm:$0xf]
      %v957 = vld [vmem:[%s937 + $0x70] sm:$0xf]
      %v958 = vld [vmem:[%s937 + $0x78] sm:$0xf]
      %v959 = vld [vmem:[%s937 + $0x7c] sm:$0xf]
      %v960 = vld [vmem:[%s937 + $0x84] sm:$0xf]
      %v961 = vld [vmem:[%s937 + $0x88] sm:$0xf]
      %v962 = vld [vmem:[%s937 + $0x90] sm:$0xf]
      %v963 = vld [vmem:[%s937 + $0x94] sm:$0xf]
      %v964 = vld [vmem:[%s937 + $0x9c] sm:$0xf]
      %v965 = vld [vmem:[%s937 + $0xa0] sm:$0xf]
      %v966 = vld [vmem:[%s937 + $0xa8] sm:$0xf]
      %v967 = vld [vmem:[%s937 + $0xac] sm:$0xf]
      %v968 = vld [vmem:[%s937 + $0xb4] sm:$0xf]
      %v969 = vld [vmem:[%s937 + $0xb8] sm:$0xf]
      %v970 = vld [vmem:[%s937 + $0x8] sm:$0x1]
      %v971 = vld [vmem:[%s937 + $0x14] sm:$0x1]
      %v972 = vld [vmem:[%s937 + $0x20] sm:$0x1]
      %v973 = vld [vmem:[%s937 + $0x2c] sm:$0x1]
      %v974 = vld [vmem:[%s937 + $0x38] sm:$0x1]
      %v975 = vld [vmem:[%s937 + $0x44] sm:$0x1]
      %v976 = vld [vmem:[%s937 + $0x50] sm:$0x1]
      %v977 = vld [vmem:[%s937 + $0x5c] sm:$0x1]
      %v978 = vld [vmem:[%s937 + $0x68] sm:$0x1]
      %v979 = vld [vmem:[%s937 + $0x74] sm:$0x1]
      %v980 = vld [vmem:[%s937 + $0x80] sm:$0x1]
      %v981 = vld [vmem:[%s937 + $0x8c] sm:$0x1]
      %v982 = vld [vmem:[%s937 + $0x98] sm:$0x1]
      %v983 = vld [vmem:[%s937 + $0xa4] sm:$0x1]
      %v984 = vld [vmem:[%s937 + $0xb0] sm:$0x1]
      %v985 = vld [vmem:[%s937 + $0xbc] sm:$0x1]
      %v986 = vld [vmem:[%s937] sm:$0xe]
      %v987 = vld [vmem:[%s937 + $0xc] sm:$0xe]
      %v988 = vld [vmem:[%s937 + $0x18] sm:$0xe]
      %v989 = vld [vmem:[%s937 + $0x24] sm:$0xe]
      %v990 = vld [vmem:[%s937 + $0x30] sm:$0xe]
      %v991 = vld [vmem:[%s937 + $0x3c] sm:$0xe]
      %v992 = vld [vmem:[%s937 + $0x48] sm:$0xe]
      %v993 = vld [vmem:[%s937 + $0x54] sm:$0xe]
      %v994 = vld [vmem:[%s937 + $0x60] sm:$0xe]
      %v995 = vld [vmem:[%s937 + $0x6c] sm:$0xe]
      %v996 = vld [vmem:[%s937 + $0x78] sm:$0xe]
      %v997 = vld [vmem:[%s937 + $0x84] sm:$0xe]
      %v998 = vld [vmem:[%s937 + $0x90] sm:$0xe]
      %v999 = vld [vmem:[%s937 + $0x9c] sm:$0xe]
      %v1000 = vld [vmem:[%s937 + $0xa8] sm:$0xe]
      %v1001 = vld [vmem:[%s937 + $0xb4] sm:$0xe]
      %v1034 = vunpack.c.l.b16 %v809
      %v1035 = vunpack.c.l.b16 %v810
      %v1036 = vunpack.c.l.b16 %v811
      %v1037 = vunpack.c.l.b16 %v812
      %v1038 = vunpack.c.l.b16 %v813
      %v1039 = vunpack.c.l.b16 %v814
      %v1040 = vunpack.c.l.b16 %v815
      %v1041 = vunpack.c.l.b16 %v816
      %v1042 = vunpack.c.l.b16 %v817
      %v1043 = vunpack.c.l.b16 %v818
      %v1044 = vunpack.c.l.b16 %v819
      %v1045 = vunpack.c.l.b16 %v820
      %v1046 = vunpack.c.l.b16 %v821
      %v1047 = vunpack.c.l.b16 %v822
      %v1048 = vunpack.c.l.b16 %v823
      %v1049 = vunpack.c.l.b16 %v824
      %v1050 = vunpack.c.l.b16 %v825
      %v1051 = vunpack.c.l.b16 %v826
      %v1052 = vunpack.c.l.b16 %v827
      %v1053 = vunpack.c.l.b16 %v828
      %v1054 = vunpack.c.l.b16 %v829
      %v1055 = vunpack.c.l.b16 %v830
      %v1056 = vunpack.c.l.b16 %v831
      %v1057 = vunpack.c.l.b16 %v832
      %v1058 = vunpack.c.l.b16 %v833
      %v1059 = vunpack.c.l.b16 %v834
      %v1060 = vunpack.c.l.b16 %v835
      %v1061 = vunpack.c.l.b16 %v836
      %v1062 = vunpack.c.l.b16 %v837
      %v1063 = vunpack.c.l.b16 %v838
      %v1064 = vunpack.c.l.b16 %v839
      %v1065 = vunpack.c.l.b16 %v840
      %v1066 = vpack.c.b16 %v1035, %v1034
      %v1067 = vpack.c.b16 %v1037, %v1036
      %v1068 = vpack.c.b16 %v1039, %v1038
      %v1069 = vpack.c.b16 %v1041, %v1040
      %v1070 = vpack.c.b16 %v1043, %v1042
      %v1071 = vpack.c.b16 %v1045, %v1044
      %v1072 = vpack.c.b16 %v1047, %v1046
      %v1073 = vpack.c.b16 %v1049, %v1048
      %v1074 = vpack.c.b16 %v1051, %v1050
      %v1075 = vpack.c.b16 %v1053, %v1052
      %v1076 = vpack.c.b16 %v1055, %v1054
      %v1077 = vpack.c.b16 %v1057, %v1056
      %v1078 = vpack.c.b16 %v1059, %v1058
      %v1079 = vpack.c.b16 %v1061, %v1060
      %v1080 = vpack.c.b16 %v1063, %v1062
      %v1081 = vpack.c.b16 %v1065, %v1064
      %v1098 = vunpack.c.l.b16 %v841
      %v1099 = vunpack.c.l.b16 %v842
      %v1100 = vunpack.c.l.b16 %v843
      %v1101 = vunpack.c.l.b16 %v844
      %v1102 = vunpack.c.l.b16 %v845
      %v1103 = vunpack.c.l.b16 %v846
      %v1104 = vunpack.c.l.b16 %v847
      %v1105 = vunpack.c.l.b16 %v848
      %v1106 = vunpack.c.l.b16 %v849
      %v1107 = vunpack.c.l.b16 %v850
      %v1108 = vunpack.c.l.b16 %v851
      %v1109 = vunpack.c.l.b16 %v852
      %v1110 = vunpack.c.l.b16 %v853
      %v1111 = vunpack.c.l.b16 %v854
      %v1112 = vunpack.c.l.b16 %v855
      %v1113 = vunpack.c.l.b16 %v856
      %v1114 = vpack.c.b16 %v1098, %v1098
      %v1115 = vpack.c.b16 %v1099, %v1099
      %v1116 = vpack.c.b16 %v1100, %v1100
      %v1117 = vpack.c.b16 %v1101, %v1101
      %v1118 = vpack.c.b16 %v1102, %v1102
      %v1119 = vpack.c.b16 %v1103, %v1103
      %v1120 = vpack.c.b16 %v1104, %v1104
      %v1121 = vpack.c.b16 %v1105, %v1105
      %v1122 = vpack.c.b16 %v1106, %v1106
      %v1123 = vpack.c.b16 %v1107, %v1107
      %v1124 = vpack.c.b16 %v1108, %v1108
      %v1125 = vpack.c.b16 %v1109, %v1109
      %v1126 = vpack.c.b16 %v1110, %v1110
      %v1127 = vpack.c.b16 %v1111, %v1111
      %v1128 = vpack.c.b16 %v1112, %v1112
      %v1129 = vpack.c.b16 %v1113, %v1113
      %vm1130 = vsmask.f32 7424
      %v1132 = vshrl.u32 %v1066, 16
      %v1134 = vshll.u32 %v1066, 16
      %v1136 = vrot.slane %v1134, 1
      %v1137 = vor.u32 %v1132, %v1136
      %v1139 = vshll.u32 %v1114, 16
      %v1141 = vrot.slane %v1139, 1
      %v1142 = vsel %vm1130, %v1137, %v1141
      %v1144 = vshrl.u32 %v1067, 16
      %v1146 = vshll.u32 %v1067, 16
      %v1148 = vrot.slane %v1146, 1
      %v1149 = vor.u32 %v1144, %v1148
      %v1151 = vshll.u32 %v1115, 16
      %v1153 = vrot.slane %v1151, 1
      %v1154 = vsel %vm1130, %v1149, %v1153
      %v1156 = vshrl.u32 %v1068, 16
      %v1158 = vshll.u32 %v1068, 16
      %v1160 = vrot.slane %v1158, 1
      %v1161 = vor.u32 %v1156, %v1160
      %v1163 = vshll.u32 %v1116, 16
      %v1165 = vrot.slane %v1163, 1
      %v1166 = vsel %vm1130, %v1161, %v1165
      %v1168 = vshrl.u32 %v1069, 16
      %v1170 = vshll.u32 %v1069, 16
      %v1172 = vrot.slane %v1170, 1
      %v1173 = vor.u32 %v1168, %v1172
      %v1175 = vshll.u32 %v1117, 16
      %v1177 = vrot.slane %v1175, 1
      %v1178 = vsel %vm1130, %v1173, %v1177
      %v1180 = vshrl.u32 %v1070, 16
      %v1182 = vshll.u32 %v1070, 16
      %v1184 = vrot.slane %v1182, 1
      %v1185 = vor.u32 %v1180, %v1184
      %v1187 = vshll.u32 %v1118, 16
      %v1189 = vrot.slane %v1187, 1
      %v1190 = vsel %vm1130, %v1185, %v1189
      %v1192 = vshrl.u32 %v1071, 16
      %v1194 = vshll.u32 %v1071, 16
      %v1196 = vrot.slane %v1194, 1
      %v1197 = vor.u32 %v1192, %v1196
      %v1199 = vshll.u32 %v1119, 16
      %v1201 = vrot.slane %v1199, 1
      %v1202 = vsel %vm1130, %v1197, %v1201
      %v1204 = vshrl.u32 %v1072, 16
      %v1206 = vshll.u32 %v1072, 16
      %v1208 = vrot.slane %v1206, 1
      %v1209 = vor.u32 %v1204, %v1208
      %v1211 = vshll.u32 %v1120, 16
      %v1213 = vrot.slane %v1211, 1
      %v1214 = vsel %vm1130, %v1209, %v1213
      %v1216 = vshrl.u32 %v1073, 16
      %v1218 = vshll.u32 %v1073, 16
      %v1220 = vrot.slane %v1218, 1
      %v1221 = vor.u32 %v1216, %v1220
      %v1223 = vshll.u32 %v1121, 16
      %v1225 = vrot.slane %v1223, 1
      %v1226 = vsel %vm1130, %v1221, %v1225
      %v1228 = vshrl.u32 %v1074, 16
      %v1230 = vshll.u32 %v1074, 16
      %v1232 = vrot.slane %v1230, 1
      %v1233 = vor.u32 %v1228, %v1232
      %v1235 = vshll.u32 %v1122, 16
      %v1237 = vrot.slane %v1235, 1
      %v1238 = vsel %vm1130, %v1233, %v1237
      %v1240 = vshrl.u32 %v1075, 16
      %v1242 = vshll.u32 %v1075, 16
      %v1244 = vrot.slane %v1242, 1
      %v1245 = vor.u32 %v1240, %v1244
      %v1247 = vshll.u32 %v1123, 16
      %v1249 = vrot.slane %v1247, 1
      %v1250 = vsel %vm1130, %v1245, %v1249
      %v1252 = vshrl.u32 %v1076, 16
      %v1254 = vshll.u32 %v1076, 16
      %v1256 = vrot.slane %v1254, 1
      %v1257 = vor.u32 %v1252, %v1256
      %v1259 = vshll.u32 %v1124, 16
      %v1261 = vrot.slane %v1259, 1
      %v1262 = vsel %vm1130, %v1257, %v1261
      %v1264 = vshrl.u32 %v1077, 16
      %v1266 = vshll.u32 %v1077, 16
      %v1268 = vrot.slane %v1266, 1
      %v1269 = vor.u32 %v1264, %v1268
      %v1271 = vshll.u32 %v1125, 16
      %v1273 = vrot.slane %v1271, 1
      %v1274 = vsel %vm1130, %v1269, %v1273
      %v1276 = vshrl.u32 %v1078, 16
      %v1278 = vshll.u32 %v1078, 16
      %v1280 = vrot.slane %v1278, 1
      %v1281 = vor.u32 %v1276, %v1280
      %v1283 = vshll.u32 %v1126, 16
      %v1285 = vrot.slane %v1283, 1
      %v1286 = vsel %vm1130, %v1281, %v1285
      %v1288 = vshrl.u32 %v1079, 16
      %v1290 = vshll.u32 %v1079, 16
      %v1292 = vrot.slane %v1290, 1
      %v1293 = vor.u32 %v1288, %v1292
      %v1295 = vshll.u32 %v1127, 16
      %v1297 = vrot.slane %v1295, 1
      %v1298 = vsel %vm1130, %v1293, %v1297
      %v1300 = vshrl.u32 %v1080, 16
      %v1302 = vshll.u32 %v1080, 16
      %v1304 = vrot.slane %v1302, 1
      %v1305 = vor.u32 %v1300, %v1304
      %v1307 = vshll.u32 %v1128, 16
      %v1309 = vrot.slane %v1307, 1
      %v1310 = vsel %vm1130, %v1305, %v1309
      %v1312 = vshrl.u32 %v1081, 16
      %v1314 = vshll.u32 %v1081, 16
      %v1316 = vrot.slane %v1314, 1
      %v1317 = vor.u32 %v1312, %v1316
      %v1319 = vshll.u32 %v1129, 16
      %v1321 = vrot.slane %v1319, 1
      %v1322 = vsel %vm1130, %v1317, %v1321
      %1323 = vrot.lane.b32.xlu0 %v1142, 4
      %v1324 = vpop.permute.xlu0 %1323
      %1325 = vrot.lane.b32.xlu0 %v1154, 4
      %v1326 = vpop.permute.xlu0 %1325
      %1327 = vrot.lane.b32.xlu0 %v1166, 4
      %v1328 = vpop.permute.xlu0 %1327
      %1329 = vrot.lane.b32.xlu0 %v1178, 4
      %v1330 = vpop.permute.xlu0 %1329
      %1331 = vrot.lane.b32.xlu0 %v1190, 4
      %v1332 = vpop.permute.xlu0 %1331
      %1333 = vrot.lane.b32.xlu0 %v1202, 4
      %v1334 = vpop.permute.xlu0 %1333
      %1335 = vrot.lane.b32.xlu0 %v1214, 4
      %v1336 = vpop.permute.xlu0 %1335
      %1337 = vrot.lane.b32.xlu0 %v1226, 4
      %v1338 = vpop.permute.xlu0 %1337
      %1339 = vrot.lane.b32.xlu0 %v1238, 4
      %v1340 = vpop.permute.xlu0 %1339
      %1341 = vrot.lane.b32.xlu0 %v1250, 4
      %v1342 = vpop.permute.xlu0 %1341
      %1343 = vrot.lane.b32.xlu0 %v1262, 4
      %v1344 = vpop.permute.xlu0 %1343
      %1345 = vrot.lane.b32.xlu0 %v1274, 4
      %v1346 = vpop.permute.xlu0 %1345
      %1347 = vrot.lane.b32.xlu0 %v1286, 4
      %v1348 = vpop.permute.xlu0 %1347
      %1349 = vrot.lane.b32.xlu0 %v1298, 4
      %v1350 = vpop.permute.xlu0 %1349
      %1351 = vrot.lane.b32.xlu0 %v1310, 4
      %v1352 = vpop.permute.xlu0 %1351
      %1353 = vrot.lane.b32.xlu0 %v1322, 4
      %v1354 = vpop.permute.xlu0 %1353
      %v1371 = vunpack.c.l.b16 %v857
      %v1372 = vunpack.c.l.b16 %v858
      %v1373 = vunpack.c.l.b16 %v859
      %v1374 = vunpack.c.l.b16 %v860
      %v1375 = vunpack.c.l.b16 %v861
      %v1376 = vunpack.c.l.b16 %v862
      %v1377 = vunpack.c.l.b16 %v863
      %v1378 = vunpack.c.l.b16 %v864
      %v1379 = vunpack.c.l.b16 %v865
      %v1380 = vunpack.c.l.b16 %v866
      %v1381 = vunpack.c.l.b16 %v867
      %v1382 = vunpack.c.l.b16 %v868
      %v1383 = vunpack.c.l.b16 %v869
      %v1384 = vunpack.c.l.b16 %v870
      %v1385 = vunpack.c.l.b16 %v871
      %v1386 = vunpack.c.l.b16 %v872
      %v1387 = vpack.c.b16 %v1035, %v1371
      %v1388 = vpack.c.b16 %v1037, %v1372
      %v1389 = vpack.c.b16 %v1039, %v1373
      %v1390 = vpack.c.b16 %v1041, %v1374
      %v1391 = vpack.c.b16 %v1043, %v1375
      %v1392 = vpack.c.b16 %v1045, %v1376
      %v1393 = vpack.c.b16 %v1047, %v1377
      %v1394 = vpack.c.b16 %v1049, %v1378
      %v1395 = vpack.c.b16 %v1051, %v1379
      %v1396 = vpack.c.b16 %v1053, %v1380
      %v1397 = vpack.c.b16 %v1055, %v1381
      %v1398 = vpack.c.b16 %v1057, %v1382
      %v1399 = vpack.c.b16 %v1059, %v1383
      %v1400 = vpack.c.b16 %v1061, %v1384
      %v1401 = vpack.c.b16 %v1063, %v1385
      %v1402 = vpack.c.b16 %v1065, %v1386
      %vm1403 = vcmask 1046528
      %v1404 = vrot.slane %v1387, 1
      %v1405 = vrot.slane %v1114, 1
      %v1406 = vsel %vm1403, %v1404, %v1405
      %v1407 = vrot.slane %v1388, 1
      %v1408 = vrot.slane %v1115, 1
      %v1409 = vsel %vm1403, %v1407, %v1408
      %v1410 = vrot.slane %v1389, 1
      %v1411 = vrot.slane %v1116, 1
      %v1412 = vsel %vm1403, %v1410, %v1411
      %v1413 = vrot.slane %v1390, 1
      %v1414 = vrot.slane %v1117, 1
      %v1415 = vsel %vm1403, %v1413, %v1414
      %v1416 = vrot.slane %v1391, 1
      %v1417 = vrot.slane %v1118, 1
      %v1418 = vsel %vm1403, %v1416, %v1417
      %v1419 = vrot.slane %v1392, 1
      %v1420 = vrot.slane %v1119, 1
      %v1421 = vsel %vm1403, %v1419, %v1420
      %v1422 = vrot.slane %v1393, 1
      %v1423 = vrot.slane %v1120, 1
      %v1424 = vsel %vm1403, %v1422, %v1423
      %v1425 = vrot.slane %v1394, 1
      %v1426 = vrot.slane %v1121, 1
      %v1427 = vsel %vm1403, %v1425, %v1426
      %v1428 = vrot.slane %v1395, 1
      %v1429 = vrot.slane %v1122, 1
      %v1430 = vsel %vm1403, %v1428, %v1429
      %v1431 = vrot.slane %v1396, 1
      %v1432 = vrot.slane %v1123, 1
      %v1433 = vsel %vm1403, %v1431, %v1432
      %v1434 = vrot.slane %v1397, 1
      %v1435 = vrot.slane %v1124, 1
      %v1436 = vsel %vm1403, %v1434, %v1435
      %v1437 = vrot.slane %v1398, 1
      %v1438 = vrot.slane %v1125, 1
      %v1439 = vsel %vm1403, %v1437, %v1438
      %v1440 = vrot.slane %v1399, 1
      %v1441 = vrot.slane %v1126, 1
      %v1442 = vsel %vm1403, %v1440, %v1441
      %v1443 = vrot.slane %v1400, 1
      %v1444 = vrot.slane %v1127, 1
      %v1445 = vsel %vm1403, %v1443, %v1444
      %v1446 = vrot.slane %v1401, 1
      %v1447 = vrot.slane %v1128, 1
      %v1448 = vsel %vm1403, %v1446, %v1447
      %v1449 = vrot.slane %v1402, 1
      %v1450 = vrot.slane %v1129, 1
      %v1451 = vsel %vm1403, %v1449, %v1450
      %1452 = vrot.lane.b32.xlu0 %v1406, 8
      %v1453 = vpop.permute.xlu0 %1452
      %1454 = vrot.lane.b32.xlu0 %v1409, 8
      %v1455 = vpop.permute.xlu0 %1454
      %1456 = vrot.lane.b32.xlu0 %v1412, 8
      %v1457 = vpop.permute.xlu0 %1456
      %1458 = vrot.lane.b32.xlu0 %v1415, 8
      %v1459 = vpop.permute.xlu0 %1458
      %1460 = vrot.lane.b32.xlu0 %v1418, 8
      %v1461 = vpop.permute.xlu0 %1460
      %1462 = vrot.lane.b32.xlu0 %v1421, 8
      %v1463 = vpop.permute.xlu0 %1462
      %1464 = vrot.lane.b32.xlu0 %v1424, 8
      %v1465 = vpop.permute.xlu0 %1464
      %1466 = vrot.lane.b32.xlu0 %v1427, 8
      %v1467 = vpop.permute.xlu0 %1466
      %1468 = vrot.lane.b32.xlu0 %v1430, 8
      %v1469 = vpop.permute.xlu0 %1468
      %1470 = vrot.lane.b32.xlu0 %v1433, 8
      %v1471 = vpop.permute.xlu0 %1470
      %1472 = vrot.lane.b32.xlu0 %v1436, 8
      %v1473 = vpop.permute.xlu0 %1472
      %1474 = vrot.lane.b32.xlu0 %v1439, 8
      %v1475 = vpop.permute.xlu0 %1474
      %1476 = vrot.lane.b32.xlu0 %v1442, 8
      %v1477 = vpop.permute.xlu0 %1476
      %1478 = vrot.lane.b32.xlu0 %v1445, 8
      %v1479 = vpop.permute.xlu0 %1478
      %1480 = vrot.lane.b32.xlu0 %v1448, 8
      %v1481 = vpop.permute.xlu0 %1480
      %1482 = vrot.lane.b32.xlu0 %v1451, 8
      %v1483 = vpop.permute.xlu0 %1482
      %v1516 = vunpack.c.l.b16 %v873
      %v1517 = vunpack.c.l.b16 %v874
      %v1518 = vunpack.c.l.b16 %v875
      %v1519 = vunpack.c.l.b16 %v876
      %v1520 = vunpack.c.l.b16 %v877
      %v1521 = vunpack.c.l.b16 %v878
      %v1522 = vunpack.c.l.b16 %v879
      %v1523 = vunpack.c.l.b16 %v880
      %v1524 = vunpack.c.l.b16 %v881
      %v1525 = vunpack.c.l.b16 %v882
      %v1526 = vunpack.c.l.b16 %v883
      %v1527 = vunpack.c.l.b16 %v884
      %v1528 = vunpack.c.l.b16 %v885
      %v1529 = vunpack.c.l.b16 %v886
      %v1530 = vunpack.c.l.b16 %v887
      %v1531 = vunpack.c.l.b16 %v888
      %v1532 = vunpack.c.l.b16 %v889
      %v1533 = vunpack.c.l.b16 %v890
      %v1534 = vunpack.c.l.b16 %v891
      %v1535 = vunpack.c.l.b16 %v892
      %v1536 = vunpack.c.l.b16 %v893
      %v1537 = vunpack.c.l.b16 %v894
      %v1538 = vunpack.c.l.b16 %v895
      %v1539 = vunpack.c.l.b16 %v896
      %v1540 = vunpack.c.l.b16 %v897
      %v1541 = vunpack.c.l.b16 %v898
      %v1542 = vunpack.c.l.b16 %v899
      %v1543 = vunpack.c.l.b16 %v900
      %v1544 = vunpack.c.l.b16 %v901
      %v1545 = vunpack.c.l.b16 %v902
      %v1546 = vunpack.c.l.b16 %v903
      %v1547 = vunpack.c.l.b16 %v904
      %v1548 = vpack.c.b16 %v1517, %v1516
      %v1549 = vpack.c.b16 %v1519, %v1518
      %v1550 = vpack.c.b16 %v1521, %v1520
      %v1551 = vpack.c.b16 %v1523, %v1522
      %v1552 = vpack.c.b16 %v1525, %v1524
      %v1553 = vpack.c.b16 %v1527, %v1526
      %v1554 = vpack.c.b16 %v1529, %v1528
      %v1555 = vpack.c.b16 %v1531, %v1530
      %v1556 = vpack.c.b16 %v1533, %v1532
      %v1557 = vpack.c.b16 %v1535, %v1534
      %v1558 = vpack.c.b16 %v1537, %v1536
      %v1559 = vpack.c.b16 %v1539, %v1538
      %v1560 = vpack.c.b16 %v1541, %v1540
      %v1561 = vpack.c.b16 %v1543, %v1542
      %v1562 = vpack.c.b16 %v1545, %v1544
      %v1563 = vpack.c.b16 %v1547, %v1546
      %1564 = vrot.lane.b32.xlu0 %v1548, 12
      %v1565 = vpop.permute.xlu0 %1564
      %1566 = vrot.lane.b32.xlu0 %v1549, 12
      %v1567 = vpop.permute.xlu0 %1566
      %1568 = vrot.lane.b32.xlu0 %v1550, 12
      %v1569 = vpop.permute.xlu0 %1568
      %1570 = vrot.lane.b32.xlu0 %v1551, 12
      %v1571 = vpop.permute.xlu0 %1570
      %1572 = vrot.lane.b32.xlu0 %v1552, 12
      %v1573 = vpop.permute.xlu0 %1572
      %1574 = vrot.lane.b32.xlu0 %v1553, 12
      %v1575 = vpop.permute.xlu0 %1574
      %1576 = vrot.lane.b32.xlu0 %v1554, 12
      %v1577 = vpop.permute.xlu0 %1576
      %1578 = vrot.lane.b32.xlu0 %v1555, 12
      %v1579 = vpop.permute.xlu0 %1578
      %1580 = vrot.lane.b32.xlu0 %v1556, 12
      %v1581 = vpop.permute.xlu0 %1580
      %1582 = vrot.lane.b32.xlu0 %v1557, 12
      %v1583 = vpop.permute.xlu0 %1582
      %1584 = vrot.lane.b32.xlu0 %v1558, 12
      %v1585 = vpop.permute.xlu0 %1584
      %1586 = vrot.lane.b32.xlu0 %v1559, 12
      %v1587 = vpop.permute.xlu0 %1586
      %1588 = vrot.lane.b32.xlu0 %v1560, 12
      %v1589 = vpop.permute.xlu0 %1588
      %1590 = vrot.lane.b32.xlu0 %v1561, 12
      %v1591 = vpop.permute.xlu0 %1590
      %1592 = vrot.lane.b32.xlu0 %v1562, 12
      %v1593 = vpop.permute.xlu0 %1592
      %1594 = vrot.lane.b32.xlu0 %v1563, 12
      %v1595 = vpop.permute.xlu0 %1594
      %v1612 = vunpack.c.l.b16 %v905
      %v1613 = vunpack.c.l.b16 %v906
      %v1614 = vunpack.c.l.b16 %v907
      %v1615 = vunpack.c.l.b16 %v908
      %v1616 = vunpack.c.l.b16 %v909
      %v1617 = vunpack.c.l.b16 %v910
      %v1618 = vunpack.c.l.b16 %v911
      %v1619 = vunpack.c.l.b16 %v912
      %v1620 = vunpack.c.l.b16 %v913
      %v1621 = vunpack.c.l.b16 %v914
      %v1622 = vunpack.c.l.b16 %v915
      %v1623 = vunpack.c.l.b16 %v916
      %v1624 = vunpack.c.l.b16 %v917
      %v1625 = vunpack.c.l.b16 %v918
      %v1626 = vunpack.c.l.b16 %v919
      %v1627 = vunpack.c.l.b16 %v920
      %v1628 = vpack.c.b16 %v1612, %v1612
      %v1629 = vpack.c.b16 %v1613, %v1613
      %v1630 = vpack.c.b16 %v1614, %v1614
      %v1631 = vpack.c.b16 %v1615, %v1615
      %v1632 = vpack.c.b16 %v1616, %v1616
      %v1633 = vpack.c.b16 %v1617, %v1617
      %v1634 = vpack.c.b16 %v1618, %v1618
      %v1635 = vpack.c.b16 %v1619, %v1619
      %v1636 = vpack.c.b16 %v1620, %v1620
      %v1637 = vpack.c.b16 %v1621, %v1621
      %v1638 = vpack.c.b16 %v1622, %v1622
      %v1639 = vpack.c.b16 %v1623, %v1623
      %v1640 = vpack.c.b16 %v1624, %v1624
      %v1641 = vpack.c.b16 %v1625, %v1625
      %v1642 = vpack.c.b16 %v1626, %v1626
      %v1643 = vpack.c.b16 %v1627, %v1627
      %v1645 = vshrl.u32 %v1548, 16
      %v1647 = vshll.u32 %v1548, 16
      %v1649 = vrot.slane %v1647, 1
      %v1650 = vor.u32 %v1645, %v1649
      %v1652 = vshll.u32 %v1628, 16
      %v1654 = vrot.slane %v1652, 1
      %v1655 = vsel %vm1130, %v1650, %v1654
      %v1657 = vshrl.u32 %v1549, 16
      %v1659 = vshll.u32 %v1549, 16
      %v1661 = vrot.slane %v1659, 1
      %v1662 = vor.u32 %v1657, %v1661
      %v1664 = vshll.u32 %v1629, 16
      %v1666 = vrot.slane %v1664, 1
      %v1667 = vsel %vm1130, %v1662, %v1666
      %v1669 = vshrl.u32 %v1550, 16
      %v1671 = vshll.u32 %v1550, 16
      %v1673 = vrot.slane %v1671, 1
      %v1674 = vor.u32 %v1669, %v1673
      %v1676 = vshll.u32 %v1630, 16
      %v1678 = vrot.slane %v1676, 1
      %v1679 = vsel %vm1130, %v1674, %v1678
      %v1681 = vshrl.u32 %v1551, 16
      %v1683 = vshll.u32 %v1551, 16
      %v1685 = vrot.slane %v1683, 1
      %v1686 = vor.u32 %v1681, %v1685
      %v1688 = vshll.u32 %v1631, 16
      %v1690 = vrot.slane %v1688, 1
      %v1691 = vsel %vm1130, %v1686, %v1690
      %v1693 = vshrl.u32 %v1552, 16
      %v1695 = vshll.u32 %v1552, 16
      %v1697 = vrot.slane %v1695, 1
      %v1698 = vor.u32 %v1693, %v1697
      %v1700 = vshll.u32 %v1632, 16
      %v1702 = vrot.slane %v1700, 1
      %v1703 = vsel %vm1130, %v1698, %v1702
      %v1705 = vshrl.u32 %v1553, 16
      %v1707 = vshll.u32 %v1553, 16
      %v1709 = vrot.slane %v1707, 1
      %v1710 = vor.u32 %v1705, %v1709
      %v1712 = vshll.u32 %v1633, 16
      %v1714 = vrot.slane %v1712, 1
      %v1715 = vsel %vm1130, %v1710, %v1714
      %v1717 = vshrl.u32 %v1554, 16
      %v1719 = vshll.u32 %v1554, 16
      %v1721 = vrot.slane %v1719, 1
      %v1722 = vor.u32 %v1717, %v1721
      %v1724 = vshll.u32 %v1634, 16
      %v1726 = vrot.slane %v1724, 1
      %v1727 = vsel %vm1130, %v1722, %v1726
      %v1729 = vshrl.u32 %v1555, 16
      %v1731 = vshll.u32 %v1555, 16
      %v1733 = vrot.slane %v1731, 1
      %v1734 = vor.u32 %v1729, %v1733
      %v1736 = vshll.u32 %v1635, 16
      %v1738 = vrot.slane %v1736, 1
      %v1739 = vsel %vm1130, %v1734, %v1738
      %v1741 = vshrl.u32 %v1556, 16
      %v1743 = vshll.u32 %v1556, 16
      %v1745 = vrot.slane %v1743, 1
      %v1746 = vor.u32 %v1741, %v1745
      %v1748 = vshll.u32 %v1636, 16
      %v1750 = vrot.slane %v1748, 1
      %v1751 = vsel %vm1130, %v1746, %v1750
      %v1753 = vshrl.u32 %v1557, 16
      %v1755 = vshll.u32 %v1557, 16
      %v1757 = vrot.slane %v1755, 1
      %v1758 = vor.u32 %v1753, %v1757
      %v1760 = vshll.u32 %v1637, 16
      %v1762 = vrot.slane %v1760, 1
      %v1763 = vsel %vm1130, %v1758, %v1762
      %v1765 = vshrl.u32 %v1558, 16
      %v1767 = vshll.u32 %v1558, 16
      %v1769 = vrot.slane %v1767, 1
      %v1770 = vor.u32 %v1765, %v1769
      %v1772 = vshll.u32 %v1638, 16
      %v1774 = vrot.slane %v1772, 1
      %v1775 = vsel %vm1130, %v1770, %v1774
      %v1777 = vshrl.u32 %v1559, 16
      %v1779 = vshll.u32 %v1559, 16
      %v1781 = vrot.slane %v1779, 1
      %v1782 = vor.u32 %v1777, %v1781
      %v1784 = vshll.u32 %v1639, 16
      %v1786 = vrot.slane %v1784, 1
      %v1787 = vsel %vm1130, %v1782, %v1786
      %v1789 = vshrl.u32 %v1560, 16
      %v1791 = vshll.u32 %v1560, 16
      %v1793 = vrot.slane %v1791, 1
      %v1794 = vor.u32 %v1789, %v1793
      %v1796 = vshll.u32 %v1640, 16
      %v1798 = vrot.slane %v1796, 1
      %v1799 = vsel %vm1130, %v1794, %v1798
      %v1801 = vshrl.u32 %v1561, 16
      %v1803 = vshll.u32 %v1561, 16
      %v1805 = vrot.slane %v1803, 1
      %v1806 = vor.u32 %v1801, %v1805
      %v1808 = vshll.u32 %v1641, 16
      %v1810 = vrot.slane %v1808, 1
      %v1811 = vsel %vm1130, %v1806, %v1810
      %v1813 = vshrl.u32 %v1562, 16
      %v1815 = vshll.u32 %v1562, 16
      %v1817 = vrot.slane %v1815, 1
      %v1818 = vor.u32 %v1813, %v1817
      %v1820 = vshll.u32 %v1642, 16
      %v1822 = vrot.slane %v1820, 1
      %v1823 = vsel %vm1130, %v1818, %v1822
      %v1825 = vshrl.u32 %v1563, 16
      %v1827 = vshll.u32 %v1563, 16
      %v1829 = vrot.slane %v1827, 1
      %v1830 = vor.u32 %v1825, %v1829
      %v1832 = vshll.u32 %v1643, 16
      %v1834 = vrot.slane %v1832, 1
      %v1835 = vsel %vm1130, %v1830, %v1834
      %1836 = vrot.lane.b32.xlu0 %v1655, 16
      %v1837 = vpop.permute.xlu0 %1836
      %1838 = vrot.lane.b32.xlu0 %v1667, 16
      %v1839 = vpop.permute.xlu0 %1838
      %1840 = vrot.lane.b32.xlu0 %v1679, 16
      %v1841 = vpop.permute.xlu0 %1840
      %1842 = vrot.lane.b32.xlu0 %v1691, 16
      %v1843 = vpop.permute.xlu0 %1842
      %1844 = vrot.lane.b32.xlu0 %v1703, 16
      %v1845 = vpop.permute.xlu0 %1844
      %1846 = vrot.lane.b32.xlu0 %v1715, 16
      %v1847 = vpop.permute.xlu0 %1846
      %1848 = vrot.lane.b32.xlu0 %v1727, 16
      %v1849 = vpop.permute.xlu0 %1848
      %1850 = vrot.lane.b32.xlu0 %v1739, 16
      %v1851 = vpop.permute.xlu0 %1850
      %1852 = vrot.lane.b32.xlu0 %v1751, 16
      %v1853 = vpop.permute.xlu0 %1852
      %1854 = vrot.lane.b32.xlu0 %v1763, 16
      %v1855 = vpop.permute.xlu0 %1854
      %1856 = vrot.lane.b32.xlu0 %v1775, 16
      %v1857 = vpop.permute.xlu0 %1856
      %1858 = vrot.lane.b32.xlu0 %v1787, 16
      %v1859 = vpop.permute.xlu0 %1858
      %1860 = vrot.lane.b32.xlu0 %v1799, 16
      %v1861 = vpop.permute.xlu0 %1860
      %1862 = vrot.lane.b32.xlu0 %v1811, 16
      %v1863 = vpop.permute.xlu0 %1862
      %1864 = vrot.lane.b32.xlu0 %v1823, 16
      %v1865 = vpop.permute.xlu0 %1864
      %1866 = vrot.lane.b32.xlu0 %v1835, 16
      %v1867 = vpop.permute.xlu0 %1866
      %v1884 = vunpack.c.l.b16 %v921
      %v1885 = vunpack.c.l.b16 %v922
      %v1886 = vunpack.c.l.b16 %v923
      %v1887 = vunpack.c.l.b16 %v924
      %v1888 = vunpack.c.l.b16 %v925
      %v1889 = vunpack.c.l.b16 %v926
      %v1890 = vunpack.c.l.b16 %v927
      %v1891 = vunpack.c.l.b16 %v928
      %v1892 = vunpack.c.l.b16 %v929
      %v1893 = vunpack.c.l.b16 %v930
      %v1894 = vunpack.c.l.b16 %v931
      %v1895 = vunpack.c.l.b16 %v932
      %v1896 = vunpack.c.l.b16 %v933
      %v1897 = vunpack.c.l.b16 %v934
      %v1898 = vunpack.c.l.b16 %v935
      %v1899 = vunpack.c.l.b16 %v936
      %v1900 = vpack.c.b16 %v1517, %v1884
      %v1901 = vpack.c.b16 %v1519, %v1885
      %v1902 = vpack.c.b16 %v1521, %v1886
      %v1903 = vpack.c.b16 %v1523, %v1887
      %v1904 = vpack.c.b16 %v1525, %v1888
      %v1905 = vpack.c.b16 %v1527, %v1889
      %v1906 = vpack.c.b16 %v1529, %v1890
      %v1907 = vpack.c.b16 %v1531, %v1891
      %v1908 = vpack.c.b16 %v1533, %v1892
      %v1909 = vpack.c.b16 %v1535, %v1893
      %v1910 = vpack.c.b16 %v1537, %v1894
      %v1911 = vpack.c.b16 %v1539, %v1895
      %v1912 = vpack.c.b16 %v1541, %v1896
      %v1913 = vpack.c.b16 %v1543, %v1897
      %v1914 = vpack.c.b16 %v1545, %v1898
      %v1915 = vpack.c.b16 %v1547, %v1899
      %v1916 = vrot.slane %v1900, 1
      %v1917 = vrot.slane %v1628, 1
      %v1918 = vsel %vm1403, %v1916, %v1917
      %v1919 = vrot.slane %v1901, 1
      %v1920 = vrot.slane %v1629, 1
      %v1921 = vsel %vm1403, %v1919, %v1920
      %v1922 = vrot.slane %v1902, 1
      %v1923 = vrot.slane %v1630, 1
      %v1924 = vsel %vm1403, %v1922, %v1923
      %v1925 = vrot.slane %v1903, 1
      %v1926 = vrot.slane %v1631, 1
      %v1927 = vsel %vm1403, %v1925, %v1926
      %v1928 = vrot.slane %v1904, 1
      %v1929 = vrot.slane %v1632, 1
      %v1930 = vsel %vm1403, %v1928, %v1929
      %v1931 = vrot.slane %v1905, 1
      %v1932 = vrot.slane %v1633, 1
      %v1933 = vsel %vm1403, %v1931, %v1932
      %v1934 = vrot.slane %v1906, 1
      %v1935 = vrot.slane %v1634, 1
      %v1936 = vsel %vm1403, %v1934, %v1935
      %v1937 = vrot.slane %v1907, 1
      %v1938 = vrot.slane %v1635, 1
      %v1939 = vsel %vm1403, %v1937, %v1938
      %v1940 = vrot.slane %v1908, 1
      %v1941 = vrot.slane %v1636, 1
      %v1942 = vsel %vm1403, %v1940, %v1941
      %v1943 = vrot.slane %v1909, 1
      %v1944 = vrot.slane %v1637, 1
      %v1945 = vsel %vm1403, %v1943, %v1944
      %v1946 = vrot.slane %v1910, 1
      %v1947 = vrot.slane %v1638, 1
      %v1948 = vsel %vm1403, %v1946, %v1947
      %v1949 = vrot.slane %v1911, 1
      %v1950 = vrot.slane %v1639, 1
      %v1951 = vsel %vm1403, %v1949, %v1950
      %v1952 = vrot.slane %v1912, 1
      %v1953 = vrot.slane %v1640, 1
      %v1954 = vsel %vm1403, %v1952, %v1953
      %v1955 = vrot.slane %v1913, 1
      %v1956 = vrot.slane %v1641, 1
      %v1957 = vsel %vm1403, %v1955, %v1956
      %v1958 = vrot.slane %v1914, 1
      %v1959 = vrot.slane %v1642, 1
      %v1960 = vsel %vm1403, %v1958, %v1959
      %v1961 = vrot.slane %v1915, 1
      %v1962 = vrot.slane %v1643, 1
      %v1963 = vsel %vm1403, %v1961, %v1962
      %1964 = vrot.lane.b32.xlu0 %v1918, 20
      %v1965 = vpop.permute.xlu0 %1964
      %1966 = vrot.lane.b32.xlu0 %v1921, 20
      %v1967 = vpop.permute.xlu0 %1966
      %1968 = vrot.lane.b32.xlu0 %v1924, 20
      %v1969 = vpop.permute.xlu0 %1968
      %1970 = vrot.lane.b32.xlu0 %v1927, 20
      %v1971 = vpop.permute.xlu0 %1970
      %1972 = vrot.lane.b32.xlu0 %v1930, 20
      %v1973 = vpop.permute.xlu0 %1972
      %1974 = vrot.lane.b32.xlu0 %v1933, 20
      %v1975 = vpop.permute.xlu0 %1974
      %1976 = vrot.lane.b32.xlu0 %v1936, 20
      %v1977 = vpop.permute.xlu0 %1976
      %1978 = vrot.lane.b32.xlu0 %v1939, 20
      %v1979 = vpop.permute.xlu0 %1978
      %1980 = vrot.lane.b32.xlu0 %v1942, 20
      %v1981 = vpop.permute.xlu0 %1980
      %1982 = vrot.lane.b32.xlu0 %v1945, 20
      %v1983 = vpop.permute.xlu0 %1982
      %1984 = vrot.lane.b32.xlu0 %v1948, 20
      %v1985 = vpop.permute.xlu0 %1984
      %1986 = vrot.lane.b32.xlu0 %v1951, 20
      %v1987 = vpop.permute.xlu0 %1986
      %1988 = vrot.lane.b32.xlu0 %v1954, 20
      %v1989 = vpop.permute.xlu0 %1988
      %1990 = vrot.lane.b32.xlu0 %v1957, 20
      %v1991 = vpop.permute.xlu0 %1990
      %1992 = vrot.lane.b32.xlu0 %v1960, 20
      %v1993 = vpop.permute.xlu0 %1992
      %1994 = vrot.lane.b32.xlu0 %v1963, 20
      %v1995 = vpop.permute.xlu0 %1994
      %v2028 = vunpack.c.l.b16 %v938
      %v2029 = vunpack.c.l.b16 %v939
      %v2030 = vunpack.c.l.b16 %v940
      %v2031 = vunpack.c.l.b16 %v941
      %v2032 = vunpack.c.l.b16 %v942
      %v2033 = vunpack.c.l.b16 %v943
      %v2034 = vunpack.c.l.b16 %v944
      %v2035 = vunpack.c.l.b16 %v945
      %v2036 = vunpack.c.l.b16 %v946
      %v2037 = vunpack.c.l.b16 %v947
      %v2038 = vunpack.c.l.b16 %v948
      %v2039 = vunpack.c.l.b16 %v949
      %v2040 = vunpack.c.l.b16 %v950
      %v2041 = vunpack.c.l.b16 %v951
      %v2042 = vunpack.c.l.b16 %v952
      %v2043 = vunpack.c.l.b16 %v953
      %v2044 = vunpack.c.l.b16 %v954
      %v2045 = vunpack.c.l.b16 %v955
      %v2046 = vunpack.c.l.b16 %v956
      %v2047 = vunpack.c.l.b16 %v957
      %v2048 = vunpack.c.l.b16 %v958
      %v2049 = vunpack.c.l.b16 %v959
      %v2050 = vunpack.c.l.b16 %v960
      %v2051 = vunpack.c.l.b16 %v961
      %v2052 = vunpack.c.l.b16 %v962
      %v2053 = vunpack.c.l.b16 %v963
      %v2054 = vunpack.c.l.b16 %v964
      %v2055 = vunpack.c.l.b16 %v965
      %v2056 = vunpack.c.l.b16 %v966
      %v2057 = vunpack.c.l.b16 %v967
      %v2058 = vunpack.c.l.b16 %v968
      %v2059 = vunpack.c.l.b16 %v969
      %v2060 = vpack.c.b16 %v2029, %v2028
      %v2061 = vpack.c.b16 %v2031, %v2030
      %v2062 = vpack.c.b16 %v2033, %v2032
      %v2063 = vpack.c.b16 %v2035, %v2034
      %v2064 = vpack.c.b16 %v2037, %v2036
      %v2065 = vpack.c.b16 %v2039, %v2038
      %v2066 = vpack.c.b16 %v2041, %v2040
      %v2067 = vpack.c.b16 %v2043, %v2042
      %v2068 = vpack.c.b16 %v2045, %v2044
      %v2069 = vpack.c.b16 %v2047, %v2046
      %v2070 = vpack.c.b16 %v2049, %v2048
      %v2071 = vpack.c.b16 %v2051, %v2050
      %v2072 = vpack.c.b16 %v2053, %v2052
      %v2073 = vpack.c.b16 %v2055, %v2054
      %v2074 = vpack.c.b16 %v2057, %v2056
      %v2075 = vpack.c.b16 %v2059, %v2058
      %2076 = vrot.lane.b32.xlu0 %v2060, 24
      %v2077 = vpop.permute.xlu0 %2076
      %2078 = vrot.lane.b32.xlu0 %v2061, 24
      %v2079 = vpop.permute.xlu0 %2078
      %2080 = vrot.lane.b32.xlu0 %v2062, 24
      %v2081 = vpop.permute.xlu0 %2080
      %2082 = vrot.lane.b32.xlu0 %v2063, 24
      %v2083 = vpop.permute.xlu0 %2082
      %2084 = vrot.lane.b32.xlu0 %v2064, 24
      %v2085 = vpop.permute.xlu0 %2084
      %2086 = vrot.lane.b32.xlu0 %v2065, 24
      %v2087 = vpop.permute.xlu0 %2086
      %2088 = vrot.lane.b32.xlu0 %v2066, 24
      %v2089 = vpop.permute.xlu0 %2088
      %2090 = vrot.lane.b32.xlu0 %v2067, 24
      %v2091 = vpop.permute.xlu0 %2090
      %2092 = vrot.lane.b32.xlu0 %v2068, 24
      %v2093 = vpop.permute.xlu0 %2092
      %2094 = vrot.lane.b32.xlu0 %v2069, 24
      %v2095 = vpop.permute.xlu0 %2094
      %2096 = vrot.lane.b32.xlu0 %v2070, 24
      %v2097 = vpop.permute.xlu0 %2096
      %2098 = vrot.lane.b32.xlu0 %v2071, 24
      %v2099 = vpop.permute.xlu0 %2098
      %2100 = vrot.lane.b32.xlu0 %v2072, 24
      %v2101 = vpop.permute.xlu0 %2100
      %2102 = vrot.lane.b32.xlu0 %v2073, 24
      %v2103 = vpop.permute.xlu0 %2102
      %2104 = vrot.lane.b32.xlu0 %v2074, 24
      %v2105 = vpop.permute.xlu0 %2104
      %2106 = vrot.lane.b32.xlu0 %v2075, 24
      %v2107 = vpop.permute.xlu0 %2106
      %v2124 = vunpack.c.l.b16 %v970
      %v2125 = vunpack.c.l.b16 %v971
      %v2126 = vunpack.c.l.b16 %v972
      %v2127 = vunpack.c.l.b16 %v973
      %v2128 = vunpack.c.l.b16 %v974
      %v2129 = vunpack.c.l.b16 %v975
      %v2130 = vunpack.c.l.b16 %v976
      %v2131 = vunpack.c.l.b16 %v977
      %v2132 = vunpack.c.l.b16 %v978
      %v2133 = vunpack.c.l.b16 %v979
      %v2134 = vunpack.c.l.b16 %v980
      %v2135 = vunpack.c.l.b16 %v981
      %v2136 = vunpack.c.l.b16 %v982
      %v2137 = vunpack.c.l.b16 %v983
      %v2138 = vunpack.c.l.b16 %v984
      %v2139 = vunpack.c.l.b16 %v985
      %v2140 = vpack.c.b16 %v2124, %v2124
      %v2141 = vpack.c.b16 %v2125, %v2125
      %v2142 = vpack.c.b16 %v2126, %v2126
      %v2143 = vpack.c.b16 %v2127, %v2127
      %v2144 = vpack.c.b16 %v2128, %v2128
      %v2145 = vpack.c.b16 %v2129, %v2129
      %v2146 = vpack.c.b16 %v2130, %v2130
      %v2147 = vpack.c.b16 %v2131, %v2131
      %v2148 = vpack.c.b16 %v2132, %v2132
      %v2149 = vpack.c.b16 %v2133, %v2133
      %v2150 = vpack.c.b16 %v2134, %v2134
      %v2151 = vpack.c.b16 %v2135, %v2135
      %v2152 = vpack.c.b16 %v2136, %v2136
      %v2153 = vpack.c.b16 %v2137, %v2137
      %v2154 = vpack.c.b16 %v2138, %v2138
      %v2155 = vpack.c.b16 %v2139, %v2139
      %v2157 = vshrl.u32 %v2060, 16
      %v2159 = vshll.u32 %v2060, 16
      %v2161 = vrot.slane %v2159, 1
      %v2162 = vor.u32 %v2157, %v2161
      %v2164 = vshll.u32 %v2140, 16
      %v2166 = vrot.slane %v2164, 1
      %v2167 = vsel %vm1130, %v2162, %v2166
      %v2169 = vshrl.u32 %v2061, 16
      %v2171 = vshll.u32 %v2061, 16
      %v2173 = vrot.slane %v2171, 1
      %v2174 = vor.u32 %v2169, %v2173
      %v2176 = vshll.u32 %v2141, 16
      %v2178 = vrot.slane %v2176, 1
      %v2179 = vsel %vm1130, %v2174, %v2178
      %v2181 = vshrl.u32 %v2062, 16
      %v2183 = vshll.u32 %v2062, 16
      %v2185 = vrot.slane %v2183, 1
      %v2186 = vor.u32 %v2181, %v2185
      %v2188 = vshll.u32 %v2142, 16
      %v2190 = vrot.slane %v2188, 1
      %v2191 = vsel %vm1130, %v2186, %v2190
      %v2193 = vshrl.u32 %v2063, 16
      %v2195 = vshll.u32 %v2063, 16
      %v2197 = vrot.slane %v2195, 1
      %v2198 = vor.u32 %v2193, %v2197
      %v2200 = vshll.u32 %v2143, 16
      %v2202 = vrot.slane %v2200, 1
      %v2203 = vsel %vm1130, %v2198, %v2202
      %v2205 = vshrl.u32 %v2064, 16
      %v2207 = vshll.u32 %v2064, 16
      %v2209 = vrot.slane %v2207, 1
      %v2210 = vor.u32 %v2205, %v2209
      %v2212 = vshll.u32 %v2144, 16
      %v2214 = vrot.slane %v2212, 1
      %v2215 = vsel %vm1130, %v2210, %v2214
      %v2217 = vshrl.u32 %v2065, 16
      %v2219 = vshll.u32 %v2065, 16
      %v2221 = vrot.slane %v2219, 1
      %v2222 = vor.u32 %v2217, %v2221
      %v2224 = vshll.u32 %v2145, 16
      %v2226 = vrot.slane %v2224, 1
      %v2227 = vsel %vm1130, %v2222, %v2226
      %v2229 = vshrl.u32 %v2066, 16
      %v2231 = vshll.u32 %v2066, 16
      %v2233 = vrot.slane %v2231, 1
      %v2234 = vor.u32 %v2229, %v2233
      %v2236 = vshll.u32 %v2146, 16
      %v2238 = vrot.slane %v2236, 1
      %v2239 = vsel %vm1130, %v2234, %v2238
      %v2241 = vshrl.u32 %v2067, 16
      %v2243 = vshll.u32 %v2067, 16
      %v2245 = vrot.slane %v2243, 1
      %v2246 = vor.u32 %v2241, %v2245
      %v2248 = vshll.u32 %v2147, 16
      %v2250 = vrot.slane %v2248, 1
      %v2251 = vsel %vm1130, %v2246, %v2250
      %v2253 = vshrl.u32 %v2068, 16
      %v2255 = vshll.u32 %v2068, 16
      %v2257 = vrot.slane %v2255, 1
      %v2258 = vor.u32 %v2253, %v2257
      %v2260 = vshll.u32 %v2148, 16
      %v2262 = vrot.slane %v2260, 1
      %v2263 = vsel %vm1130, %v2258, %v2262
      %v2265 = vshrl.u32 %v2069, 16
      %v2267 = vshll.u32 %v2069, 16
      %v2269 = vrot.slane %v2267, 1
      %v2270 = vor.u32 %v2265, %v2269
      %v2272 = vshll.u32 %v2149, 16
      %v2274 = vrot.slane %v2272, 1
      %v2275 = vsel %vm1130, %v2270, %v2274
      %v2277 = vshrl.u32 %v2070, 16
      %v2279 = vshll.u32 %v2070, 16
      %v2281 = vrot.slane %v2279, 1
      %v2282 = vor.u32 %v2277, %v2281
      %v2284 = vshll.u32 %v2150, 16
      %v2286 = vrot.slane %v2284, 1
      %v2287 = vsel %vm1130, %v2282, %v2286
      %v2289 = vshrl.u32 %v2071, 16
      %v2291 = vshll.u32 %v2071, 16
      %v2293 = vrot.slane %v2291, 1
      %v2294 = vor.u32 %v2289, %v2293
      %v2296 = vshll.u32 %v2151, 16
      %v2298 = vrot.slane %v2296, 1
      %v2299 = vsel %vm1130, %v2294, %v2298
      %v2301 = vshrl.u32 %v2072, 16
      %v2303 = vshll.u32 %v2072, 16
      %v2305 = vrot.slane %v2303, 1
      %v2306 = vor.u32 %v2301, %v2305
      %v2308 = vshll.u32 %v2152, 16
      %v2310 = vrot.slane %v2308, 1
      %v2311 = vsel %vm1130, %v2306, %v2310
      %v2313 = vshrl.u32 %v2073, 16
      %v2315 = vshll.u32 %v2073, 16
      %v2317 = vrot.slane %v2315, 1
      %v2318 = vor.u32 %v2313, %v2317
      %v2320 = vshll.u32 %v2153, 16
      %v2322 = vrot.slane %v2320, 1
      %v2323 = vsel %vm1130, %v2318, %v2322
      %v2325 = vshrl.u32 %v2074, 16
      %v2327 = vshll.u32 %v2074, 16
      %v2329 = vrot.slane %v2327, 1
      %v2330 = vor.u32 %v2325, %v2329
      %v2332 = vshll.u32 %v2154, 16
      %v2334 = vrot.slane %v2332, 1
      %v2335 = vsel %vm1130, %v2330, %v2334
      %v2337 = vshrl.u32 %v2075, 16
      %v2339 = vshll.u32 %v2075, 16
      %v2341 = vrot.slane %v2339, 1
      %v2342 = vor.u32 %v2337, %v2341
      %v2344 = vshll.u32 %v2155, 16
      %v2346 = vrot.slane %v2344, 1
      %v2347 = vsel %vm1130, %v2342, %v2346
      %2348 = vrot.lane.b32.xlu0 %v2167, 28
      %v2349 = vpop.permute.xlu0 %2348
      %2350 = vrot.lane.b32.xlu0 %v2179, 28
      %v2351 = vpop.permute.xlu0 %2350
      %2352 = vrot.lane.b32.xlu0 %v2191, 28
      %v2353 = vpop.permute.xlu0 %2352
      %2354 = vrot.lane.b32.xlu0 %v2203, 28
      %v2355 = vpop.permute.xlu0 %2354
      %2356 = vrot.lane.b32.xlu0 %v2215, 28
      %v2357 = vpop.permute.xlu0 %2356
      %2358 = vrot.lane.b32.xlu0 %v2227, 28
      %v2359 = vpop.permute.xlu0 %2358
      %2360 = vrot.lane.b32.xlu0 %v2239, 28
      %v2361 = vpop.permute.xlu0 %2360
      %2362 = vrot.lane.b32.xlu0 %v2251, 28
      %v2363 = vpop.permute.xlu0 %2362
      %2364 = vrot.lane.b32.xlu0 %v2263, 28
      %v2365 = vpop.permute.xlu0 %2364
      %2366 = vrot.lane.b32.xlu0 %v2275, 28
      %v2367 = vpop.permute.xlu0 %2366
      %2368 = vrot.lane.b32.xlu0 %v2287, 28
      %v2369 = vpop.permute.xlu0 %2368
      %2370 = vrot.lane.b32.xlu0 %v2299, 28
      %v2371 = vpop.permute.xlu0 %2370
      %2372 = vrot.lane.b32.xlu0 %v2311, 28
      %v2373 = vpop.permute.xlu0 %2372
      %2374 = vrot.lane.b32.xlu0 %v2323, 28
      %v2375 = vpop.permute.xlu0 %2374
      %2376 = vrot.lane.b32.xlu0 %v2335, 28
      %v2377 = vpop.permute.xlu0 %2376
      %2378 = vrot.lane.b32.xlu0 %v2347, 28
      %v2379 = vpop.permute.xlu0 %2378
      %v2396 = vunpack.c.l.b16 %v986
      %v2397 = vunpack.c.l.b16 %v987
      %v2398 = vunpack.c.l.b16 %v988
      %v2399 = vunpack.c.l.b16 %v989
      %v2400 = vunpack.c.l.b16 %v990
      %v2401 = vunpack.c.l.b16 %v991
      %v2402 = vunpack.c.l.b16 %v992
      %v2403 = vunpack.c.l.b16 %v993
      %v2404 = vunpack.c.l.b16 %v994
      %v2405 = vunpack.c.l.b16 %v995
      %v2406 = vunpack.c.l.b16 %v996
      %v2407 = vunpack.c.l.b16 %v997
      %v2408 = vunpack.c.l.b16 %v998
      %v2409 = vunpack.c.l.b16 %v999
      %v2410 = vunpack.c.l.b16 %v1000
      %v2411 = vunpack.c.l.b16 %v1001
      %v2412 = vpack.c.b16 %v2029, %v2396
      %v2413 = vpack.c.b16 %v2031, %v2397
      %v2414 = vpack.c.b16 %v2033, %v2398
      %v2415 = vpack.c.b16 %v2035, %v2399
      %v2416 = vpack.c.b16 %v2037, %v2400
      %v2417 = vpack.c.b16 %v2039, %v2401
      %v2418 = vpack.c.b16 %v2041, %v2402
      %v2419 = vpack.c.b16 %v2043, %v2403
      %v2420 = vpack.c.b16 %v2045, %v2404
      %v2421 = vpack.c.b16 %v2047, %v2405
      %v2422 = vpack.c.b16 %v2049, %v2406
      %v2423 = vpack.c.b16 %v2051, %v2407
      %v2424 = vpack.c.b16 %v2053, %v2408
      %v2425 = vpack.c.b16 %v2055, %v2409
      %v2426 = vpack.c.b16 %v2057, %v2410
      %v2427 = vpack.c.b16 %v2059, %v2411
      %v2428 = vrot.slane %v2412, 1
      %v2429 = vrot.slane %v2140, 1
      %v2430 = vsel %vm1403, %v2428, %v2429
      %v2431 = vrot.slane %v2413, 1
      %v2432 = vrot.slane %v2141, 1
      %v2433 = vsel %vm1403, %v2431, %v2432
      %v2434 = vrot.slane %v2414, 1
      %v2435 = vrot.slane %v2142, 1
      %v2436 = vsel %vm1403, %v2434, %v2435
      %v2437 = vrot.slane %v2415, 1
      %v2438 = vrot.slane %v2143, 1
      %v2439 = vsel %vm1403, %v2437, %v2438
      %v2440 = vrot.slane %v2416, 1
      %v2441 = vrot.slane %v2144, 1
      %v2442 = vsel %vm1403, %v2440, %v2441
      %v2443 = vrot.slane %v2417, 1
      %v2444 = vrot.slane %v2145, 1
      %v2445 = vsel %vm1403, %v2443, %v2444
      %v2446 = vrot.slane %v2418, 1
      %v2447 = vrot.slane %v2146, 1
      %v2448 = vsel %vm1403, %v2446, %v2447
      %v2449 = vrot.slane %v2419, 1
      %v2450 = vrot.slane %v2147, 1
      %v2451 = vsel %vm1403, %v2449, %v2450
      %v2452 = vrot.slane %v2420, 1
      %v2453 = vrot.slane %v2148, 1
      %v2454 = vsel %vm1403, %v2452, %v2453
      %v2455 = vrot.slane %v2421, 1
      %v2456 = vrot.slane %v2149, 1
      %v2457 = vsel %vm1403, %v2455, %v2456
      %v2458 = vrot.slane %v2422, 1
      %v2459 = vrot.slane %v2150, 1
      %v2460 = vsel %vm1403, %v2458, %v2459
      %v2461 = vrot.slane %v2423, 1
      %v2462 = vrot.slane %v2151, 1
      %v2463 = vsel %vm1403, %v2461, %v2462
      %v2464 = vrot.slane %v2424, 1
      %v2465 = vrot.slane %v2152, 1
      %v2466 = vsel %vm1403, %v2464, %v2465
      %v2467 = vrot.slane %v2425, 1
      %v2468 = vrot.slane %v2153, 1
      %v2469 = vsel %vm1403, %v2467, %v2468
      %v2470 = vrot.slane %v2426, 1
      %v2471 = vrot.slane %v2154, 1
      %v2472 = vsel %vm1403, %v2470, %v2471
      %v2473 = vrot.slane %v2427, 1
      %v2474 = vrot.slane %v2155, 1
      %v2475 = vsel %vm1403, %v2473, %v2474
      %2476 = vrot.lane.b32.xlu0 %v2430, 32
      %v2477 = vpop.permute.xlu0 %2476
      %2478 = vrot.lane.b32.xlu0 %v2433, 32
      %v2479 = vpop.permute.xlu0 %2478
      %2480 = vrot.lane.b32.xlu0 %v2436, 32
      %v2481 = vpop.permute.xlu0 %2480
      %2482 = vrot.lane.b32.xlu0 %v2439, 32
      %v2483 = vpop.permute.xlu0 %2482
      %2484 = vrot.lane.b32.xlu0 %v2442, 32
      %v2485 = vpop.permute.xlu0 %2484
      %2486 = vrot.lane.b32.xlu0 %v2445, 32
      %v2487 = vpop.permute.xlu0 %2486
      %2488 = vrot.lane.b32.xlu0 %v2448, 32
      %v2489 = vpop.permute.xlu0 %2488
      %2490 = vrot.lane.b32.xlu0 %v2451, 32
      %v2491 = vpop.permute.xlu0 %2490
      %2492 = vrot.lane.b32.xlu0 %v2454, 32
      %v2493 = vpop.permute.xlu0 %2492
      %2494 = vrot.lane.b32.xlu0 %v2457, 32
      %v2495 = vpop.permute.xlu0 %2494
      %2496 = vrot.lane.b32.xlu0 %v2460, 32
      %v2497 = vpop.permute.xlu0 %2496
      %2498 = vrot.lane.b32.xlu0 %v2463, 32
      %v2499 = vpop.permute.xlu0 %2498
      %2500 = vrot.lane.b32.xlu0 %v2466, 32
      %v2501 = vpop.permute.xlu0 %2500
      %2502 = vrot.lane.b32.xlu0 %v2469, 32
      %v2503 = vpop.permute.xlu0 %2502
      %2504 = vrot.lane.b32.xlu0 %v2472, 32
      %v2505 = vpop.permute.xlu0 %2504
      %2506 = vrot.lane.b32.xlu0 %v2475, 32
      %v2507 = vpop.permute.xlu0 %2506
      %vm2508 = vcmask 31744
      %v2510 = vsel %vm2508, %v1066, %v1324
      %v2512 = vsel %vm2508, %v1067, %v1326
      %v2514 = vsel %vm2508, %v1068, %v1328
      %v2516 = vsel %vm2508, %v1069, %v1330
      %v2518 = vsel %vm2508, %v1070, %v1332
      %v2520 = vsel %vm2508, %v1071, %v1334
      %v2522 = vsel %vm2508, %v1072, %v1336
      %v2524 = vsel %vm2508, %v1073, %v1338
      %v2526 = vsel %vm2508, %v1074, %v1340
      %v2528 = vsel %vm2508, %v1075, %v1342
      %v2530 = vsel %vm2508, %v1076, %v1344
      %v2532 = vsel %vm2508, %v1077, %v1346
      %v2534 = vsel %vm2508, %v1078, %v1348
      %v2536 = vsel %vm2508, %v1079, %v1350
      %v2538 = vsel %vm2508, %v1080, %v1352
      %v2540 = vsel %vm2508, %v1081, %v1354
      %vm2541 = vcmask 64512
      %v2543 = vsel %vm2541, %v2510, %v1453
      %v2545 = vsel %vm2541, %v2512, %v1455
      %v2547 = vsel %vm2541, %v2514, %v1457
      %v2549 = vsel %vm2541, %v2516, %v1459
      %v2551 = vsel %vm2541, %v2518, %v1461
      %v2553 = vsel %vm2541, %v2520, %v1463
      %v2555 = vsel %vm2541, %v2522, %v1465
      %v2557 = vsel %vm2541, %v2524, %v1467
      %v2559 = vsel %vm2541, %v2526, %v1469
      %v2561 = vsel %vm2541, %v2528, %v1471
      %v2563 = vsel %vm2541, %v2530, %v1473
      %v2565 = vsel %vm2541, %v2532, %v1475
      %v2567 = vsel %vm2541, %v2534, %v1477
      %v2569 = vsel %vm2541, %v2536, %v1479
      %v2571 = vsel %vm2541, %v2538, %v1481
      %v2573 = vsel %vm2541, %v2540, %v1483
      %vm2574 = vcmask 97280
      %v2576 = vsel %vm2574, %v2543, %v1565
      %v2578 = vsel %vm2574, %v2545, %v1567
      %v2580 = vsel %vm2574, %v2547, %v1569
      %v2582 = vsel %vm2574, %v2549, %v1571
      %v2584 = vsel %vm2574, %v2551, %v1573
      %v2586 = vsel %vm2574, %v2553, %v1575
      %v2588 = vsel %vm2574, %v2555, %v1577
      %v2590 = vsel %vm2574, %v2557, %v1579
      %v2592 = vsel %vm2574, %v2559, %v1581
      %v2594 = vsel %vm2574, %v2561, %v1583
      %v2596 = vsel %vm2574, %v2563, %v1585
      %v2598 = vsel %vm2574, %v2565, %v1587
      %v2600 = vsel %vm2574, %v2567, %v1589
      %v2602 = vsel %vm2574, %v2569, %v1591
      %v2604 = vsel %vm2574, %v2571, %v1593
      %v2606 = vsel %vm2574, %v2573, %v1595
      %vm2607 = vcmask 130048
      %v2609 = vsel %vm2607, %v2576, %v1837
      %v2611 = vsel %vm2607, %v2578, %v1839
      %v2613 = vsel %vm2607, %v2580, %v1841
      %v2615 = vsel %vm2607, %v2582, %v1843
      %v2617 = vsel %vm2607, %v2584, %v1845
      %v2619 = vsel %vm2607, %v2586, %v1847
      %v2621 = vsel %vm2607, %v2588, %v1849
      %v2623 = vsel %vm2607, %v2590, %v1851
      %v2625 = vsel %vm2607, %v2592, %v1853
      %v2627 = vsel %vm2607, %v2594, %v1855
      %v2629 = vsel %vm2607, %v2596, %v1857
      %v2631 = vsel %vm2607, %v2598, %v1859
      %v2633 = vsel %vm2607, %v2600, %v1861
      %v2635 = vsel %vm2607, %v2602, %v1863
      %v2637 = vsel %vm2607, %v2604, %v1865
      %v2639 = vsel %vm2607, %v2606, %v1867
      %vm2640 = vcmask 162816
      %v2642 = vsel %vm2640, %v2609, %v1965
      %v2644 = vsel %vm2640, %v2611, %v1967
      %v2646 = vsel %vm2640, %v2613, %v1969
      %v2648 = vsel %vm2640, %v2615, %v1971
      %v2650 = vsel %vm2640, %v2617, %v1973
      %v2652 = vsel %vm2640, %v2619, %v1975
      %v2654 = vsel %vm2640, %v2621, %v1977
      %v2656 = vsel %vm2640, %v2623, %v1979
      %v2658 = vsel %vm2640, %v2625, %v1981
      %v2660 = vsel %vm2640, %v2627, %v1983
      %v2662 = vsel %vm2640, %v2629, %v1985
      %v2664 = vsel %vm2640, %v2631, %v1987
      %v2666 = vsel %vm2640, %v2633, %v1989
      %v2668 = vsel %vm2640, %v2635, %v1991
      %v2670 = vsel %vm2640, %v2637, %v1993
      %v2672 = vsel %vm2640, %v2639, %v1995
      %vm2673 = vcmask 195584
      %v2675 = vsel %vm2673, %v2642, %v2077
      %v2677 = vsel %vm2673, %v2644, %v2079
      %v2679 = vsel %vm2673, %v2646, %v2081
      %v2681 = vsel %vm2673, %v2648, %v2083
      %v2683 = vsel %vm2673, %v2650, %v2085
      %v2685 = vsel %vm2673, %v2652, %v2087
      %v2687 = vsel %vm2673, %v2654, %v2089
      %v2689 = vsel %vm2673, %v2656, %v2091
      %v2691 = vsel %vm2673, %v2658, %v2093
      %v2693 = vsel %vm2673, %v2660, %v2095
      %v2695 = vsel %vm2673, %v2662, %v2097
      %v2697 = vsel %vm2673, %v2664, %v2099
      %v2699 = vsel %vm2673, %v2666, %v2101
      %v2701 = vsel %vm2673, %v2668, %v2103
      %v2703 = vsel %vm2673, %v2670, %v2105
      %v2705 = vsel %vm2673, %v2672, %v2107
      %vm2706 = vcmask 228352
      %v2708 = vsel %vm2706, %v2675, %v2349
      %v2710 = vsel %vm2706, %v2677, %v2351
      %v2712 = vsel %vm2706, %v2679, %v2353
      %v2714 = vsel %vm2706, %v2681, %v2355
      %v2716 = vsel %vm2706, %v2683, %v2357
      %v2718 = vsel %vm2706, %v2685, %v2359
      %v2720 = vsel %vm2706, %v2687, %v2361
      %v2722 = vsel %vm2706, %v2689, %v2363
      %v2724 = vsel %vm2706, %v2691, %v2365
      %v2726 = vsel %vm2706, %v2693, %v2367
      %v2728 = vsel %vm2706, %v2695, %v2369
      %v2730 = vsel %vm2706, %v2697, %v2371
      %v2732 = vsel %vm2706, %v2699, %v2373
      %v2734 = vsel %vm2706, %v2701, %v2375
      %v2736 = vsel %vm2706, %v2703, %v2377
      %v2738 = vsel %vm2706, %v2705, %v2379
      %vm2739 = vcmask 261120
      %v2741 = vsel %vm2739, %v2708, %v2477
      %v2743 = vsel %vm2739, %v2710, %v2479
      %v2745 = vsel %vm2739, %v2712, %v2481
      %v2747 = vsel %vm2739, %v2714, %v2483
      %v2749 = vsel %vm2739, %v2716, %v2485
      %v2751 = vsel %vm2739, %v2718, %v2487
      %v2753 = vsel %vm2739, %v2720, %v2489
      %v2755 = vsel %vm2739, %v2722, %v2491
      %v2757 = vsel %vm2739, %v2724, %v2493
      %v2759 = vsel %vm2739, %v2726, %v2495
      %v2761 = vsel %vm2739, %v2728, %v2497
      %v2763 = vsel %vm2739, %v2730, %v2499
      %v2765 = vsel %vm2739, %v2732, %v2501
      %v2767 = vsel %vm2739, %v2734, %v2503
      %v2769 = vsel %vm2739, %v2736, %v2505
      %v2771 = vsel %vm2739, %v2738, %v2507
      %v2772 = vld [vmem:[%s1] sm:$0xf]
      %v2773 = vld [vmem:[%s1 + $0x4] sm:$0xf]
      %v2774 = vld [vmem:[%s1 + $0x8] sm:$0xf]
      %v2775 = vld [vmem:[%s1 + $0xc] sm:$0xf]
      %v2776 = vld [vmem:[%s1 + $0x10] sm:$0x3]
      %v2782 = vunpack.c.l.b16 %v2772
      %v2783 = vunpack.c.l.b16 %v2773
      %v2784 = vunpack.c.l.b16 %v2774
      %v2785 = vunpack.c.l.b16 %v2775
      %v2786 = vunpack.c.l.b16 %v2776
      %v2787 = vpack.c.b16 %v2783, %v2782
      %v2788 = vpack.c.b16 %v2785, %v2784
      %v2789 = vpack.c.b16 %v2786, %v2786
      %vm2792 = vcmask 293888
      %v2793 = vsel %vm2792, %v2741, 0
      %v2795 = vsel %vm2792, %v2743, 0
      %v2797 = vsel %vm2792, %v2745, 0
      %v2799 = vsel %vm2792, %v2747, 0
      %v2801 = vsel %vm2792, %v2749, 0
      %v2803 = vsel %vm2792, %v2751, 0
      %v2805 = vsel %vm2792, %v2753, 0
      %v2807 = vsel %vm2792, %v2755, 0
      %v2809 = vsel %vm2792, %v2757, 0
      %v2811 = vsel %vm2792, %v2759, 0
      %v2813 = vsel %vm2792, %v2761, 0
      %v2815 = vsel %vm2792, %v2763, 0
      %v2817 = vsel %vm2792, %v2765, 0
      %v2819 = vsel %vm2792, %v2767, 0
      %v2821 = vsel %vm2792, %v2769, 0
      %v2823 = vsel %vm2792, %v2771, 0
      %vm2825 = vcmask 1041408
      %v2827 = vsel %vm2825, %v2789, 0
      %2829 = vmatprep.subr.bf16.mxu0 0
      %2830 = vmatpush1.bf16.msra.mxu0 0
      %2831 = vmatprep.subr.bf16.mxu0 0
      %2832 = vmatpush1.bf16.msra.mxu0 0
      %2833 = vmatprep.subr.bf16.mxu0 0
      %2834 = vmatpush1.bf16.msra.mxu0 0
      %2835 = vmatprep.subr.bf16.mxu0 0
      %2836 = vmatpush1.bf16.msra.mxu0 0
      %2837 = vmatprep.subr.bf16.mxu0 0
      %2838 = vmatpush1.bf16.msra.mxu0 0
      %2839 = vmatprep.subr.bf16.mxu0 0
      %2840 = vmatpush1.bf16.msra.mxu0 %v2827
      %2841 = vmatprep.subr.bf16.mxu0 0
      %2842 = vmatpush1.bf16.msra.mxu0 %v2788
      %2843 = vmatprep.subr.bf16.mxu0 0
      %2844 = vmatpush1.bf16.msra.mxu0 %v2787
      %2845 = vmatprep.subr.bf16.mxu0 0
      %2846 = vmatpush2.bf16.msra.mxu0 0
      %2847 = vmatprep.subr.bf16.mxu0 0
      %2848 = vmatpush2.bf16.msra.mxu0 0
      %2849 = vmatprep.subr.bf16.mxu0 0
      %2850 = vmatpush2.bf16.msra.mxu0 0
      %2851 = vmatprep.subr.bf16.mxu0 0
      %2852 = vmatpush2.bf16.msra.mxu0 0
      %2853 = vmatprep.subr.bf16.mxu0 0
      %2854 = vmatpush2.bf16.msra.mxu0 0
      %2855 = vmatprep.subr.bf16.mxu0 0
      %2856 = vmatpush2.bf16.msra.mxu0 0
      %2857 = vmatprep.subr.bf16.mxu0 0
      %2858 = vmatpush2.bf16.msra.mxu0 0
      %2859 = vmatprep.subr.bf16.mxu0 0
      %2860 = vmatpush2.bf16.msra.mxu0 0
      %2861 = vmatprep.mubr.bf16.mxu0 0
      %2862 = vmatmul.mubr.bf16.gmra.mxu0 %v2793
      %v2863 = vpop.f32.mrf.mxu0
      %v2864 = vadd.f32 0.0, %v2863
      %v2865 = vpop.f32.mrf.mxu0
      %v2866 = vpop.f32.mrf.mxu0
      %v2867 = vadd.f32 0.0, %v2866
      %v2868 = vpop.f32.mrf.mxu0
      %2869 = vmatprep.mubr.bf16.mxu0 0
      %2870 = vmatmul.mubr.bf16.gmra.mxu0 %v2795
      %v2871 = vpop.f32.mrf.mxu0
      %v2872 = vadd.f32 0.0, %v2871
      %v2873 = vpop.f32.mrf.mxu0
      %v2874 = vpop.f32.mrf.mxu0
      %v2875 = vadd.f32 0.0, %v2874
      %v2876 = vpop.f32.mrf.mxu0
      %2877 = vmatprep.mubr.bf16.mxu0 0
      %2878 = vmatmul.mubr.bf16.gmra.mxu0 %v2797
      %v2879 = vpop.f32.mrf.mxu0
      %v2880 = vadd.f32 0.0, %v2879
      %v2881 = vpop.f32.mrf.mxu0
      %v2882 = vpop.f32.mrf.mxu0
      %v2883 = vadd.f32 0.0, %v2882
      %v2884 = vpop.f32.mrf.mxu0
      %2885 = vmatprep.mubr.bf16.mxu0 0
      %2886 = vmatmul.mubr.bf16.gmra.mxu0 %v2799
      %v2887 = vpop.f32.mrf.mxu0
      %v2888 = vadd.f32 0.0, %v2887
      %v2889 = vpop.f32.mrf.mxu0
      %v2890 = vpop.f32.mrf.mxu0
      %v2891 = vadd.f32 0.0, %v2890
      %v2892 = vpop.f32.mrf.mxu0
      %2893 = vmatprep.mubr.bf16.mxu0 0
      %2894 = vmatmul.mubr.bf16.gmra.mxu0 %v2801
      %v2895 = vpop.f32.mrf.mxu0
      %v2896 = vadd.f32 0.0, %v2895
      %v2897 = vpop.f32.mrf.mxu0
      %v2898 = vpop.f32.mrf.mxu0
      %v2899 = vadd.f32 0.0, %v2898
      %v2900 = vpop.f32.mrf.mxu0
      %2901 = vmatprep.mubr.bf16.mxu0 0
      %2902 = vmatmul.mubr.bf16.gmra.mxu0 %v2803
      %v2903 = vpop.f32.mrf.mxu0
      %v2904 = vadd.f32 0.0, %v2903
      %v2905 = vpop.f32.mrf.mxu0
      %v2906 = vpop.f32.mrf.mxu0
      %v2907 = vadd.f32 0.0, %v2906
      %v2908 = vpop.f32.mrf.mxu0
      %2909 = vmatprep.mubr.bf16.mxu0 0
      %2910 = vmatmul.mubr.bf16.gmra.mxu0 %v2805
      %v2911 = vpop.f32.mrf.mxu0
      %v2912 = vadd.f32 0.0, %v2911
      %v2913 = vpop.f32.mrf.mxu0
      %v2914 = vpop.f32.mrf.mxu0
      %v2915 = vadd.f32 0.0, %v2914
      %v2916 = vpop.f32.mrf.mxu0
      %2917 = vmatprep.mubr.bf16.mxu0 0
      %2918 = vmatmul.mubr.bf16.gmra.mxu0 %v2807
      %v2919 = vpop.f32.mrf.mxu0
      %v2920 = vadd.f32 0.0, %v2919
      %v2921 = vpop.f32.mrf.mxu0
      %v2922 = vpop.f32.mrf.mxu0
      %v2923 = vadd.f32 0.0, %v2922
      %v2924 = vpop.f32.mrf.mxu0
      %2925 = vmatprep.mubr.bf16.mxu0 0
      %2926 = vmatmul.mubr.bf16.gmra.mxu0 %v2809
      %v2927 = vpop.f32.mrf.mxu0
      %v2928 = vadd.f32 0.0, %v2927
      %v2929 = vpop.f32.mrf.mxu0
      %v2930 = vpop.f32.mrf.mxu0
      %v2931 = vadd.f32 0.0, %v2930
      %v2932 = vpop.f32.mrf.mxu0
      %2933 = vmatprep.mubr.bf16.mxu0 0
      %2934 = vmatmul.mubr.bf16.gmra.mxu0 %v2811
      %v2935 = vpop.f32.mrf.mxu0
      %v2936 = vadd.f32 0.0, %v2935
      %v2937 = vpop.f32.mrf.mxu0
      %v2938 = vpop.f32.mrf.mxu0
      %v2939 = vadd.f32 0.0, %v2938
      %v2940 = vpop.f32.mrf.mxu0
      %2941 = vmatprep.mubr.bf16.mxu0 0
      %2942 = vmatmul.mubr.bf16.gmra.mxu0 %v2813
      %v2943 = vpop.f32.mrf.mxu0
      %v2944 = vadd.f32 0.0, %v2943
      %v2945 = vpop.f32.mrf.mxu0
      %v2946 = vpop.f32.mrf.mxu0
      %v2947 = vadd.f32 0.0, %v2946
      %v2948 = vpop.f32.mrf.mxu0
      %2949 = vmatprep.mubr.bf16.mxu0 0
      %2950 = vmatmul.mubr.bf16.gmra.mxu0 %v2815
      %v2951 = vpop.f32.mrf.mxu0
      %v2952 = vadd.f32 0.0, %v2951
      %v2953 = vpop.f32.mrf.mxu0
      %v2954 = vpop.f32.mrf.mxu0
      %v2955 = vadd.f32 0.0, %v2954
      %v2956 = vpop.f32.mrf.mxu0
      %2957 = vmatprep.mubr.bf16.mxu0 0
      %2958 = vmatmul.mubr.bf16.gmra.mxu0 %v2817
      %v2959 = vpop.f32.mrf.mxu0
      %v2960 = vadd.f32 0.0, %v2959
      %v2961 = vpop.f32.mrf.mxu0
      %v2962 = vpop.f32.mrf.mxu0
      %v2963 = vadd.f32 0.0, %v2962
      %v2964 = vpop.f32.mrf.mxu0
      %2965 = vmatprep.mubr.bf16.mxu0 0
      %2966 = vmatmul.mubr.bf16.gmra.mxu0 %v2819
      %v2967 = vpop.f32.mrf.mxu0
      %v2968 = vadd.f32 0.0, %v2967
      %v2969 = vpop.f32.mrf.mxu0
      %v2970 = vpop.f32.mrf.mxu0
      %v2971 = vadd.f32 0.0, %v2970
      %v2972 = vpop.f32.mrf.mxu0
      %2973 = vmatprep.mubr.bf16.mxu0 0
      %2974 = vmatmul.mubr.bf16.gmra.mxu0 %v2821
      %v2975 = vpop.f32.mrf.mxu0
      %v2976 = vadd.f32 0.0, %v2975
      %v2977 = vpop.f32.mrf.mxu0
      %v2978 = vpop.f32.mrf.mxu0
      %v2979 = vadd.f32 0.0, %v2978
      %v2980 = vpop.f32.mrf.mxu0
      %2981 = vmatprep.mubr.bf16.mxu0 0
      %2982 = vmatmul.mubr.bf16.gmra.mxu0 %v2823
      %v2983 = vpop.f32.mrf.mxu0
      %v2984 = vadd.f32 0.0, %v2983
      %v2985 = vpop.f32.mrf.mxu0
      %v2986 = vpop.f32.mrf.mxu0
      %v2987 = vadd.f32 0.0, %v2986
      %v2988 = vpop.f32.mrf.mxu0
      %2989 = vdwg.mxu0
      %v2990 = vld [vmem:[%s2] sm:$0x1]
      %v2992 = vlaneseq
      %v2993 = vshrl.u32 %v2992, 7
      %v2994 = vsub.s32 0, %v2993
      %v2995 = vrot.slane %v2990, %v2994
      %v2997 = vmul.f32 %v2864, %v2995
      %v2998 = vmul.f32 %v2867, %v2995
      %v2999 = vmul.f32 %v2872, %v2995
      %v3000 = vmul.f32 %v2875, %v2995
      %v3001 = vmul.f32 %v2880, %v2995
      %v3002 = vmul.f32 %v2883, %v2995
      %v3003 = vmul.f32 %v2888, %v2995
      %v3004 = vmul.f32 %v2891, %v2995
      %v3005 = vmul.f32 %v2896, %v2995
      %v3006 = vmul.f32 %v2899, %v2995
      %v3007 = vmul.f32 %v2904, %v2995
      %v3008 = vmul.f32 %v2907, %v2995
      %v3009 = vmul.f32 %v2912, %v2995
      %v3010 = vmul.f32 %v2915, %v2995
      %v3011 = vmul.f32 %v2920, %v2995
      %v3012 = vmul.f32 %v2923, %v2995
      %v3013 = vmul.f32 %v2928, %v2995
      %v3014 = vmul.f32 %v2931, %v2995
      %v3015 = vmul.f32 %v2936, %v2995
      %v3016 = vmul.f32 %v2939, %v2995
      %v3017 = vmul.f32 %v2944, %v2995
      %v3018 = vmul.f32 %v2947, %v2995
      %v3019 = vmul.f32 %v2952, %v2995
      %v3020 = vmul.f32 %v2955, %v2995
      %v3021 = vmul.f32 %v2960, %v2995
      %v3022 = vmul.f32 %v2963, %v2995
      %v3023 = vmul.f32 %v2968, %v2995
      %v3024 = vmul.f32 %v2971, %v2995
      %v3025 = vmul.f32 %v2976, %v2995
      %v3026 = vmul.f32 %v2979, %v2995
      %v3027 = vmul.f32 %v2984, %v2995
      %v3028 = vmul.f32 %v2987, %v2995
      %v3029 = vld [vmem:[%s3] sm:$0x1]
      %v3031 = vlaneseq
      %v3032 = vshrl.u32 %v3031, 7
      %v3033 = vsub.s32 0, %v3032
      %v3034 = vrot.slane %v3029, %v3033
      %v3036 = vadd.f32 %v2997, %v3034
      %v3037 = vadd.f32 %v2998, %v3034
      %v3038 = vadd.f32 %v2999, %v3034
      %v3039 = vadd.f32 %v3000, %v3034
      %v3040 = vadd.f32 %v3001, %v3034
      %v3041 = vadd.f32 %v3002, %v3034
      %v3042 = vadd.f32 %v3003, %v3034
      %v3043 = vadd.f32 %v3004, %v3034
      %v3044 = vadd.f32 %v3005, %v3034
      %v3045 = vadd.f32 %v3006, %v3034
      %v3046 = vadd.f32 %v3007, %v3034
      %v3047 = vadd.f32 %v3008, %v3034
      %v3048 = vadd.f32 %v3009, %v3034
      %v3049 = vadd.f32 %v3010, %v3034
      %v3050 = vadd.f32 %v3011, %v3034
      %v3051 = vadd.f32 %v3012, %v3034
      %v3052 = vadd.f32 %v3013, %v3034
      %v3053 = vadd.f32 %v3014, %v3034
      %v3054 = vadd.f32 %v3015, %v3034
      %v3055 = vadd.f32 %v3016, %v3034
      %v3056 = vadd.f32 %v3017, %v3034
      %v3057 = vadd.f32 %v3018, %v3034
      %v3058 = vadd.f32 %v3019, %v3034
      %v3059 = vadd.f32 %v3020, %v3034
      %v3060 = vadd.f32 %v3021, %v3034
      %v3061 = vadd.f32 %v3022, %v3034
      %v3062 = vadd.f32 %v3023, %v3034
      %v3063 = vadd.f32 %v3024, %v3034
      %v3064 = vadd.f32 %v3025, %v3034
      %v3065 = vadd.f32 %v3026, %v3034
      %v3066 = vadd.f32 %v3027, %v3034
      %v3067 = vadd.f32 %v3028, %v3034
      %v3068 = vmax.f32 %v3036, 0.0
      %v3069 = vmax.f32 %v3037, 0.0
      %v3070 = vmax.f32 %v3038, 0.0
      %v3071 = vmax.f32 %v3039, 0.0
      %v3072 = vmax.f32 %v3040, 0.0
      %v3073 = vmax.f32 %v3041, 0.0
      %v3074 = vmax.f32 %v3042, 0.0
      %v3075 = vmax.f32 %v3043, 0.0
      %v3076 = vmax.f32 %v3044, 0.0
      %v3077 = vmax.f32 %v3045, 0.0
      %v3078 = vmax.f32 %v3046, 0.0
      %v3079 = vmax.f32 %v3047, 0.0
      %v3080 = vmax.f32 %v3048, 0.0
      %v3081 = vmax.f32 %v3049, 0.0
      %v3082 = vmax.f32 %v3050, 0.0
      %v3083 = vmax.f32 %v3051, 0.0
      %v3084 = vmax.f32 %v3052, 0.0
      %v3085 = vmax.f32 %v3053, 0.0
      %v3086 = vmax.f32 %v3054, 0.0
      %v3087 = vmax.f32 %v3055, 0.0
      %v3088 = vmax.f32 %v3056, 0.0
      %v3089 = vmax.f32 %v3057, 0.0
      %v3090 = vmax.f32 %v3058, 0.0
      %v3091 = vmax.f32 %v3059, 0.0
      %v3092 = vmax.f32 %v3060, 0.0
      %v3093 = vmax.f32 %v3061, 0.0
      %v3094 = vmax.f32 %v3062, 0.0
      %v3095 = vmax.f32 %v3063, 0.0
      %v3096 = vmax.f32 %v3064, 0.0
      %v3097 = vmax.f32 %v3065, 0.0
      %v3098 = vmax.f32 %v3066, 0.0
      %v3099 = vmax.f32 %v3067, 0.0
      %3100 = vst [vmem:[#allocation3] sm:$0xf] 0
      %3101 = vst [vmem:[#allocation3 + $0x4] sm:$0xf] 0
      %3102 = vst [vmem:[#allocation3 + $0x8] sm:$0x1] 0
      %3103 = vst [vmem:[#allocation3 + $0xc] sm:$0xf] 0
      %3104 = vst [vmem:[#allocation3 + $0x10] sm:$0xf] 0
      %3105 = vst [vmem:[#allocation3 + $0x14] sm:$0x1] 0
      %3106 = vst [vmem:[#allocation3 + $0x18] sm:$0xf] 0
      %3107 = vst [vmem:[#allocation3 + $0x1c] sm:$0xf] 0
      %3108 = vst [vmem:[#allocation3 + $0x20] sm:$0x1] 0
      %3109 = vst [vmem:[#allocation3 + $0x24] sm:$0xf] 0
      %3110 = vst [vmem:[#allocation3 + $0x28] sm:$0xf] 0
      %3111 = vst [vmem:[#allocation3 + $0x2c] sm:$0x1] 0
      %3112 = vst [vmem:[#allocation3 + $0x30] sm:$0xf] 0
      %3113 = vst [vmem:[#allocation3 + $0x34] sm:$0xf] 0
      %3114 = vst [vmem:[#allocation3 + $0x38] sm:$0x1] 0
      %3115 = vst [vmem:[#allocation3 + $0x3c] sm:$0xf] 0
      %3116 = vst [vmem:[#allocation3 + $0x40] sm:$0xf] 0
      %3117 = vst [vmem:[#allocation3 + $0x44] sm:$0x1] 0
      %3118 = vst [vmem:[#allocation3 + $0x48] sm:$0xf] 0
      %3119 = vst [vmem:[#allocation3 + $0x4c] sm:$0xf] 0
      %3120 = vst [vmem:[#allocation3 + $0x50] sm:$0x1] 0
      %3121 = vst [vmem:[#allocation3 + $0x54] sm:$0xf] 0
      %3122 = vst [vmem:[#allocation3 + $0x58] sm:$0xf] 0
      %3123 = vst [vmem:[#allocation3 + $0x5c] sm:$0x1] 0
      %3124 = vst [vmem:[#allocation3 + $0x60] sm:$0xf] 0
      %3125 = vst [vmem:[#allocation3 + $0x64] sm:$0xf] 0
      %3126 = vst [vmem:[#allocation3 + $0x68] sm:$0x1] 0
      %3127 = vst [vmem:[#allocation3 + $0x6c] sm:$0xf] 0
      %3128 = vst [vmem:[#allocation3 + $0x70] sm:$0xf] 0
      %3129 = vst [vmem:[#allocation3 + $0x74] sm:$0x1] 0
      %3130 = vst [vmem:[#allocation3 + $0x78] sm:$0xf] 0
      %3131 = vst [vmem:[#allocation3 + $0x7c] sm:$0xf] 0
      %3132 = vst [vmem:[#allocation3 + $0x80] sm:$0x1] 0
      %3133 = vst [vmem:[#allocation3 + $0x84] sm:$0xf] 0
      %3134 = vst [vmem:[#allocation3 + $0x88] sm:$0xf] 0
      %3135 = vst [vmem:[#allocation3 + $0x8c] sm:$0x1] 0
      %3136 = vst [vmem:[#allocation3 + $0x90] sm:$0xf] 0
      %3137 = vst [vmem:[#allocation3 + $0x94] sm:$0xf] 0
      %3138 = vst [vmem:[#allocation3 + $0x98] sm:$0x1] 0
      %3139 = vst [vmem:[#allocation3 + $0x9c] sm:$0xf] 0
      %3140 = vst [vmem:[#allocation3 + $0xa0] sm:$0xf] 0
      %3141 = vst [vmem:[#allocation3 + $0xa4] sm:$0x1] 0
      %3142 = vst [vmem:[#allocation3 + $0xa8] sm:$0xf] 0
      %3143 = vst [vmem:[#allocation3 + $0xac] sm:$0xf] 0
      %3144 = vst [vmem:[#allocation3 + $0xb0] sm:$0x1] 0
      %3145 = vst [vmem:[#allocation3 + $0xb4] sm:$0xf] 0
      %3146 = vst [vmem:[#allocation3 + $0xb8] sm:$0xf] 0
      %3147 = vst [vmem:[#allocation3 + $0xbc] sm:$0x1] 0
      %3148 = vst [vmem:[#allocation3 + $0xc0] sm:$0xf] 0
      %3149 = vst [vmem:[#allocation3 + $0xc4] sm:$0xf] 0
      %3150 = vst [vmem:[#allocation3 + $0xc8] sm:$0x1] 0
      %3151 = vst [vmem:[#allocation3 + $0xcc] sm:$0xf] 0
      %3152 = vst [vmem:[#allocation3 + $0xd0] sm:$0xf] 0
      %3153 = vst [vmem:[#allocation3 + $0xd4] sm:$0x1] 0
      %v3154 = vpack.c.bf16 %v3069, %v3068
      %v3155 = vpack.c.bf16 %v3071, %v3070
      %v3156 = vpack.c.bf16 %v3073, %v3072
      %v3157 = vpack.c.bf16 %v3075, %v3074
      %v3158 = vpack.c.bf16 %v3077, %v3076
      %v3159 = vpack.c.bf16 %v3079, %v3078
      %v3160 = vpack.c.bf16 %v3081, %v3080
      %v3161 = vpack.c.bf16 %v3083, %v3082
      %v3162 = vpack.c.bf16 %v3085, %v3084
      %v3163 = vpack.c.bf16 %v3087, %v3086
      %v3164 = vpack.c.bf16 %v3089, %v3088
      %v3165 = vpack.c.bf16 %v3091, %v3090
      %v3166 = vpack.c.bf16 %v3093, %v3092
      %v3167 = vpack.c.bf16 %v3095, %v3094
      %v3168 = vpack.c.bf16 %v3097, %v3096
      %v3169 = vpack.c.bf16 %v3099, %v3098
      %v3186 = vunpack.c.l.b16 %v3154
      %v3187 = vunpack.c.h.b16 %v3154
      %v3188 = vunpack.c.l.b16 %v3155
      %v3189 = vunpack.c.h.b16 %v3155
      %v3190 = vunpack.c.l.b16 %v3156
      %v3191 = vunpack.c.h.b16 %v3156
      %v3192 = vunpack.c.l.b16 %v3157
      %v3193 = vunpack.c.h.b16 %v3157
      %v3194 = vunpack.c.l.b16 %v3158
      %v3195 = vunpack.c.h.b16 %v3158
      %v3196 = vunpack.c.l.b16 %v3159
      %v3197 = vunpack.c.h.b16 %v3159
      %v3198 = vunpack.c.l.b16 %v3160
      %v3199 = vunpack.c.h.b16 %v3160
      %v3200 = vunpack.c.l.b16 %v3161
      %v3201 = vunpack.c.h.b16 %v3161
      %v3202 = vunpack.c.l.b16 %v3162
      %v3203 = vunpack.c.h.b16 %v3162
      %v3204 = vunpack.c.l.b16 %v3163
      %v3205 = vunpack.c.h.b16 %v3163
      %v3206 = vunpack.c.l.b16 %v3164
      %v3207 = vunpack.c.h.b16 %v3164
      %v3208 = vunpack.c.l.b16 %v3165
      %v3209 = vunpack.c.h.b16 %v3165
      %v3210 = vunpack.c.l.b16 %v3166
      %v3211 = vunpack.c.h.b16 %v3166
      %v3212 = vunpack.c.l.b16 %v3167
      %v3213 = vunpack.c.h.b16 %v3167
      %v3214 = vunpack.c.l.b16 %v3168
      %v3215 = vunpack.c.h.b16 %v3168
      %v3216 = vunpack.c.l.b16 %v3169
      %v3217 = vunpack.c.h.b16 %v3169
      %v3218 = vpack.c.b16 %v3186, %v3186
      %v3219 = vpack.c.b16 %v3187, %v3187
      %v3220 = vpack.c.b16 %v3188, %v3188
      %v3221 = vpack.c.b16 %v3189, %v3189
      %v3222 = vpack.c.b16 %v3190, %v3190
      %v3223 = vpack.c.b16 %v3191, %v3191
      %v3224 = vpack.c.b16 %v3192, %v3192
      %v3225 = vpack.c.b16 %v3193, %v3193
      %v3226 = vpack.c.b16 %v3194, %v3194
      %v3227 = vpack.c.b16 %v3195, %v3195
      %v3228 = vpack.c.b16 %v3196, %v3196
      %v3229 = vpack.c.b16 %v3197, %v3197
      %v3230 = vpack.c.b16 %v3198, %v3198
      %v3231 = vpack.c.b16 %v3199, %v3199
      %v3232 = vpack.c.b16 %v3200, %v3200
      %v3233 = vpack.c.b16 %v3201, %v3201
      %v3234 = vpack.c.b16 %v3202, %v3202
      %v3235 = vpack.c.b16 %v3203, %v3203
      %v3236 = vpack.c.b16 %v3204, %v3204
      %v3237 = vpack.c.b16 %v3205, %v3205
      %v3238 = vpack.c.b16 %v3206, %v3206
      %v3239 = vpack.c.b16 %v3207, %v3207
      %v3240 = vpack.c.b16 %v3208, %v3208
      %v3241 = vpack.c.b16 %v3209, %v3209
      %v3242 = vpack.c.b16 %v3210, %v3210
      %v3243 = vpack.c.b16 %v3211, %v3211
      %v3244 = vpack.c.b16 %v3212, %v3212
      %v3245 = vpack.c.b16 %v3213, %v3213
      %v3246 = vpack.c.b16 %v3214, %v3214
      %v3247 = vpack.c.b16 %v3215, %v3215
      %v3248 = vpack.c.b16 %v3216, %v3216
      %v3249 = vpack.c.b16 %v3217, %v3217
      %v3251 = vshrl.u32 %v3218, 16
      %v3253 = vrot.slane %v3251, 7
      %v3254 = vshll.u32 %v3218, 16
      %v3256 = vor.u32 %v3253, %v3254
      %v3257 = vrot.slane %v3253, 4
      %v3259 = vshrl.u32 %v3219, 16
      %v3261 = vrot.slane %v3259, 7
      %v3262 = vshll.u32 %v3219, 16
      %v3264 = vor.u32 %v3261, %v3262
      %v3265 = vsel %vm370, %v3257, %v3264
      %v3266 = vrot.slane %v3261, 4
      %v3268 = vshrl.u32 %v3220, 16
      %v3270 = vrot.slane %v3268, 7
      %v3271 = vshll.u32 %v3220, 16
      %v3273 = vor.u32 %v3270, %v3271
      %v3274 = vrot.slane %v3270, 4
      %v3276 = vshrl.u32 %v3221, 16
      %v3278 = vrot.slane %v3276, 7
      %v3279 = vshll.u32 %v3221, 16
      %v3281 = vor.u32 %v3278, %v3279
      %v3282 = vsel %vm370, %v3274, %v3281
      %v3283 = vrot.slane %v3278, 4
      %v3285 = vshrl.u32 %v3222, 16
      %v3287 = vrot.slane %v3285, 7
      %v3288 = vshll.u32 %v3222, 16
      %v3290 = vor.u32 %v3287, %v3288
      %v3291 = vrot.slane %v3287, 4
      %v3293 = vshrl.u32 %v3223, 16
      %v3295 = vrot.slane %v3293, 7
      %v3296 = vshll.u32 %v3223, 16
      %v3298 = vor.u32 %v3295, %v3296
      %v3299 = vsel %vm370, %v3291, %v3298
      %v3300 = vrot.slane %v3295, 4
      %v3302 = vshrl.u32 %v3224, 16
      %v3304 = vrot.slane %v3302, 7
      %v3305 = vshll.u32 %v3224, 16
      %v3307 = vor.u32 %v3304, %v3305
      %v3308 = vrot.slane %v3304, 4
      %v3310 = vshrl.u32 %v3225, 16
      %v3312 = vrot.slane %v3310, 7
      %v3313 = vshll.u32 %v3225, 16
      %v3315 = vor.u32 %v3312, %v3313
      %v3316 = vsel %vm370, %v3308, %v3315
      %v3317 = vrot.slane %v3312, 4
      %v3319 = vshrl.u32 %v3226, 16
      %v3321 = vrot.slane %v3319, 7
      %v3322 = vshll.u32 %v3226, 16
      %v3324 = vor.u32 %v3321, %v3322
      %v3325 = vrot.slane %v3321, 4
      %v3327 = vshrl.u32 %v3227, 16
      %v3329 = vrot.slane %v3327, 7
      %v3330 = vshll.u32 %v3227, 16
      %v3332 = vor.u32 %v3329, %v3330
      %v3333 = vsel %vm370, %v3325, %v3332
      %v3334 = vrot.slane %v3329, 4
      %v3336 = vshrl.u32 %v3228, 16
      %v3338 = vrot.slane %v3336, 7
      %v3339 = vshll.u32 %v3228, 16
      %v3341 = vor.u32 %v3338, %v3339
      %v3342 = vrot.slane %v3338, 4
      %v3344 = vshrl.u32 %v3229, 16
      %v3346 = vrot.slane %v3344, 7
      %v3347 = vshll.u32 %v3229, 16
      %v3349 = vor.u32 %v3346, %v3347
      %v3350 = vsel %vm370, %v3342, %v3349
      %v3351 = vrot.slane %v3346, 4
      %v3353 = vshrl.u32 %v3230, 16
      %v3355 = vrot.slane %v3353, 7
      %v3356 = vshll.u32 %v3230, 16
      %v3358 = vor.u32 %v3355, %v3356
      %v3359 = vrot.slane %v3355, 4
      %v3361 = vshrl.u32 %v3231, 16
      %v3363 = vrot.slane %v3361, 7
      %v3364 = vshll.u32 %v3231, 16
      %v3366 = vor.u32 %v3363, %v3364
      %v3367 = vsel %vm370, %v3359, %v3366
      %v3368 = vrot.slane %v3363, 4
      %v3370 = vshrl.u32 %v3232, 16
      %v3372 = vrot.slane %v3370, 7
      %v3373 = vshll.u32 %v3232, 16
      %v3375 = vor.u32 %v3372, %v3373
      %v3376 = vrot.slane %v3372, 4
      %v3378 = vshrl.u32 %v3233, 16
      %v3380 = vrot.slane %v3378, 7
      %v3381 = vshll.u32 %v3233, 16
      %v3383 = vor.u32 %v3380, %v3381
      %v3384 = vsel %vm370, %v3376, %v3383
      %v3385 = vrot.slane %v3380, 4
      %v3387 = vshrl.u32 %v3234, 16
      %v3389 = vrot.slane %v3387, 7
      %v3390 = vshll.u32 %v3234, 16
      %v3392 = vor.u32 %v3389, %v3390
      %v3393 = vrot.slane %v3389, 4
      %v3395 = vshrl.u32 %v3235, 16
      %v3397 = vrot.slane %v3395, 7
      %v3398 = vshll.u32 %v3235, 16
      %v3400 = vor.u32 %v3397, %v3398
      %v3401 = vsel %vm370, %v3393, %v3400
      %v3402 = vrot.slane %v3397, 4
      %v3404 = vshrl.u32 %v3236, 16
      %v3406 = vrot.slane %v3404, 7
      %v3407 = vshll.u32 %v3236, 16
      %v3409 = vor.u32 %v3406, %v3407
      %v3410 = vrot.slane %v3406, 4
      %v3412 = vshrl.u32 %v3237, 16
      %v3414 = vrot.slane %v3412, 7
      %v3415 = vshll.u32 %v3237, 16
      %v3417 = vor.u32 %v3414, %v3415
      %v3418 = vsel %vm370, %v3410, %v3417
      %v3419 = vrot.slane %v3414, 4
      %v3421 = vshrl.u32 %v3238, 16
      %v3423 = vrot.slane %v3421, 7
      %v3424 = vshll.u32 %v3238, 16
      %v3426 = vor.u32 %v3423, %v3424
      %v3427 = vrot.slane %v3423, 4
      %v3429 = vshrl.u32 %v3239, 16
      %v3431 = vrot.slane %v3429, 7
      %v3432 = vshll.u32 %v3239, 16
      %v3434 = vor.u32 %v3431, %v3432
      %v3435 = vsel %vm370, %v3427, %v3434
      %v3436 = vrot.slane %v3431, 4
      %v3438 = vshrl.u32 %v3240, 16
      %v3440 = vrot.slane %v3438, 7
      %v3441 = vshll.u32 %v3240, 16
      %v3443 = vor.u32 %v3440, %v3441
      %v3444 = vrot.slane %v3440, 4
      %v3446 = vshrl.u32 %v3241, 16
      %v3448 = vrot.slane %v3446, 7
      %v3449 = vshll.u32 %v3241, 16
      %v3451 = vor.u32 %v3448, %v3449
      %v3452 = vsel %vm370, %v3444, %v3451
      %v3453 = vrot.slane %v3448, 4
      %v3455 = vshrl.u32 %v3242, 16
      %v3457 = vrot.slane %v3455, 7
      %v3458 = vshll.u32 %v3242, 16
      %v3460 = vor.u32 %v3457, %v3458
      %v3461 = vrot.slane %v3457, 4
      %v3463 = vshrl.u32 %v3243, 16
      %v3465 = vrot.slane %v3463, 7
      %v3466 = vshll.u32 %v3243, 16
      %v3468 = vor.u32 %v3465, %v3466
      %v3469 = vsel %vm370, %v3461, %v3468
      %v3470 = vrot.slane %v3465, 4
      %v3472 = vshrl.u32 %v3244, 16
      %v3474 = vrot.slane %v3472, 7
      %v3475 = vshll.u32 %v3244, 16
      %v3477 = vor.u32 %v3474, %v3475
      %v3478 = vrot.slane %v3474, 4
      %v3480 = vshrl.u32 %v3245, 16
      %v3482 = vrot.slane %v3480, 7
      %v3483 = vshll.u32 %v3245, 16
      %v3485 = vor.u32 %v3482, %v3483
      %v3486 = vsel %vm370, %v3478, %v3485
      %v3487 = vrot.slane %v3482, 4
      %v3489 = vshrl.u32 %v3246, 16
      %v3491 = vrot.slane %v3489, 7
      %v3492 = vshll.u32 %v3246, 16
      %v3494 = vor.u32 %v3491, %v3492
      %v3495 = vrot.slane %v3491, 4
      %v3497 = vshrl.u32 %v3247, 16
      %v3499 = vrot.slane %v3497, 7
      %v3500 = vshll.u32 %v3247, 16
      %v3502 = vor.u32 %v3499, %v3500
      %v3503 = vsel %vm370, %v3495, %v3502
      %v3504 = vrot.slane %v3499, 4
      %v3506 = vshrl.u32 %v3248, 16
      %v3508 = vrot.slane %v3506, 7
      %v3509 = vshll.u32 %v3248, 16
      %v3511 = vor.u32 %v3508, %v3509
      %v3512 = vrot.slane %v3508, 4
      %v3514 = vshrl.u32 %v3249, 16
      %v3516 = vrot.slane %v3514, 7
      %v3517 = vshll.u32 %v3249, 16
      %v3519 = vor.u32 %v3516, %v3517
      %v3520 = vsel %vm370, %v3512, %v3519
      %v3521 = vrot.slane %v3516, 4
      %s3570 = scalar_lea.vmem [#allocation3], 12
      %vm3571 = vcmask 1043456
      %vm3572 = vmand %vm3571, %vm693
      %v3573 = vld [vmem:[%s3570] sm:$0xf]
      %v3574 = vsel %vm3572, %v3256, %v3573
      %3575 = vst [vmem:[%s3570] sm:$0xf] %v3574
      %3576 = vst [vmem:[%s3570 + $0x4] sm:$0xf] %v3265
      %vm3577 = vcmask 1040384
      %vm3578 = vmand %vm3577, %vm368
      %v3579 = vld [vmem:[%s3570 + $0x8] sm:$0x1]
      %v3580 = vsel %vm3578, %v3266, %v3579
      %3581 = vst [vmem:[%s3570 + $0x8] sm:$0x1] %v3580
      %v3582 = vld [vmem:[%s3570 + $0xc] sm:$0xf]
      %v3583 = vsel %vm3572, %v3273, %v3582
      %3584 = vst [vmem:[%s3570 + $0xc] sm:$0xf] %v3583
      %3585 = vst [vmem:[%s3570 + $0x10] sm:$0xf] %v3282
      %v3586 = vld [vmem:[%s3570 + $0x14] sm:$0x1]
      %v3587 = vsel %vm3578, %v3283, %v3586
      %3588 = vst [vmem:[%s3570 + $0x14] sm:$0x1] %v3587
      %v3589 = vld [vmem:[%s3570 + $0x18] sm:$0xf]
      %v3590 = vsel %vm3572, %v3290, %v3589
      %3591 = vst [vmem:[%s3570 + $0x18] sm:$0xf] %v3590
      %3592 = vst [vmem:[%s3570 + $0x1c] sm:$0xf] %v3299
      %v3593 = vld [vmem:[%s3570 + $0x20] sm:$0x1]
      %v3594 = vsel %vm3578, %v3300, %v3593
      %3595 = vst [vmem:[%s3570 + $0x20] sm:$0x1] %v3594
      %v3596 = vld [vmem:[%s3570 + $0x24] sm:$0xf]
      %v3597 = vsel %vm3572, %v3307, %v3596
      %3598 = vst [vmem:[%s3570 + $0x24] sm:$0xf] %v3597
      %3599 = vst [vmem:[%s3570 + $0x28] sm:$0xf] %v3316
      %v3600 = vld [vmem:[%s3570 + $0x2c] sm:$0x1]
      %v3601 = vsel %vm3578, %v3317, %v3600
      %3602 = vst [vmem:[%s3570 + $0x2c] sm:$0x1] %v3601
      %v3603 = vld [vmem:[%s3570 + $0x30] sm:$0xf]
      %v3604 = vsel %vm3572, %v3324, %v3603
      %3605 = vst [vmem:[%s3570 + $0x30] sm:$0xf] %v3604
      %3606 = vst [vmem:[%s3570 + $0x34] sm:$0xf] %v3333
      %v3607 = vld [vmem:[%s3570 + $0x38] sm:$0x1]
      %v3608 = vsel %vm3578, %v3334, %v3607
      %3609 = vst [vmem:[%s3570 + $0x38] sm:$0x1] %v3608
      %v3610 = vld [vmem:[%s3570 + $0x3c] sm:$0xf]
      %v3611 = vsel %vm3572, %v3341, %v3610
      %3612 = vst [vmem:[%s3570 + $0x3c] sm:$0xf] %v3611
      %3613 = vst [vmem:[%s3570 + $0x40] sm:$0xf] %v3350
      %v3614 = vld [vmem:[%s3570 + $0x44] sm:$0x1]
      %v3615 = vsel %vm3578, %v3351, %v3614
      %3616 = vst [vmem:[%s3570 + $0x44] sm:$0x1] %v3615
      %v3617 = vld [vmem:[%s3570 + $0x48] sm:$0xf]
      %v3618 = vsel %vm3572, %v3358, %v3617
      %3619 = vst [vmem:[%s3570 + $0x48] sm:$0xf] %v3618
      %3620 = vst [vmem:[%s3570 + $0x4c] sm:$0xf] %v3367
      %v3621 = vld [vmem:[%s3570 + $0x50] sm:$0x1]
      %v3622 = vsel %vm3578, %v3368, %v3621
      %3623 = vst [vmem:[%s3570 + $0x50] sm:$0x1] %v3622
      %v3624 = vld [vmem:[%s3570 + $0x54] sm:$0xf]
      %v3625 = vsel %vm3572, %v3375, %v3624
      %3626 = vst [vmem:[%s3570 + $0x54] sm:$0xf] %v3625
      %3627 = vst [vmem:[%s3570 + $0x58] sm:$0xf] %v3384
      %v3628 = vld [vmem:[%s3570 + $0x5c] sm:$0x1]
      %v3629 = vsel %vm3578, %v3385, %v3628
      %3630 = vst [vmem:[%s3570 + $0x5c] sm:$0x1] %v3629
      %v3631 = vld [vmem:[%s3570 + $0x60] sm:$0xf]
      %v3632 = vsel %vm3572, %v3392, %v3631
      %3633 = vst [vmem:[%s3570 + $0x60] sm:$0xf] %v3632
      %3634 = vst [vmem:[%s3570 + $0x64] sm:$0xf] %v3401
      %v3635 = vld [vmem:[%s3570 + $0x68] sm:$0x1]
      %v3636 = vsel %vm3578, %v3402, %v3635
      %3637 = vst [vmem:[%s3570 + $0x68] sm:$0x1] %v3636
      %v3638 = vld [vmem:[%s3570 + $0x6c] sm:$0xf]
      %v3639 = vsel %vm3572, %v3409, %v3638
      %3640 = vst [vmem:[%s3570 + $0x6c] sm:$0xf] %v3639
      %3641 = vst [vmem:[%s3570 + $0x70] sm:$0xf] %v3418
      %v3642 = vld [vmem:[%s3570 + $0x74] sm:$0x1]
      %v3643 = vsel %vm3578, %v3419, %v3642
      %3644 = vst [vmem:[%s3570 + $0x74] sm:$0x1] %v3643
      %v3645 = vld [vmem:[%s3570 + $0x78] sm:$0xf]
      %v3646 = vsel %vm3572, %v3426, %v3645
      %3647 = vst [vmem:[%s3570 + $0x78] sm:$0xf] %v3646
      %3648 = vst [vmem:[%s3570 + $0x7c] sm:$0xf] %v3435
      %v3649 = vld [vmem:[%s3570 + $0x80] sm:$0x1]
      %v3650 = vsel %vm3578, %v3436, %v3649
      %3651 = vst [vmem:[%s3570 + $0x80] sm:$0x1] %v3650
      %v3652 = vld [vmem:[%s3570 + $0x84] sm:$0xf]
      %v3653 = vsel %vm3572, %v3443, %v3652
      %3654 = vst [vmem:[%s3570 + $0x84] sm:$0xf] %v3653
      %3655 = vst [vmem:[%s3570 + $0x88] sm:$0xf] %v3452
      %v3656 = vld [vmem:[%s3570 + $0x8c] sm:$0x1]
      %v3657 = vsel %vm3578, %v3453, %v3656
      %3658 = vst [vmem:[%s3570 + $0x8c] sm:$0x1] %v3657
      %v3659 = vld [vmem:[%s3570 + $0x90] sm:$0xf]
      %v3660 = vsel %vm3572, %v3460, %v3659
      %3661 = vst [vmem:[%s3570 + $0x90] sm:$0xf] %v3660
      %3662 = vst [vmem:[%s3570 + $0x94] sm:$0xf] %v3469
      %v3663 = vld [vmem:[%s3570 + $0x98] sm:$0x1]
      %v3664 = vsel %vm3578, %v3470, %v3663
      %3665 = vst [vmem:[%s3570 + $0x98] sm:$0x1] %v3664
      %v3666 = vld [vmem:[%s3570 + $0x9c] sm:$0xf]
      %v3667 = vsel %vm3572, %v3477, %v3666
      %3668 = vst [vmem:[%s3570 + $0x9c] sm:$0xf] %v3667
      %3669 = vst [vmem:[%s3570 + $0xa0] sm:$0xf] %v3486
      %v3670 = vld [vmem:[%s3570 + $0xa4] sm:$0x1]
      %v3671 = vsel %vm3578, %v3487, %v3670
      %3672 = vst [vmem:[%s3570 + $0xa4] sm:$0x1] %v3671
      %v3673 = vld [vmem:[%s3570 + $0xa8] sm:$0xf]
      %v3674 = vsel %vm3572, %v3494, %v3673
      %3675 = vst [vmem:[%s3570 + $0xa8] sm:$0xf] %v3674
      %3676 = vst [vmem:[%s3570 + $0xac] sm:$0xf] %v3503
      %v3677 = vld [vmem:[%s3570 + $0xb0] sm:$0x1]
      %v3678 = vsel %vm3578, %v3504, %v3677
      %3679 = vst [vmem:[%s3570 + $0xb0] sm:$0x1] %v3678
      %v3680 = vld [vmem:[%s3570 + $0xb4] sm:$0xf]
      %v3681 = vsel %vm3572, %v3511, %v3680
      %3682 = vst [vmem:[%s3570 + $0xb4] sm:$0xf] %v3681
      %3683 = vst [vmem:[%s3570 + $0xb8] sm:$0xf] %v3520
      %v3684 = vld [vmem:[%s3570 + $0xbc] sm:$0x1]
      %v3685 = vsel %vm3578, %v3521, %v3684
      %3686 = vst [vmem:[%s3570 + $0xbc] sm:$0x1] %v3685
      %v3687 = vld [vmem:[#allocation3] sm:$0xf]
      %v3688 = vld [vmem:[#allocation3 + $0x4] sm:$0xf]
      %v3689 = vld [vmem:[#allocation3 + $0xc] sm:$0xf]
      %v3690 = vld [vmem:[#allocation3 + $0x10] sm:$0xf]
      %v3691 = vld [vmem:[#allocation3 + $0x18] sm:$0xf]
      %v3692 = vld [vmem:[#allocation3 + $0x1c] sm:$0xf]
      %v3693 = vld [vmem:[#allocation3 + $0x24] sm:$0xf]
      %v3694 = vld [vmem:[#allocation3 + $0x28] sm:$0xf]
      %v3695 = vld [vmem:[#allocation3 + $0x30] sm:$0xf]
      %v3696 = vld [vmem:[#allocation3 + $0x34] sm:$0xf]
      %v3697 = vld [vmem:[#allocation3 + $0x3c] sm:$0xf]
      %v3698 = vld [vmem:[#allocation3 + $0x40] sm:$0xf]
      %v3699 = vld [vmem:[#allocation3 + $0x48] sm:$0xf]
      %v3700 = vld [vmem:[#allocation3 + $0x4c] sm:$0xf]
      %v3701 = vld [vmem:[#allocation3 + $0x54] sm:$0xf]
      %v3702 = vld [vmem:[#allocation3 + $0x58] sm:$0xf]
      %v3703 = vld [vmem:[#allocation3 + $0x60] sm:$0xf]
      %v3704 = vld [vmem:[#allocation3 + $0x64] sm:$0xf]
      %v3705 = vld [vmem:[#allocation3 + $0x6c] sm:$0xf]
      %v3706 = vld [vmem:[#allocation3 + $0x70] sm:$0xf]
      %v3707 = vld [vmem:[#allocation3 + $0x78] sm:$0xf]
      %v3708 = vld [vmem:[#allocation3 + $0x7c] sm:$0xf]
      %v3709 = vld [vmem:[#allocation3 + $0x84] sm:$0xf]
      %v3710 = vld [vmem:[#allocation3 + $0x88] sm:$0xf]
      %v3711 = vld [vmem:[#allocation3 + $0x90] sm:$0xf]
      %v3712 = vld [vmem:[#allocation3 + $0x94] sm:$0xf]
      %v3713 = vld [vmem:[#allocation3 + $0x9c] sm:$0xf]
      %v3714 = vld [vmem:[#allocation3 + $0xa0] sm:$0xf]
      %v3715 = vld [vmem:[#allocation3 + $0xa8] sm:$0xf]
      %v3716 = vld [vmem:[#allocation3 + $0xac] sm:$0xf]
      %v3717 = vld [vmem:[#allocation3 + $0xb4] sm:$0xf]
      %v3718 = vld [vmem:[#allocation3 + $0xb8] sm:$0xf]
      %v3719 = vld [vmem:[#allocation3 + $0x8] sm:$0x1]
      %v3720 = vld [vmem:[#allocation3 + $0x14] sm:$0x1]
      %v3721 = vld [vmem:[#allocation3 + $0x20] sm:$0x1]
      %v3722 = vld [vmem:[#allocation3 + $0x2c] sm:$0x1]
      %v3723 = vld [vmem:[#allocation3 + $0x38] sm:$0x1]
      %v3724 = vld [vmem:[#allocation3 + $0x44] sm:$0x1]
      %v3725 = vld [vmem:[#allocation3 + $0x50] sm:$0x1]
      %v3726 = vld [vmem:[#allocation3 + $0x5c] sm:$0x1]
      %v3727 = vld [vmem:[#allocation3 + $0x68] sm:$0x1]
      %v3728 = vld [vmem:[#allocation3 + $0x74] sm:$0x1]
      %v3729 = vld [vmem:[#allocation3 + $0x80] sm:$0x1]
      %v3730 = vld [vmem:[#allocation3 + $0x8c] sm:$0x1]
      %v3731 = vld [vmem:[#allocation3 + $0x98] sm:$0x1]
      %v3732 = vld [vmem:[#allocation3 + $0xa4] sm:$0x1]
      %v3733 = vld [vmem:[#allocation3 + $0xb0] sm:$0x1]
      %v3734 = vld [vmem:[#allocation3 + $0xbc] sm:$0x1]
      %v3735 = vld [vmem:[#allocation3] sm:$0xe]
      %v3736 = vld [vmem:[#allocation3 + $0xc] sm:$0xe]
      %v3737 = vld [vmem:[#allocation3 + $0x18] sm:$0xe]
      %v3738 = vld [vmem:[#allocation3 + $0x24] sm:$0xe]
      %v3739 = vld [vmem:[#allocation3 + $0x30] sm:$0xe]
      %v3740 = vld [vmem:[#allocation3 + $0x3c] sm:$0xe]
      %v3741 = vld [vmem:[#allocation3 + $0x48] sm:$0xe]
      %v3742 = vld [vmem:[#allocation3 + $0x54] sm:$0xe]
      %v3743 = vld [vmem:[#allocation3 + $0x60] sm:$0xe]
      %v3744 = vld [vmem:[#allocation3 + $0x6c] sm:$0xe]
      %v3745 = vld [vmem:[#allocation3 + $0x78] sm:$0xe]
      %v3746 = vld [vmem:[#allocation3 + $0x84] sm:$0xe]
      %v3747 = vld [vmem:[#allocation3 + $0x90] sm:$0xe]
      %v3748 = vld [vmem:[#allocation3 + $0x9c] sm:$0xe]
      %v3749 = vld [vmem:[#allocation3 + $0xa8] sm:$0xe]
      %v3750 = vld [vmem:[#allocation3 + $0xb4] sm:$0xe]
      %v3751 = vld [vmem:[%s3570] sm:$0xf]
      %v3752 = vld [vmem:[%s3570 + $0x4] sm:$0xf]
      %v3753 = vld [vmem:[%s3570 + $0xc] sm:$0xf]
      %v3754 = vld [vmem:[%s3570 + $0x10] sm:$0xf]
      %v3755 = vld [vmem:[%s3570 + $0x18] sm:$0xf]
      %v3756 = vld [vmem:[%s3570 + $0x1c] sm:$0xf]
      %v3757 = vld [vmem:[%s3570 + $0x24] sm:$0xf]
      %v3758 = vld [vmem:[%s3570 + $0x28] sm:$0xf]
      %v3759 = vld [vmem:[%s3570 + $0x30] sm:$0xf]
      %v3760 = vld [vmem:[%s3570 + $0x34] sm:$0xf]
      %v3761 = vld [vmem:[%s3570 + $0x3c] sm:$0xf]
      %v3762 = vld [vmem:[%s3570 + $0x40] sm:$0xf]
      %v3763 = vld [vmem:[%s3570 + $0x48] sm:$0xf]
      %v3764 = vld [vmem:[%s3570 + $0x4c] sm:$0xf]
      %v3765 = vld [vmem:[%s3570 + $0x54] sm:$0xf]
      %v3766 = vld [vmem:[%s3570 + $0x58] sm:$0xf]
      %v3767 = vld [vmem:[%s3570 + $0x60] sm:$0xf]
      %v3768 = vld [vmem:[%s3570 + $0x64] sm:$0xf]
      %v3769 = vld [vmem:[%s3570 + $0x6c] sm:$0xf]
      %v3770 = vld [vmem:[%s3570 + $0x70] sm:$0xf]
      %v3771 = vld [vmem:[%s3570 + $0x78] sm:$0xf]
      %v3772 = vld [vmem:[%s3570 + $0x7c] sm:$0xf]
      %v3773 = vld [vmem:[%s3570 + $0x84] sm:$0xf]
      %v3774 = vld [vmem:[%s3570 + $0x88] sm:$0xf]
      %v3775 = vld [vmem:[%s3570 + $0x90] sm:$0xf]
      %v3776 = vld [vmem:[%s3570 + $0x94] sm:$0xf]
      %v3777 = vld [vmem:[%s3570 + $0x9c] sm:$0xf]
      %v3778 = vld [vmem:[%s3570 + $0xa0] sm:$0xf]
      %v3779 = vld [vmem:[%s3570 + $0xa8] sm:$0xf]
      %v3780 = vld [vmem:[%s3570 + $0xac] sm:$0xf]
      %v3781 = vld [vmem:[%s3570 + $0xb4] sm:$0xf]
      %v3782 = vld [vmem:[%s3570 + $0xb8] sm:$0xf]
      %v3783 = vld [vmem:[%s3570 + $0x8] sm:$0x1]
      %v3784 = vld [vmem:[%s3570 + $0x14] sm:$0x1]
      %v3785 = vld [vmem:[%s3570 + $0x20] sm:$0x1]
      %v3786 = vld [vmem:[%s3570 + $0x2c] sm:$0x1]
      %v3787 = vld [vmem:[%s3570 + $0x38] sm:$0x1]
      %v3788 = vld [vmem:[%s3570 + $0x44] sm:$0x1]
      %v3789 = vld [vmem:[%s3570 + $0x50] sm:$0x1]
      %v3790 = vld [vmem:[%s3570 + $0x5c] sm:$0x1]
      %v3791 = vld [vmem:[%s3570 + $0x68] sm:$0x1]
      %v3792 = vld [vmem:[%s3570 + $0x74] sm:$0x1]
      %v3793 = vld [vmem:[%s3570 + $0x80] sm:$0x1]
      %v3794 = vld [vmem:[%s3570 + $0x8c] sm:$0x1]
      %v3795 = vld [vmem:[%s3570 + $0x98] sm:$0x1]
      %v3796 = vld [vmem:[%s3570 + $0xa4] sm:$0x1]
      %v3797 = vld [vmem:[%s3570 + $0xb0] sm:$0x1]
      %v3798 = vld [vmem:[%s3570 + $0xbc] sm:$0x1]
      %v3799 = vld [vmem:[%s3570] sm:$0xe]
      %v3800 = vld [vmem:[%s3570 + $0xc] sm:$0xe]
      %v3801 = vld [vmem:[%s3570 + $0x18] sm:$0xe]
      %v3802 = vld [vmem:[%s3570 + $0x24] sm:$0xe]
      %v3803 = vld [vmem:[%s3570 + $0x30] sm:$0xe]
      %v3804 = vld [vmem:[%s3570 + $0x3c] sm:$0xe]
      %v3805 = vld [vmem:[%s3570 + $0x48] sm:$0xe]
      %v3806 = vld [vmem:[%s3570 + $0x54] sm:$0xe]
      %v3807 = vld [vmem:[%s3570 + $0x60] sm:$0xe]
      %v3808 = vld [vmem:[%s3570 + $0x6c] sm:$0xe]
      %v3809 = vld [vmem:[%s3570 + $0x78] sm:$0xe]
      %v3810 = vld [vmem:[%s3570 + $0x84] sm:$0xe]
      %v3811 = vld [vmem:[%s3570 + $0x90] sm:$0xe]
      %v3812 = vld [vmem:[%s3570 + $0x9c] sm:$0xe]
      %v3813 = vld [vmem:[%s3570 + $0xa8] sm:$0xe]
      %v3814 = vld [vmem:[%s3570 + $0xb4] sm:$0xe]
      %s3815 = scalar_lea.vmem [#allocation3], 24
      %v3816 = vld [vmem:[%s3815] sm:$0xf]
      %v3817 = vld [vmem:[%s3815 + $0x4] sm:$0xf]
      %v3818 = vld [vmem:[%s3815 + $0xc] sm:$0xf]
      %v3819 = vld [vmem:[%s3815 + $0x10] sm:$0xf]
      %v3820 = vld [vmem:[%s3815 + $0x18] sm:$0xf]
      %v3821 = vld [vmem:[%s3815 + $0x1c] sm:$0xf]
      %v3822 = vld [vmem:[%s3815 + $0x24] sm:$0xf]
      %v3823 = vld [vmem:[%s3815 + $0x28] sm:$0xf]
      %v3824 = vld [vmem:[%s3815 + $0x30] sm:$0xf]
      %v3825 = vld [vmem:[%s3815 + $0x34] sm:$0xf]
      %v3826 = vld [vmem:[%s3815 + $0x3c] sm:$0xf]
      %v3827 = vld [vmem:[%s3815 + $0x40] sm:$0xf]
      %v3828 = vld [vmem:[%s3815 + $0x48] sm:$0xf]
      %v3829 = vld [vmem:[%s3815 + $0x4c] sm:$0xf]
      %v3830 = vld [vmem:[%s3815 + $0x54] sm:$0xf]
      %v3831 = vld [vmem:[%s3815 + $0x58] sm:$0xf]
      %v3832 = vld [vmem:[%s3815 + $0x60] sm:$0xf]
      %v3833 = vld [vmem:[%s3815 + $0x64] sm:$0xf]
      %v3834 = vld [vmem:[%s3815 + $0x6c] sm:$0xf]
      %v3835 = vld [vmem:[%s3815 + $0x70] sm:$0xf]
      %v3836 = vld [vmem:[%s3815 + $0x78] sm:$0xf]
      %v3837 = vld [vmem:[%s3815 + $0x7c] sm:$0xf]
      %v3838 = vld [vmem:[%s3815 + $0x84] sm:$0xf]
      %v3839 = vld [vmem:[%s3815 + $0x88] sm:$0xf]
      %v3840 = vld [vmem:[%s3815 + $0x90] sm:$0xf]
      %v3841 = vld [vmem:[%s3815 + $0x94] sm:$0xf]
      %v3842 = vld [vmem:[%s3815 + $0x9c] sm:$0xf]
      %v3843 = vld [vmem:[%s3815 + $0xa0] sm:$0xf]
      %v3844 = vld [vmem:[%s3815 + $0xa8] sm:$0xf]
      %v3845 = vld [vmem:[%s3815 + $0xac] sm:$0xf]
      %v3846 = vld [vmem:[%s3815 + $0xb4] sm:$0xf]
      %v3847 = vld [vmem:[%s3815 + $0xb8] sm:$0xf]
      %v3848 = vld [vmem:[%s3815 + $0x8] sm:$0x1]
      %v3849 = vld [vmem:[%s3815 + $0x14] sm:$0x1]
      %v3850 = vld [vmem:[%s3815 + $0x20] sm:$0x1]
      %v3851 = vld [vmem:[%s3815 + $0x2c] sm:$0x1]
      %v3852 = vld [vmem:[%s3815 + $0x38] sm:$0x1]
      %v3853 = vld [vmem:[%s3815 + $0x44] sm:$0x1]
      %v3854 = vld [vmem:[%s3815 + $0x50] sm:$0x1]
      %v3855 = vld [vmem:[%s3815 + $0x5c] sm:$0x1]
      %v3856 = vld [vmem:[%s3815 + $0x68] sm:$0x1]
      %v3857 = vld [vmem:[%s3815 + $0x74] sm:$0x1]
      %v3858 = vld [vmem:[%s3815 + $0x80] sm:$0x1]
      %v3859 = vld [vmem:[%s3815 + $0x8c] sm:$0x1]
      %v3860 = vld [vmem:[%s3815 + $0x98] sm:$0x1]
      %v3861 = vld [vmem:[%s3815 + $0xa4] sm:$0x1]
      %v3862 = vld [vmem:[%s3815 + $0xb0] sm:$0x1]
      %v3863 = vld [vmem:[%s3815 + $0xbc] sm:$0x1]
      %v3864 = vld [vmem:[%s3815] sm:$0xe]
      %v3865 = vld [vmem:[%s3815 + $0xc] sm:$0xe]
      %v3866 = vld [vmem:[%s3815 + $0x18] sm:$0xe]
      %v3867 = vld [vmem:[%s3815 + $0x24] sm:$0xe]
      %v3868 = vld [vmem:[%s3815 + $0x30] sm:$0xe]
      %v3869 = vld [vmem:[%s3815 + $0x3c] sm:$0xe]
      %v3870 = vld [vmem:[%s3815 + $0x48] sm:$0xe]
      %v3871 = vld [vmem:[%s3815 + $0x54] sm:$0xe]
      %v3872 = vld [vmem:[%s3815 + $0x60] sm:$0xe]
      %v3873 = vld [vmem:[%s3815 + $0x6c] sm:$0xe]
      %v3874 = vld [vmem:[%s3815 + $0x78] sm:$0xe]
      %v3875 = vld [vmem:[%s3815 + $0x84] sm:$0xe]
      %v3876 = vld [vmem:[%s3815 + $0x90] sm:$0xe]
      %v3877 = vld [vmem:[%s3815 + $0x9c] sm:$0xe]
      %v3878 = vld [vmem:[%s3815 + $0xa8] sm:$0xe]
      %v3879 = vld [vmem:[%s3815 + $0xb4] sm:$0xe]
      %v3912 = vunpack.c.l.b16 %v3687
      %v3913 = vunpack.c.l.b16 %v3688
      %v3914 = vunpack.c.l.b16 %v3689
      %v3915 = vunpack.c.l.b16 %v3690
      %v3916 = vunpack.c.l.b16 %v3691
      %v3917 = vunpack.c.l.b16 %v3692
      %v3918 = vunpack.c.l.b16 %v3693
      %v3919 = vunpack.c.l.b16 %v3694
      %v3920 = vunpack.c.l.b16 %v3695
      %v3921 = vunpack.c.l.b16 %v3696
      %v3922 = vunpack.c.l.b16 %v3697
      %v3923 = vunpack.c.l.b16 %v3698
      %v3924 = vunpack.c.l.b16 %v3699
      %v3925 = vunpack.c.l.b16 %v3700
      %v3926 = vunpack.c.l.b16 %v3701
      %v3927 = vunpack.c.l.b16 %v3702
      %v3928 = vunpack.c.l.b16 %v3703
      %v3929 = vunpack.c.l.b16 %v3704
      %v3930 = vunpack.c.l.b16 %v3705
      %v3931 = vunpack.c.l.b16 %v3706
      %v3932 = vunpack.c.l.b16 %v3707
      %v3933 = vunpack.c.l.b16 %v3708
      %v3934 = vunpack.c.l.b16 %v3709
      %v3935 = vunpack.c.l.b16 %v3710
      %v3936 = vunpack.c.l.b16 %v3711
      %v3937 = vunpack.c.l.b16 %v3712
      %v3938 = vunpack.c.l.b16 %v3713
      %v3939 = vunpack.c.l.b16 %v3714
      %v3940 = vunpack.c.l.b16 %v3715
      %v3941 = vunpack.c.l.b16 %v3716
      %v3942 = vunpack.c.l.b16 %v3717
      %v3943 = vunpack.c.l.b16 %v3718
      %v3944 = vpack.c.b16 %v3913, %v3912
      %v3945 = vpack.c.b16 %v3915, %v3914
      %v3946 = vpack.c.b16 %v3917, %v3916
      %v3947 = vpack.c.b16 %v3919, %v3918
      %v3948 = vpack.c.b16 %v3921, %v3920
      %v3949 = vpack.c.b16 %v3923, %v3922
      %v3950 = vpack.c.b16 %v3925, %v3924
      %v3951 = vpack.c.b16 %v3927, %v3926
      %v3952 = vpack.c.b16 %v3929, %v3928
      %v3953 = vpack.c.b16 %v3931, %v3930
      %v3954 = vpack.c.b16 %v3933, %v3932
      %v3955 = vpack.c.b16 %v3935, %v3934
      %v3956 = vpack.c.b16 %v3937, %v3936
      %v3957 = vpack.c.b16 %v3939, %v3938
      %v3958 = vpack.c.b16 %v3941, %v3940
      %v3959 = vpack.c.b16 %v3943, %v3942
      %v3992 = vunpack.c.l.b16 %v3719
      %v3993 = vunpack.c.l.b16 %v3720
      %v3994 = vunpack.c.l.b16 %v3721
      %v3995 = vunpack.c.l.b16 %v3722
      %v3996 = vunpack.c.l.b16 %v3723
      %v3997 = vunpack.c.l.b16 %v3724
      %v3998 = vunpack.c.l.b16 %v3725
      %v3999 = vunpack.c.l.b16 %v3726
      %v4000 = vunpack.c.l.b16 %v3727
      %v4001 = vunpack.c.l.b16 %v3728
      %v4002 = vunpack.c.l.b16 %v3729
      %v4003 = vunpack.c.l.b16 %v3730
      %v4004 = vunpack.c.l.b16 %v3731
      %v4005 = vunpack.c.l.b16 %v3732
      %v4006 = vunpack.c.l.b16 %v3733
      %v4007 = vunpack.c.l.b16 %v3734
      %v4008 = vpack.c.b16 %v3992, %v3992
      %v4009 = vpack.c.b16 %v3993, %v3993
      %v4010 = vpack.c.b16 %v3994, %v3994
      %v4011 = vpack.c.b16 %v3995, %v3995
      %v4012 = vpack.c.b16 %v3996, %v3996
      %v4013 = vpack.c.b16 %v3997, %v3997
      %v4014 = vpack.c.b16 %v3998, %v3998
      %v4015 = vpack.c.b16 %v3999, %v3999
      %v4016 = vpack.c.b16 %v4000, %v4000
      %v4017 = vpack.c.b16 %v4001, %v4001
      %v4018 = vpack.c.b16 %v4002, %v4002
      %v4019 = vpack.c.b16 %v4003, %v4003
      %v4020 = vpack.c.b16 %v4004, %v4004
      %v4021 = vpack.c.b16 %v4005, %v4005
      %v4022 = vpack.c.b16 %v4006, %v4006
      %v4023 = vpack.c.b16 %v4007, %v4007
      %v4025 = vshrl.u32 %v3944, 16
      %v4027 = vshll.u32 %v3944, 16
      %v4029 = vrot.slane %v4027, 1
      %v4030 = vor.u32 %v4025, %v4029
      %v4032 = vshll.u32 %v4008, 16
      %v4034 = vrot.slane %v4032, 1
      %v4035 = vsel %vm1130, %v4030, %v4034
      %v4037 = vshrl.u32 %v3945, 16
      %v4039 = vshll.u32 %v3945, 16
      %v4041 = vrot.slane %v4039, 1
      %v4042 = vor.u32 %v4037, %v4041
      %v4044 = vshll.u32 %v4009, 16
      %v4046 = vrot.slane %v4044, 1
      %v4047 = vsel %vm1130, %v4042, %v4046
      %v4049 = vshrl.u32 %v3946, 16
      %v4051 = vshll.u32 %v3946, 16
      %v4053 = vrot.slane %v4051, 1
      %v4054 = vor.u32 %v4049, %v4053
      %v4056 = vshll.u32 %v4010, 16
      %v4058 = vrot.slane %v4056, 1
      %v4059 = vsel %vm1130, %v4054, %v4058
      %v4061 = vshrl.u32 %v3947, 16
      %v4063 = vshll.u32 %v3947, 16
      %v4065 = vrot.slane %v4063, 1
      %v4066 = vor.u32 %v4061, %v4065
      %v4068 = vshll.u32 %v4011, 16
      %v4070 = vrot.slane %v4068, 1
      %v4071 = vsel %vm1130, %v4066, %v4070
      %v4073 = vshrl.u32 %v3948, 16
      %v4075 = vshll.u32 %v3948, 16
      %v4077 = vrot.slane %v4075, 1
      %v4078 = vor.u32 %v4073, %v4077
      %v4080 = vshll.u32 %v4012, 16
      %v4082 = vrot.slane %v4080, 1
      %v4083 = vsel %vm1130, %v4078, %v4082
      %v4085 = vshrl.u32 %v3949, 16
      %v4087 = vshll.u32 %v3949, 16
      %v4089 = vrot.slane %v4087, 1
      %v4090 = vor.u32 %v4085, %v4089
      %v4092 = vshll.u32 %v4013, 16
      %v4094 = vrot.slane %v4092, 1
      %v4095 = vsel %vm1130, %v4090, %v4094
      %v4097 = vshrl.u32 %v3950, 16
      %v4099 = vshll.u32 %v3950, 16
      %v4101 = vrot.slane %v4099, 1
      %v4102 = vor.u32 %v4097, %v4101
      %v4104 = vshll.u32 %v4014, 16
      %v4106 = vrot.slane %v4104, 1
      %v4107 = vsel %vm1130, %v4102, %v4106
      %v4109 = vshrl.u32 %v3951, 16
      %v4111 = vshll.u32 %v3951, 16
      %v4113 = vrot.slane %v4111, 1
      %v4114 = vor.u32 %v4109, %v4113
      %v4116 = vshll.u32 %v4015, 16
      %v4118 = vrot.slane %v4116, 1
      %v4119 = vsel %vm1130, %v4114, %v4118
      %v4121 = vshrl.u32 %v3952, 16
      %v4123 = vshll.u32 %v3952, 16
      %v4125 = vrot.slane %v4123, 1
      %v4126 = vor.u32 %v4121, %v4125
      %v4128 = vshll.u32 %v4016, 16
      %v4130 = vrot.slane %v4128, 1
      %v4131 = vsel %vm1130, %v4126, %v4130
      %v4133 = vshrl.u32 %v3953, 16
      %v4135 = vshll.u32 %v3953, 16
      %v4137 = vrot.slane %v4135, 1
      %v4138 = vor.u32 %v4133, %v4137
      %v4140 = vshll.u32 %v4017, 16
      %v4142 = vrot.slane %v4140, 1
      %v4143 = vsel %vm1130, %v4138, %v4142
      %v4145 = vshrl.u32 %v3954, 16
      %v4147 = vshll.u32 %v3954, 16
      %v4149 = vrot.slane %v4147, 1
      %v4150 = vor.u32 %v4145, %v4149
      %v4152 = vshll.u32 %v4018, 16
      %v4154 = vrot.slane %v4152, 1
      %v4155 = vsel %vm1130, %v4150, %v4154
      %v4157 = vshrl.u32 %v3955, 16
      %v4159 = vshll.u32 %v3955, 16
      %v4161 = vrot.slane %v4159, 1
      %v4162 = vor.u32 %v4157, %v4161
      %v4164 = vshll.u32 %v4019, 16
      %v4166 = vrot.slane %v4164, 1
      %v4167 = vsel %vm1130, %v4162, %v4166
      %v4169 = vshrl.u32 %v3956, 16
      %v4171 = vshll.u32 %v3956, 16
      %v4173 = vrot.slane %v4171, 1
      %v4174 = vor.u32 %v4169, %v4173
      %v4176 = vshll.u32 %v4020, 16
      %v4178 = vrot.slane %v4176, 1
      %v4179 = vsel %vm1130, %v4174, %v4178
      %v4181 = vshrl.u32 %v3957, 16
      %v4183 = vshll.u32 %v3957, 16
      %v4185 = vrot.slane %v4183, 1
      %v4186 = vor.u32 %v4181, %v4185
      %v4188 = vshll.u32 %v4021, 16
      %v4190 = vrot.slane %v4188, 1
      %v4191 = vsel %vm1130, %v4186, %v4190
      %v4193 = vshrl.u32 %v3958, 16
      %v4195 = vshll.u32 %v3958, 16
      %v4197 = vrot.slane %v4195, 1
      %v4198 = vor.u32 %v4193, %v4197
      %v4200 = vshll.u32 %v4022, 16
      %v4202 = vrot.slane %v4200, 1
      %v4203 = vsel %vm1130, %v4198, %v4202
      %v4205 = vshrl.u32 %v3959, 16
      %v4207 = vshll.u32 %v3959, 16
      %v4209 = vrot.slane %v4207, 1
      %v4210 = vor.u32 %v4205, %v4209
      %v4212 = vshll.u32 %v4023, 16
      %v4214 = vrot.slane %v4212, 1
      %v4215 = vsel %vm1130, %v4210, %v4214
      %v4248 = vunpack.c.l.b16 %v3735
      %v4249 = vunpack.c.l.b16 %v3736
      %v4250 = vunpack.c.l.b16 %v3737
      %v4251 = vunpack.c.l.b16 %v3738
      %v4252 = vunpack.c.l.b16 %v3739
      %v4253 = vunpack.c.l.b16 %v3740
      %v4254 = vunpack.c.l.b16 %v3741
      %v4255 = vunpack.c.l.b16 %v3742
      %v4256 = vunpack.c.l.b16 %v3743
      %v4257 = vunpack.c.l.b16 %v3744
      %v4258 = vunpack.c.l.b16 %v3745
      %v4259 = vunpack.c.l.b16 %v3746
      %v4260 = vunpack.c.l.b16 %v3747
      %v4261 = vunpack.c.l.b16 %v3748
      %v4262 = vunpack.c.l.b16 %v3749
      %v4263 = vunpack.c.l.b16 %v3750
      %v4264 = vpack.c.b16 %v3913, %v4248
      %v4265 = vpack.c.b16 %v3915, %v4249
      %v4266 = vpack.c.b16 %v3917, %v4250
      %v4267 = vpack.c.b16 %v3919, %v4251
      %v4268 = vpack.c.b16 %v3921, %v4252
      %v4269 = vpack.c.b16 %v3923, %v4253
      %v4270 = vpack.c.b16 %v3925, %v4254
      %v4271 = vpack.c.b16 %v3927, %v4255
      %v4272 = vpack.c.b16 %v3929, %v4256
      %v4273 = vpack.c.b16 %v3931, %v4257
      %v4274 = vpack.c.b16 %v3933, %v4258
      %v4275 = vpack.c.b16 %v3935, %v4259
      %v4276 = vpack.c.b16 %v3937, %v4260
      %v4277 = vpack.c.b16 %v3939, %v4261
      %v4278 = vpack.c.b16 %v3941, %v4262
      %v4279 = vpack.c.b16 %v3943, %v4263
      %v4280 = vrot.slane %v4264, 1
      %v4281 = vrot.slane %v4008, 1
      %v4282 = vsel %vm1403, %v4280, %v4281
      %v4283 = vrot.slane %v4265, 1
      %v4284 = vrot.slane %v4009, 1
      %v4285 = vsel %vm1403, %v4283, %v4284
      %v4286 = vrot.slane %v4266, 1
      %v4287 = vrot.slane %v4010, 1
      %v4288 = vsel %vm1403, %v4286, %v4287
      %v4289 = vrot.slane %v4267, 1
      %v4290 = vrot.slane %v4011, 1
      %v4291 = vsel %vm1403, %v4289, %v4290
      %v4292 = vrot.slane %v4268, 1
      %v4293 = vrot.slane %v4012, 1
      %v4294 = vsel %vm1403, %v4292, %v4293
      %v4295 = vrot.slane %v4269, 1
      %v4296 = vrot.slane %v4013, 1
      %v4297 = vsel %vm1403, %v4295, %v4296
      %v4298 = vrot.slane %v4270, 1
      %v4299 = vrot.slane %v4014, 1
      %v4300 = vsel %vm1403, %v4298, %v4299
      %v4301 = vrot.slane %v4271, 1
      %v4302 = vrot.slane %v4015, 1
      %v4303 = vsel %vm1403, %v4301, %v4302
      %v4304 = vrot.slane %v4272, 1
      %v4305 = vrot.slane %v4016, 1
      %v4306 = vsel %vm1403, %v4304, %v4305
      %v4307 = vrot.slane %v4273, 1
      %v4308 = vrot.slane %v4017, 1
      %v4309 = vsel %vm1403, %v4307, %v4308
      %v4310 = vrot.slane %v4274, 1
      %v4311 = vrot.slane %v4018, 1
      %v4312 = vsel %vm1403, %v4310, %v4311
      %v4313 = vrot.slane %v4275, 1
      %v4314 = vrot.slane %v4019, 1
      %v4315 = vsel %vm1403, %v4313, %v4314
      %v4316 = vrot.slane %v4276, 1
      %v4317 = vrot.slane %v4020, 1
      %v4318 = vsel %vm1403, %v4316, %v4317
      %v4319 = vrot.slane %v4277, 1
      %v4320 = vrot.slane %v4021, 1
      %v4321 = vsel %vm1403, %v4319, %v4320
      %v4322 = vrot.slane %v4278, 1
      %v4323 = vrot.slane %v4022, 1
      %v4324 = vsel %vm1403, %v4322, %v4323
      %v4325 = vrot.slane %v4279, 1
      %v4326 = vrot.slane %v4023, 1
      %v4327 = vsel %vm1403, %v4325, %v4326
      %v4376 = vunpack.c.l.b16 %v3751
      %v4377 = vunpack.c.l.b16 %v3752
      %v4378 = vunpack.c.l.b16 %v3753
      %v4379 = vunpack.c.l.b16 %v3754
      %v4380 = vunpack.c.l.b16 %v3755
      %v4381 = vunpack.c.l.b16 %v3756
      %v4382 = vunpack.c.l.b16 %v3757
      %v4383 = vunpack.c.l.b16 %v3758
      %v4384 = vunpack.c.l.b16 %v3759
      %v4385 = vunpack.c.l.b16 %v3760
      %v4386 = vunpack.c.l.b16 %v3761
      %v4387 = vunpack.c.l.b16 %v3762
      %v4388 = vunpack.c.l.b16 %v3763
      %v4389 = vunpack.c.l.b16 %v3764
      %v4390 = vunpack.c.l.b16 %v3765
      %v4391 = vunpack.c.l.b16 %v3766
      %v4392 = vunpack.c.l.b16 %v3767
      %v4393 = vunpack.c.l.b16 %v3768
      %v4394 = vunpack.c.l.b16 %v3769
      %v4395 = vunpack.c.l.b16 %v3770
      %v4396 = vunpack.c.l.b16 %v3771
      %v4397 = vunpack.c.l.b16 %v3772
      %v4398 = vunpack.c.l.b16 %v3773
      %v4399 = vunpack.c.l.b16 %v3774
      %v4400 = vunpack.c.l.b16 %v3775
      %v4401 = vunpack.c.l.b16 %v3776
      %v4402 = vunpack.c.l.b16 %v3777
      %v4403 = vunpack.c.l.b16 %v3778
      %v4404 = vunpack.c.l.b16 %v3779
      %v4405 = vunpack.c.l.b16 %v3780
      %v4406 = vunpack.c.l.b16 %v3781
      %v4407 = vunpack.c.l.b16 %v3782
      %v4408 = vpack.c.b16 %v4377, %v4376
      %v4409 = vpack.c.b16 %v4379, %v4378
      %v4410 = vpack.c.b16 %v4381, %v4380
      %v4411 = vpack.c.b16 %v4383, %v4382
      %v4412 = vpack.c.b16 %v4385, %v4384
      %v4413 = vpack.c.b16 %v4387, %v4386
      %v4414 = vpack.c.b16 %v4389, %v4388
      %v4415 = vpack.c.b16 %v4391, %v4390
      %v4416 = vpack.c.b16 %v4393, %v4392
      %v4417 = vpack.c.b16 %v4395, %v4394
      %v4418 = vpack.c.b16 %v4397, %v4396
      %v4419 = vpack.c.b16 %v4399, %v4398
      %v4420 = vpack.c.b16 %v4401, %v4400
      %v4421 = vpack.c.b16 %v4403, %v4402
      %v4422 = vpack.c.b16 %v4405, %v4404
      %v4423 = vpack.c.b16 %v4407, %v4406
      %v4456 = vunpack.c.l.b16 %v3783
      %v4457 = vunpack.c.l.b16 %v3784
      %v4458 = vunpack.c.l.b16 %v3785
      %v4459 = vunpack.c.l.b16 %v3786
      %v4460 = vunpack.c.l.b16 %v3787
      %v4461 = vunpack.c.l.b16 %v3788
      %v4462 = vunpack.c.l.b16 %v3789
      %v4463 = vunpack.c.l.b16 %v3790
      %v4464 = vunpack.c.l.b16 %v3791
      %v4465 = vunpack.c.l.b16 %v3792
      %v4466 = vunpack.c.l.b16 %v3793
      %v4467 = vunpack.c.l.b16 %v3794
      %v4468 = vunpack.c.l.b16 %v3795
      %v4469 = vunpack.c.l.b16 %v3796
      %v4470 = vunpack.c.l.b16 %v3797
      %v4471 = vunpack.c.l.b16 %v3798
      %v4472 = vpack.c.b16 %v4456, %v4456
      %v4473 = vpack.c.b16 %v4457, %v4457
      %v4474 = vpack.c.b16 %v4458, %v4458
      %v4475 = vpack.c.b16 %v4459, %v4459
      %v4476 = vpack.c.b16 %v4460, %v4460
      %v4477 = vpack.c.b16 %v4461, %v4461
      %v4478 = vpack.c.b16 %v4462, %v4462
      %v4479 = vpack.c.b16 %v4463, %v4463
      %v4480 = vpack.c.b16 %v4464, %v4464
      %v4481 = vpack.c.b16 %v4465, %v4465
      %v4482 = vpack.c.b16 %v4466, %v4466
      %v4483 = vpack.c.b16 %v4467, %v4467
      %v4484 = vpack.c.b16 %v4468, %v4468
      %v4485 = vpack.c.b16 %v4469, %v4469
      %v4486 = vpack.c.b16 %v4470, %v4470
      %v4487 = vpack.c.b16 %v4471, %v4471
      %v4489 = vshrl.u32 %v4408, 16
      %v4491 = vshll.u32 %v4408, 16
      %v4493 = vrot.slane %v4491, 1
      %v4494 = vor.u32 %v4489, %v4493
      %v4496 = vshll.u32 %v4472, 16
      %v4498 = vrot.slane %v4496, 1
      %v4499 = vsel %vm1130, %v4494, %v4498
      %v4501 = vshrl.u32 %v4409, 16
      %v4503 = vshll.u32 %v4409, 16
      %v4505 = vrot.slane %v4503, 1
      %v4506 = vor.u32 %v4501, %v4505
      %v4508 = vshll.u32 %v4473, 16
      %v4510 = vrot.slane %v4508, 1
      %v4511 = vsel %vm1130, %v4506, %v4510
      %v4513 = vshrl.u32 %v4410, 16
      %v4515 = vshll.u32 %v4410, 16
      %v4517 = vrot.slane %v4515, 1
      %v4518 = vor.u32 %v4513, %v4517
      %v4520 = vshll.u32 %v4474, 16
      %v4522 = vrot.slane %v4520, 1
      %v4523 = vsel %vm1130, %v4518, %v4522
      %v4525 = vshrl.u32 %v4411, 16
      %v4527 = vshll.u32 %v4411, 16
      %v4529 = vrot.slane %v4527, 1
      %v4530 = vor.u32 %v4525, %v4529
      %v4532 = vshll.u32 %v4475, 16
      %v4534 = vrot.slane %v4532, 1
      %v4535 = vsel %vm1130, %v4530, %v4534
      %v4537 = vshrl.u32 %v4412, 16
      %v4539 = vshll.u32 %v4412, 16
      %v4541 = vrot.slane %v4539, 1
      %v4542 = vor.u32 %v4537, %v4541
      %v4544 = vshll.u32 %v4476, 16
      %v4546 = vrot.slane %v4544, 1
      %v4547 = vsel %vm1130, %v4542, %v4546
      %v4549 = vshrl.u32 %v4413, 16
      %v4551 = vshll.u32 %v4413, 16
      %v4553 = vrot.slane %v4551, 1
      %v4554 = vor.u32 %v4549, %v4553
      %v4556 = vshll.u32 %v4477, 16
      %v4558 = vrot.slane %v4556, 1
      %v4559 = vsel %vm1130, %v4554, %v4558
      %v4561 = vshrl.u32 %v4414, 16
      %v4563 = vshll.u32 %v4414, 16
      %v4565 = vrot.slane %v4563, 1
      %v4566 = vor.u32 %v4561, %v4565
      %v4568 = vshll.u32 %v4478, 16
      %v4570 = vrot.slane %v4568, 1
      %v4571 = vsel %vm1130, %v4566, %v4570
      %v4573 = vshrl.u32 %v4415, 16
      %v4575 = vshll.u32 %v4415, 16
      %v4577 = vrot.slane %v4575, 1
      %v4578 = vor.u32 %v4573, %v4577
      %v4580 = vshll.u32 %v4479, 16
      %v4582 = vrot.slane %v4580, 1
      %v4583 = vsel %vm1130, %v4578, %v4582
      %v4585 = vshrl.u32 %v4416, 16
      %v4587 = vshll.u32 %v4416, 16
      %v4589 = vrot.slane %v4587, 1
      %v4590 = vor.u32 %v4585, %v4589
      %v4592 = vshll.u32 %v4480, 16
      %v4594 = vrot.slane %v4592, 1
      %v4595 = vsel %vm1130, %v4590, %v4594
      %v4597 = vshrl.u32 %v4417, 16
      %v4599 = vshll.u32 %v4417, 16
      %v4601 = vrot.slane %v4599, 1
      %v4602 = vor.u32 %v4597, %v4601
      %v4604 = vshll.u32 %v4481, 16
      %v4606 = vrot.slane %v4604, 1
      %v4607 = vsel %vm1130, %v4602, %v4606
      %v4609 = vshrl.u32 %v4418, 16
      %v4611 = vshll.u32 %v4418, 16
      %v4613 = vrot.slane %v4611, 1
      %v4614 = vor.u32 %v4609, %v4613
      %v4616 = vshll.u32 %v4482, 16
      %v4618 = vrot.slane %v4616, 1
      %v4619 = vsel %vm1130, %v4614, %v4618
      %v4621 = vshrl.u32 %v4419, 16
      %v4623 = vshll.u32 %v4419, 16
      %v4625 = vrot.slane %v4623, 1
      %v4626 = vor.u32 %v4621, %v4625
      %v4628 = vshll.u32 %v4483, 16
      %v4630 = vrot.slane %v4628, 1
      %v4631 = vsel %vm1130, %v4626, %v4630
      %v4633 = vshrl.u32 %v4420, 16
      %v4635 = vshll.u32 %v4420, 16
      %v4637 = vrot.slane %v4635, 1
      %v4638 = vor.u32 %v4633, %v4637
      %v4640 = vshll.u32 %v4484, 16
      %v4642 = vrot.slane %v4640, 1
      %v4643 = vsel %vm1130, %v4638, %v4642
      %v4645 = vshrl.u32 %v4421, 16
      %v4647 = vshll.u32 %v4421, 16
      %v4649 = vrot.slane %v4647, 1
      %v4650 = vor.u32 %v4645, %v4649
      %v4652 = vshll.u32 %v4485, 16
      %v4654 = vrot.slane %v4652, 1
      %v4655 = vsel %vm1130, %v4650, %v4654
      %v4657 = vshrl.u32 %v4422, 16
      %v4659 = vshll.u32 %v4422, 16
      %v4661 = vrot.slane %v4659, 1
      %v4662 = vor.u32 %v4657, %v4661
      %v4664 = vshll.u32 %v4486, 16
      %v4666 = vrot.slane %v4664, 1
      %v4667 = vsel %vm1130, %v4662, %v4666
      %v4669 = vshrl.u32 %v4423, 16
      %v4671 = vshll.u32 %v4423, 16
      %v4673 = vrot.slane %v4671, 1
      %v4674 = vor.u32 %v4669, %v4673
      %v4676 = vshll.u32 %v4487, 16
      %v4678 = vrot.slane %v4676, 1
      %v4679 = vsel %vm1130, %v4674, %v4678
      %v4712 = vunpack.c.l.b16 %v3799
      %v4713 = vunpack.c.l.b16 %v3800
      %v4714 = vunpack.c.l.b16 %v3801
      %v4715 = vunpack.c.l.b16 %v3802
      %v4716 = vunpack.c.l.b16 %v3803
      %v4717 = vunpack.c.l.b16 %v3804
      %v4718 = vunpack.c.l.b16 %v3805
      %v4719 = vunpack.c.l.b16 %v3806
      %v4720 = vunpack.c.l.b16 %v3807
      %v4721 = vunpack.c.l.b16 %v3808
      %v4722 = vunpack.c.l.b16 %v3809
      %v4723 = vunpack.c.l.b16 %v3810
      %v4724 = vunpack.c.l.b16 %v3811
      %v4725 = vunpack.c.l.b16 %v3812
      %v4726 = vunpack.c.l.b16 %v3813
      %v4727 = vunpack.c.l.b16 %v3814
      %v4728 = vpack.c.b16 %v4377, %v4712
      %v4729 = vpack.c.b16 %v4379, %v4713
      %v4730 = vpack.c.b16 %v4381, %v4714
      %v4731 = vpack.c.b16 %v4383, %v4715
      %v4732 = vpack.c.b16 %v4385, %v4716
      %v4733 = vpack.c.b16 %v4387, %v4717
      %v4734 = vpack.c.b16 %v4389, %v4718
      %v4735 = vpack.c.b16 %v4391, %v4719
      %v4736 = vpack.c.b16 %v4393, %v4720
      %v4737 = vpack.c.b16 %v4395, %v4721
      %v4738 = vpack.c.b16 %v4397, %v4722
      %v4739 = vpack.c.b16 %v4399, %v4723
      %v4740 = vpack.c.b16 %v4401, %v4724
      %v4741 = vpack.c.b16 %v4403, %v4725
      %v4742 = vpack.c.b16 %v4405, %v4726
      %v4743 = vpack.c.b16 %v4407, %v4727
      %v4744 = vrot.slane %v4728, 1
      %v4745 = vrot.slane %v4472, 1
      %v4746 = vsel %vm1403, %v4744, %v4745
      %v4747 = vrot.slane %v4729, 1
      %v4748 = vrot.slane %v4473, 1
      %v4749 = vsel %vm1403, %v4747, %v4748
      %v4750 = vrot.slane %v4730, 1
      %v4751 = vrot.slane %v4474, 1
      %v4752 = vsel %vm1403, %v4750, %v4751
      %v4753 = vrot.slane %v4731, 1
      %v4754 = vrot.slane %v4475, 1
      %v4755 = vsel %vm1403, %v4753, %v4754
      %v4756 = vrot.slane %v4732, 1
      %v4757 = vrot.slane %v4476, 1
      %v4758 = vsel %vm1403, %v4756, %v4757
      %v4759 = vrot.slane %v4733, 1
      %v4760 = vrot.slane %v4477, 1
      %v4761 = vsel %vm1403, %v4759, %v4760
      %v4762 = vrot.slane %v4734, 1
      %v4763 = vrot.slane %v4478, 1
      %v4764 = vsel %vm1403, %v4762, %v4763
      %v4765 = vrot.slane %v4735, 1
      %v4766 = vrot.slane %v4479, 1
      %v4767 = vsel %vm1403, %v4765, %v4766
      %v4768 = vrot.slane %v4736, 1
      %v4769 = vrot.slane %v4480, 1
      %v4770 = vsel %vm1403, %v4768, %v4769
      %v4771 = vrot.slane %v4737, 1
      %v4772 = vrot.slane %v4481, 1
      %v4773 = vsel %vm1403, %v4771, %v4772
      %v4774 = vrot.slane %v4738, 1
      %v4775 = vrot.slane %v4482, 1
      %v4776 = vsel %vm1403, %v4774, %v4775
      %v4777 = vrot.slane %v4739, 1
      %v4778 = vrot.slane %v4483, 1
      %v4779 = vsel %vm1403, %v4777, %v4778
      %v4780 = vrot.slane %v4740, 1
      %v4781 = vrot.slane %v4484, 1
      %v4782 = vsel %vm1403, %v4780, %v4781
      %v4783 = vrot.slane %v4741, 1
      %v4784 = vrot.slane %v4485, 1
      %v4785 = vsel %vm1403, %v4783, %v4784
      %v4786 = vrot.slane %v4742, 1
      %v4787 = vrot.slane %v4486, 1
      %v4788 = vsel %vm1403, %v4786, %v4787
      %v4789 = vrot.slane %v4743, 1
      %v4790 = vrot.slane %v4487, 1
      %v4791 = vsel %vm1403, %v4789, %v4790
      %v4840 = vunpack.c.l.b16 %v3816
      %v4841 = vunpack.c.l.b16 %v3817
      %v4842 = vunpack.c.l.b16 %v3818
      %v4843 = vunpack.c.l.b16 %v3819
      %v4844 = vunpack.c.l.b16 %v3820
      %v4845 = vunpack.c.l.b16 %v3821
      %v4846 = vunpack.c.l.b16 %v3822
      %v4847 = vunpack.c.l.b16 %v3823
      %v4848 = vunpack.c.l.b16 %v3824
      %v4849 = vunpack.c.l.b16 %v3825
      %v4850 = vunpack.c.l.b16 %v3826
      %v4851 = vunpack.c.l.b16 %v3827
      %v4852 = vunpack.c.l.b16 %v3828
      %v4853 = vunpack.c.l.b16 %v3829
      %v4854 = vunpack.c.l.b16 %v3830
      %v4855 = vunpack.c.l.b16 %v3831
      %v4856 = vunpack.c.l.b16 %v3832
      %v4857 = vunpack.c.l.b16 %v3833
      %v4858 = vunpack.c.l.b16 %v3834
      %v4859 = vunpack.c.l.b16 %v3835
      %v4860 = vunpack.c.l.b16 %v3836
      %v4861 = vunpack.c.l.b16 %v3837
      %v4862 = vunpack.c.l.b16 %v3838
      %v4863 = vunpack.c.l.b16 %v3839
      %v4864 = vunpack.c.l.b16 %v3840
      %v4865 = vunpack.c.l.b16 %v3841
      %v4866 = vunpack.c.l.b16 %v3842
      %v4867 = vunpack.c.l.b16 %v3843
      %v4868 = vunpack.c.l.b16 %v3844
      %v4869 = vunpack.c.l.b16 %v3845
      %v4870 = vunpack.c.l.b16 %v3846
      %v4871 = vunpack.c.l.b16 %v3847
      %v4872 = vpack.c.b16 %v4841, %v4840
      %v4873 = vpack.c.b16 %v4843, %v4842
      %v4874 = vpack.c.b16 %v4845, %v4844
      %v4875 = vpack.c.b16 %v4847, %v4846
      %v4876 = vpack.c.b16 %v4849, %v4848
      %v4877 = vpack.c.b16 %v4851, %v4850
      %v4878 = vpack.c.b16 %v4853, %v4852
      %v4879 = vpack.c.b16 %v4855, %v4854
      %v4880 = vpack.c.b16 %v4857, %v4856
      %v4881 = vpack.c.b16 %v4859, %v4858
      %v4882 = vpack.c.b16 %v4861, %v4860
      %v4883 = vpack.c.b16 %v4863, %v4862
      %v4884 = vpack.c.b16 %v4865, %v4864
      %v4885 = vpack.c.b16 %v4867, %v4866
      %v4886 = vpack.c.b16 %v4869, %v4868
      %v4887 = vpack.c.b16 %v4871, %v4870
      %v4920 = vunpack.c.l.b16 %v3848
      %v4921 = vunpack.c.l.b16 %v3849
      %v4922 = vunpack.c.l.b16 %v3850
      %v4923 = vunpack.c.l.b16 %v3851
      %v4924 = vunpack.c.l.b16 %v3852
      %v4925 = vunpack.c.l.b16 %v3853
      %v4926 = vunpack.c.l.b16 %v3854
      %v4927 = vunpack.c.l.b16 %v3855
      %v4928 = vunpack.c.l.b16 %v3856
      %v4929 = vunpack.c.l.b16 %v3857
      %v4930 = vunpack.c.l.b16 %v3858
      %v4931 = vunpack.c.l.b16 %v3859
      %v4932 = vunpack.c.l.b16 %v3860
      %v4933 = vunpack.c.l.b16 %v3861
      %v4934 = vunpack.c.l.b16 %v3862
      %v4935 = vunpack.c.l.b16 %v3863
      %v4936 = vpack.c.b16 %v4920, %v4920
      %v4937 = vpack.c.b16 %v4921, %v4921
      %v4938 = vpack.c.b16 %v4922, %v4922
      %v4939 = vpack.c.b16 %v4923, %v4923
      %v4940 = vpack.c.b16 %v4924, %v4924
      %v4941 = vpack.c.b16 %v4925, %v4925
      %v4942 = vpack.c.b16 %v4926, %v4926
      %v4943 = vpack.c.b16 %v4927, %v4927
      %v4944 = vpack.c.b16 %v4928, %v4928
      %v4945 = vpack.c.b16 %v4929, %v4929
      %v4946 = vpack.c.b16 %v4930, %v4930
      %v4947 = vpack.c.b16 %v4931, %v4931
      %v4948 = vpack.c.b16 %v4932, %v4932
      %v4949 = vpack.c.b16 %v4933, %v4933
      %v4950 = vpack.c.b16 %v4934, %v4934
      %v4951 = vpack.c.b16 %v4935, %v4935
      %v4953 = vshrl.u32 %v4872, 16
      %v4955 = vshll.u32 %v4872, 16
      %v4957 = vrot.slane %v4955, 1
      %v4958 = vor.u32 %v4953, %v4957
      %v4960 = vshll.u32 %v4936, 16
      %v4962 = vrot.slane %v4960, 1
      %v4963 = vsel %vm1130, %v4958, %v4962
      %v4965 = vshrl.u32 %v4873, 16
      %v4967 = vshll.u32 %v4873, 16
      %v4969 = vrot.slane %v4967, 1
      %v4970 = vor.u32 %v4965, %v4969
      %v4972 = vshll.u32 %v4937, 16
      %v4974 = vrot.slane %v4972, 1
      %v4975 = vsel %vm1130, %v4970, %v4974
      %v4977 = vshrl.u32 %v4874, 16
      %v4979 = vshll.u32 %v4874, 16
      %v4981 = vrot.slane %v4979, 1
      %v4982 = vor.u32 %v4977, %v4981
      %v4984 = vshll.u32 %v4938, 16
      %v4986 = vrot.slane %v4984, 1
      %v4987 = vsel %vm1130, %v4982, %v4986
      %v4989 = vshrl.u32 %v4875, 16
      %v4991 = vshll.u32 %v4875, 16
      %v4993 = vrot.slane %v4991, 1
      %v4994 = vor.u32 %v4989, %v4993
      %v4996 = vshll.u32 %v4939, 16
      %v4998 = vrot.slane %v4996, 1
      %v4999 = vsel %vm1130, %v4994, %v4998
      %v5001 = vshrl.u32 %v4876, 16
      %v5003 = vshll.u32 %v4876, 16
      %v5005 = vrot.slane %v5003, 1
      %v5006 = vor.u32 %v5001, %v5005
      %v5008 = vshll.u32 %v4940, 16
      %v5010 = vrot.slane %v5008, 1
      %v5011 = vsel %vm1130, %v5006, %v5010
      %v5013 = vshrl.u32 %v4877, 16
      %v5015 = vshll.u32 %v4877, 16
      %v5017 = vrot.slane %v5015, 1
      %v5018 = vor.u32 %v5013, %v5017
      %v5020 = vshll.u32 %v4941, 16
      %v5022 = vrot.slane %v5020, 1
      %v5023 = vsel %vm1130, %v5018, %v5022
      %v5025 = vshrl.u32 %v4878, 16
      %v5027 = vshll.u32 %v4878, 16
      %v5029 = vrot.slane %v5027, 1
      %v5030 = vor.u32 %v5025, %v5029
      %v5032 = vshll.u32 %v4942, 16
      %v5034 = vrot.slane %v5032, 1
      %v5035 = vsel %vm1130, %v5030, %v5034
      %v5037 = vshrl.u32 %v4879, 16
      %v5039 = vshll.u32 %v4879, 16
      %v5041 = vrot.slane %v5039, 1
      %v5042 = vor.u32 %v5037, %v5041
      %v5044 = vshll.u32 %v4943, 16
      %v5046 = vrot.slane %v5044, 1
      %v5047 = vsel %vm1130, %v5042, %v5046
      %v5049 = vshrl.u32 %v4880, 16
      %v5051 = vshll.u32 %v4880, 16
      %v5053 = vrot.slane %v5051, 1
      %v5054 = vor.u32 %v5049, %v5053
      %v5056 = vshll.u32 %v4944, 16
      %v5058 = vrot.slane %v5056, 1
      %v5059 = vsel %vm1130, %v5054, %v5058
      %v5061 = vshrl.u32 %v4881, 16
      %v5063 = vshll.u32 %v4881, 16
      %v5065 = vrot.slane %v5063, 1
      %v5066 = vor.u32 %v5061, %v5065
      %v5068 = vshll.u32 %v4945, 16
      %v5070 = vrot.slane %v5068, 1
      %v5071 = vsel %vm1130, %v5066, %v5070
      %v5073 = vshrl.u32 %v4882, 16
      %v5075 = vshll.u32 %v4882, 16
      %v5077 = vrot.slane %v5075, 1
      %v5078 = vor.u32 %v5073, %v5077
      %v5080 = vshll.u32 %v4946, 16
      %v5082 = vrot.slane %v5080, 1
      %v5083 = vsel %vm1130, %v5078, %v5082
      %v5085 = vshrl.u32 %v4883, 16
      %v5087 = vshll.u32 %v4883, 16
      %v5089 = vrot.slane %v5087, 1
      %v5090 = vor.u32 %v5085, %v5089
      %v5092 = vshll.u32 %v4947, 16
      %v5094 = vrot.slane %v5092, 1
      %v5095 = vsel %vm1130, %v5090, %v5094
      %v5097 = vshrl.u32 %v4884, 16
      %v5099 = vshll.u32 %v4884, 16
      %v5101 = vrot.slane %v5099, 1
      %v5102 = vor.u32 %v5097, %v5101
      %v5104 = vshll.u32 %v4948, 16
      %v5106 = vrot.slane %v5104, 1
      %v5107 = vsel %vm1130, %v5102, %v5106
      %v5109 = vshrl.u32 %v4885, 16
      %v5111 = vshll.u32 %v4885, 16
      %v5113 = vrot.slane %v5111, 1
      %v5114 = vor.u32 %v5109, %v5113
      %v5116 = vshll.u32 %v4949, 16
      %v5118 = vrot.slane %v5116, 1
      %v5119 = vsel %vm1130, %v5114, %v5118
      %v5121 = vshrl.u32 %v4886, 16
      %v5123 = vshll.u32 %v4886, 16
      %v5125 = vrot.slane %v5123, 1
      %v5126 = vor.u32 %v5121, %v5125
      %v5128 = vshll.u32 %v4950, 16
      %v5130 = vrot.slane %v5128, 1
      %v5131 = vsel %vm1130, %v5126, %v5130
      %v5133 = vshrl.u32 %v4887, 16
      %v5135 = vshll.u32 %v4887, 16
      %v5137 = vrot.slane %v5135, 1
      %v5138 = vor.u32 %v5133, %v5137
      %v5140 = vshll.u32 %v4951, 16
      %v5142 = vrot.slane %v5140, 1
      %v5143 = vsel %vm1130, %v5138, %v5142
      %v5176 = vunpack.c.l.b16 %v3864
      %v5177 = vunpack.c.l.b16 %v3865
      %v5178 = vunpack.c.l.b16 %v3866
      %v5179 = vunpack.c.l.b16 %v3867
      %v5180 = vunpack.c.l.b16 %v3868
      %v5181 = vunpack.c.l.b16 %v3869
      %v5182 = vunpack.c.l.b16 %v3870
      %v5183 = vunpack.c.l.b16 %v3871
      %v5184 = vunpack.c.l.b16 %v3872
      %v5185 = vunpack.c.l.b16 %v3873
      %v5186 = vunpack.c.l.b16 %v3874
      %v5187 = vunpack.c.l.b16 %v3875
      %v5188 = vunpack.c.l.b16 %v3876
      %v5189 = vunpack.c.l.b16 %v3877
      %v5190 = vunpack.c.l.b16 %v3878
      %v5191 = vunpack.c.l.b16 %v3879
      %v5192 = vpack.c.b16 %v4841, %v5176
      %v5193 = vpack.c.b16 %v4843, %v5177
      %v5194 = vpack.c.b16 %v4845, %v5178
      %v5195 = vpack.c.b16 %v4847, %v5179
      %v5196 = vpack.c.b16 %v4849, %v5180
      %v5197 = vpack.c.b16 %v4851, %v5181
      %v5198 = vpack.c.b16 %v4853, %v5182
      %v5199 = vpack.c.b16 %v4855, %v5183
      %v5200 = vpack.c.b16 %v4857, %v5184
      %v5201 = vpack.c.b16 %v4859, %v5185
      %v5202 = vpack.c.b16 %v4861, %v5186
      %v5203 = vpack.c.b16 %v4863, %v5187
      %v5204 = vpack.c.b16 %v4865, %v5188
      %v5205 = vpack.c.b16 %v4867, %v5189
      %v5206 = vpack.c.b16 %v4869, %v5190
      %v5207 = vpack.c.b16 %v4871, %v5191
      %v5208 = vrot.slane %v5192, 1
      %v5209 = vrot.slane %v4936, 1
      %v5210 = vsel %vm1403, %v5208, %v5209
      %v5211 = vrot.slane %v5193, 1
      %v5212 = vrot.slane %v4937, 1
      %v5213 = vsel %vm1403, %v5211, %v5212
      %v5214 = vrot.slane %v5194, 1
      %v5215 = vrot.slane %v4938, 1
      %v5216 = vsel %vm1403, %v5214, %v5215
      %v5217 = vrot.slane %v5195, 1
      %v5218 = vrot.slane %v4939, 1
      %v5219 = vsel %vm1403, %v5217, %v5218
      %v5220 = vrot.slane %v5196, 1
      %v5221 = vrot.slane %v4940, 1
      %v5222 = vsel %vm1403, %v5220, %v5221
      %v5223 = vrot.slane %v5197, 1
      %v5224 = vrot.slane %v4941, 1
      %v5225 = vsel %vm1403, %v5223, %v5224
      %v5226 = vrot.slane %v5198, 1
      %v5227 = vrot.slane %v4942, 1
      %v5228 = vsel %vm1403, %v5226, %v5227
      %v5229 = vrot.slane %v5199, 1
      %v5230 = vrot.slane %v4943, 1
      %v5231 = vsel %vm1403, %v5229, %v5230
      %v5232 = vrot.slane %v5200, 1
      %v5233 = vrot.slane %v4944, 1
      %v5234 = vsel %vm1403, %v5232, %v5233
      %v5235 = vrot.slane %v5201, 1
      %v5236 = vrot.slane %v4945, 1
      %v5237 = vsel %vm1403, %v5235, %v5236
      %v5238 = vrot.slane %v5202, 1
      %v5239 = vrot.slane %v4946, 1
      %v5240 = vsel %vm1403, %v5238, %v5239
      %v5241 = vrot.slane %v5203, 1
      %v5242 = vrot.slane %v4947, 1
      %v5243 = vsel %vm1403, %v5241, %v5242
      %v5244 = vrot.slane %v5204, 1
      %v5245 = vrot.slane %v4948, 1
      %v5246 = vsel %vm1403, %v5244, %v5245
      %v5247 = vrot.slane %v5205, 1
      %v5248 = vrot.slane %v4949, 1
      %v5249 = vsel %vm1403, %v5247, %v5248
      %v5250 = vrot.slane %v5206, 1
      %v5251 = vrot.slane %v4950, 1
      %v5252 = vsel %vm1403, %v5250, %v5251
      %v5253 = vrot.slane %v5207, 1
      %v5254 = vrot.slane %v4951, 1
      %v5255 = vsel %vm1403, %v5253, %v5254
      %v5272 = vld [vmem:[%s4] sm:$0xf]
      %v5273 = vld [vmem:[%s4 + $0x4] sm:$0xf]
      %v5274 = vld [vmem:[%s4 + $0x8] sm:$0xf]
      %v5275 = vld [vmem:[%s4 + $0xc] sm:$0xf]
      %v5276 = vld [vmem:[%s4 + $0x10] sm:$0xf]
      %v5277 = vld [vmem:[%s4 + $0x14] sm:$0xf]
      %v5278 = vld [vmem:[%s4 + $0x18] sm:$0xf]
      %v5279 = vld [vmem:[%s4 + $0x1c] sm:$0xf]
      %v5280 = vld [vmem:[%s4 + $0x20] sm:$0xf]
      %v5281 = vld [vmem:[%s4 + $0x24] sm:$0xf]
      %v5282 = vld [vmem:[%s4 + $0x28] sm:$0xf]
      %v5283 = vld [vmem:[%s4 + $0x2c] sm:$0xf]
      %v5284 = vld [vmem:[%s4 + $0x30] sm:$0xf]
      %v5285 = vld [vmem:[%s4 + $0x34] sm:$0xf]
      %v5286 = vld [vmem:[%s4 + $0x38] sm:$0xf]
      %v5287 = vld [vmem:[%s4 + $0x3c] sm:$0xf]
      %v5288 = vld [vmem:[%s4 + $0x40] sm:$0xf]
      %v5289 = vld [vmem:[%s4 + $0x44] sm:$0xf]
      %v5290 = vld [vmem:[%s4 + $0x48] sm:$0xf]
      %v5291 = vld [vmem:[%s4 + $0x4c] sm:$0xf]
      %v5292 = vld [vmem:[%s4 + $0x50] sm:$0xf]
      %v5293 = vld [vmem:[%s4 + $0x54] sm:$0xf]
      %v5294 = vld [vmem:[%s4 + $0x58] sm:$0xf]
      %v5295 = vld [vmem:[%s4 + $0x5c] sm:$0xf]
      %v5296 = vld [vmem:[%s4 + $0x60] sm:$0xf]
      %v5297 = vld [vmem:[%s4 + $0x64] sm:$0xf]
      %v5298 = vld [vmem:[%s4 + $0x68] sm:$0xf]
      %v5299 = vld [vmem:[%s4 + $0x6c] sm:$0xf]
      %v5300 = vld [vmem:[%s4 + $0x70] sm:$0xf]
      %v5301 = vld [vmem:[%s4 + $0x74] sm:$0xf]
      %v5302 = vld [vmem:[%s4 + $0x78] sm:$0xf]
      %v5303 = vld [vmem:[%s4 + $0x7c] sm:$0xf]
      %v5304 = vld [vmem:[%s4 + $0x80] sm:$0xf]
      %v5305 = vld [vmem:[%s4 + $0x84] sm:$0xf]
      %v5306 = vld [vmem:[%s4 + $0x88] sm:$0xf]
      %v5307 = vld [vmem:[%s4 + $0x8c] sm:$0xf]
      %v5308 = vld [vmem:[%s4 + $0x90] sm:$0xf]
      %v5309 = vld [vmem:[%s4 + $0x94] sm:$0xf]
      %v5310 = vld [vmem:[%s4 + $0x98] sm:$0xf]
      %v5311 = vld [vmem:[%s4 + $0x9c] sm:$0xf]
      %v5312 = vld [vmem:[%s4 + $0xa0] sm:$0xf]
      %v5313 = vld [vmem:[%s4 + $0xa4] sm:$0xf]
      %v5314 = vld [vmem:[%s4 + $0xa8] sm:$0xf]
      %v5315 = vld [vmem:[%s4 + $0xac] sm:$0xf]
      %v5316 = vld [vmem:[%s4 + $0xb0] sm:$0xf]
      %v5317 = vld [vmem:[%s4 + $0xb4] sm:$0xf]
      %v5318 = vld [vmem:[%s4 + $0xb8] sm:$0xf]
      %v5319 = vld [vmem:[%s4 + $0xbc] sm:$0xf]
      %v5320 = vld [vmem:[%s4 + $0xc0] sm:$0xf]
      %v5321 = vld [vmem:[%s4 + $0xc4] sm:$0xf]
      %v5322 = vld [vmem:[%s4 + $0xc8] sm:$0xf]
      %v5323 = vld [vmem:[%s4 + $0xcc] sm:$0xf]
      %v5324 = vld [vmem:[%s4 + $0xd0] sm:$0xf]
      %v5325 = vld [vmem:[%s4 + $0xd4] sm:$0xf]
      %v5326 = vld [vmem:[%s4 + $0xd8] sm:$0xf]
      %v5327 = vld [vmem:[%s4 + $0xdc] sm:$0xf]
      %v5328 = vld [vmem:[%s4 + $0xe0] sm:$0xf]
      %v5329 = vld [vmem:[%s4 + $0xe4] sm:$0xf]
      %v5330 = vld [vmem:[%s4 + $0xe8] sm:$0xf]
      %v5331 = vld [vmem:[%s4 + $0xec] sm:$0xf]
      %v5332 = vld [vmem:[%s4 + $0xf0] sm:$0xf]
      %v5333 = vld [vmem:[%s4 + $0xf4] sm:$0xf]
      %v5334 = vld [vmem:[%s4 + $0xf8] sm:$0xf]
      %v5335 = vld [vmem:[%s4 + $0xfc] sm:$0xf]
      %v5336 = vld [vmem:[%s4 + $0x100] sm:$0xf]
      %v5337 = vld [vmem:[%s4 + $0x104] sm:$0xf]
      %v5338 = vld [vmem:[%s4 + $0x108] sm:$0xf]
      %v5339 = vld [vmem:[%s4 + $0x10c] sm:$0xf]
      %v5340 = vld [vmem:[%s4 + $0x110] sm:$0xf]
      %v5341 = vld [vmem:[%s4 + $0x114] sm:$0xf]
      %v5342 = vld [vmem:[%s4 + $0x118] sm:$0xf]
      %v5343 = vld [vmem:[%s4 + $0x11c] sm:$0xf]
      %v5344 = vld [vmem:[%s4 + $0x120] sm:$0xf]
      %v5345 = vld [vmem:[%s4 + $0x124] sm:$0xf]
      %v5346 = vld [vmem:[%s4 + $0x128] sm:$0xf]
      %v5347 = vld [vmem:[%s4 + $0x12c] sm:$0xf]
      %v5348 = vld [vmem:[%s4 + $0x130] sm:$0xf]
      %v5349 = vld [vmem:[%s4 + $0x134] sm:$0xf]
      %v5350 = vld [vmem:[%s4 + $0x138] sm:$0xf]
      %v5351 = vld [vmem:[%s4 + $0x13c] sm:$0xf]
      %v5352 = vld [vmem:[%s4 + $0x140] sm:$0xf]
      %v5353 = vld [vmem:[%s4 + $0x144] sm:$0xf]
      %v5354 = vld [vmem:[%s4 + $0x148] sm:$0xf]
      %v5355 = vld [vmem:[%s4 + $0x14c] sm:$0xf]
      %v5356 = vld [vmem:[%s4 + $0x150] sm:$0xf]
      %v5357 = vld [vmem:[%s4 + $0x154] sm:$0xf]
      %v5358 = vld [vmem:[%s4 + $0x158] sm:$0xf]
      %v5359 = vld [vmem:[%s4 + $0x15c] sm:$0xf]
      %v5360 = vld [vmem:[%s4 + $0x160] sm:$0xf]
      %v5361 = vld [vmem:[%s4 + $0x164] sm:$0xf]
      %v5362 = vld [vmem:[%s4 + $0x168] sm:$0xf]
      %v5363 = vld [vmem:[%s4 + $0x16c] sm:$0xf]
      %v5364 = vld [vmem:[%s4 + $0x170] sm:$0xf]
      %v5365 = vld [vmem:[%s4 + $0x174] sm:$0xf]
      %v5366 = vld [vmem:[%s4 + $0x178] sm:$0xf]
      %v5367 = vld [vmem:[%s4 + $0x17c] sm:$0xf]
      %v5368 = vld [vmem:[%s4 + $0x180] sm:$0xf]
      %v5369 = vld [vmem:[%s4 + $0x184] sm:$0xf]
      %v5370 = vld [vmem:[%s4 + $0x188] sm:$0xf]
      %v5371 = vld [vmem:[%s4 + $0x18c] sm:$0xf]
      %v5372 = vld [vmem:[%s4 + $0x190] sm:$0xf]
      %v5373 = vld [vmem:[%s4 + $0x194] sm:$0xf]
      %v5374 = vld [vmem:[%s4 + $0x198] sm:$0xf]
      %v5375 = vld [vmem:[%s4 + $0x19c] sm:$0xf]
      %v5376 = vld [vmem:[%s4 + $0x1a0] sm:$0xf]
      %v5377 = vld [vmem:[%s4 + $0x1a4] sm:$0xf]
      %v5378 = vld [vmem:[%s4 + $0x1a8] sm:$0xf]
      %v5379 = vld [vmem:[%s4 + $0x1ac] sm:$0xf]
      %v5380 = vld [vmem:[%s4 + $0x1b0] sm:$0xf]
      %v5381 = vld [vmem:[%s4 + $0x1b4] sm:$0xf]
      %v5382 = vld [vmem:[%s4 + $0x1b8] sm:$0xf]
      %v5383 = vld [vmem:[%s4 + $0x1bc] sm:$0xf]
      %v5384 = vld [vmem:[%s4 + $0x1c0] sm:$0xf]
      %v5385 = vld [vmem:[%s4 + $0x1c4] sm:$0xf]
      %v5386 = vld [vmem:[%s4 + $0x1c8] sm:$0xf]
      %v5387 = vld [vmem:[%s4 + $0x1cc] sm:$0xf]
      %v5388 = vld [vmem:[%s4 + $0x1d0] sm:$0xf]
      %v5389 = vld [vmem:[%s4 + $0x1d4] sm:$0xf]
      %v5390 = vld [vmem:[%s4 + $0x1d8] sm:$0xf]
      %v5391 = vld [vmem:[%s4 + $0x1dc] sm:$0xf]
      %v5392 = vld [vmem:[%s4 + $0x1e0] sm:$0xf]
      %v5393 = vld [vmem:[%s4 + $0x1e4] sm:$0xf]
      %v5394 = vld [vmem:[%s4 + $0x1e8] sm:$0xf]
      %v5395 = vld [vmem:[%s4 + $0x1ec] sm:$0xf]
      %v5396 = vld [vmem:[%s4 + $0x1f0] sm:$0xf]
      %v5397 = vld [vmem:[%s4 + $0x1f4] sm:$0xf]
      %v5398 = vld [vmem:[%s4 + $0x1f8] sm:$0xf]
      %v5399 = vld [vmem:[%s4 + $0x1fc] sm:$0xf]
      %v5400 = vld [vmem:[%s4 + $0x200] sm:$0xf]
      %v5401 = vld [vmem:[%s4 + $0x204] sm:$0xf]
      %v5402 = vld [vmem:[%s4 + $0x208] sm:$0xf]
      %v5403 = vld [vmem:[%s4 + $0x20c] sm:$0xf]
      %v5404 = vld [vmem:[%s4 + $0x210] sm:$0xf]
      %v5405 = vld [vmem:[%s4 + $0x214] sm:$0xf]
      %v5406 = vld [vmem:[%s4 + $0x218] sm:$0xf]
      %v5407 = vld [vmem:[%s4 + $0x21c] sm:$0xf]
      %v5408 = vld [vmem:[%s4 + $0x220] sm:$0xf]
      %v5409 = vld [vmem:[%s4 + $0x224] sm:$0xf]
      %v5410 = vld [vmem:[%s4 + $0x228] sm:$0xf]
      %v5411 = vld [vmem:[%s4 + $0x22c] sm:$0xf]
      %v5412 = vld [vmem:[%s4 + $0x230] sm:$0xf]
      %v5413 = vld [vmem:[%s4 + $0x234] sm:$0xf]
      %v5414 = vld [vmem:[%s4 + $0x238] sm:$0xf]
      %v5415 = vld [vmem:[%s4 + $0x23c] sm:$0xf]
      %v5560 = vunpack.c.l.b16 %v5272
      %v5561 = vunpack.c.l.b16 %v5273
      %v5562 = vunpack.c.l.b16 %v5274
      %v5563 = vunpack.c.l.b16 %v5275
      %v5564 = vunpack.c.l.b16 %v5276
      %v5565 = vunpack.c.l.b16 %v5277
      %v5566 = vunpack.c.l.b16 %v5278
      %v5567 = vunpack.c.l.b16 %v5279
      %v5568 = vunpack.c.l.b16 %v5280
      %v5569 = vunpack.c.l.b16 %v5281
      %v5570 = vunpack.c.l.b16 %v5282
      %v5571 = vunpack.c.l.b16 %v5283
      %v5572 = vunpack.c.l.b16 %v5284
      %v5573 = vunpack.c.l.b16 %v5285
      %v5574 = vunpack.c.l.b16 %v5286
      %v5575 = vunpack.c.l.b16 %v5287
      %v5576 = vunpack.c.l.b16 %v5288
      %v5577 = vunpack.c.l.b16 %v5289
      %v5578 = vunpack.c.l.b16 %v5290
      %v5579 = vunpack.c.l.b16 %v5291
      %v5580 = vunpack.c.l.b16 %v5292
      %v5581 = vunpack.c.l.b16 %v5293
      %v5582 = vunpack.c.l.b16 %v5294
      %v5583 = vunpack.c.l.b16 %v5295
      %v5584 = vunpack.c.l.b16 %v5296
      %v5585 = vunpack.c.l.b16 %v5297
      %v5586 = vunpack.c.l.b16 %v5298
      %v5587 = vunpack.c.l.b16 %v5299
      %v5588 = vunpack.c.l.b16 %v5300
      %v5589 = vunpack.c.l.b16 %v5301
      %v5590 = vunpack.c.l.b16 %v5302
      %v5591 = vunpack.c.l.b16 %v5303
      %v5592 = vunpack.c.l.b16 %v5304
      %v5593 = vunpack.c.l.b16 %v5305
      %v5594 = vunpack.c.l.b16 %v5306
      %v5595 = vunpack.c.l.b16 %v5307
      %v5596 = vunpack.c.l.b16 %v5308
      %v5597 = vunpack.c.l.b16 %v5309
      %v5598 = vunpack.c.l.b16 %v5310
      %v5599 = vunpack.c.l.b16 %v5311
      %v5600 = vunpack.c.l.b16 %v5312
      %v5601 = vunpack.c.l.b16 %v5313
      %v5602 = vunpack.c.l.b16 %v5314
      %v5603 = vunpack.c.l.b16 %v5315
      %v5604 = vunpack.c.l.b16 %v5316
      %v5605 = vunpack.c.l.b16 %v5317
      %v5606 = vunpack.c.l.b16 %v5318
      %v5607 = vunpack.c.l.b16 %v5319
      %v5608 = vunpack.c.l.b16 %v5320
      %v5609 = vunpack.c.l.b16 %v5321
      %v5610 = vunpack.c.l.b16 %v5322
      %v5611 = vunpack.c.l.b16 %v5323
      %v5612 = vunpack.c.l.b16 %v5324
      %v5613 = vunpack.c.l.b16 %v5325
      %v5614 = vunpack.c.l.b16 %v5326
      %v5615 = vunpack.c.l.b16 %v5327
      %v5616 = vunpack.c.l.b16 %v5328
      %v5617 = vunpack.c.l.b16 %v5329
      %v5618 = vunpack.c.l.b16 %v5330
      %v5619 = vunpack.c.l.b16 %v5331
      %v5620 = vunpack.c.l.b16 %v5332
      %v5621 = vunpack.c.l.b16 %v5333
      %v5622 = vunpack.c.l.b16 %v5334
      %v5623 = vunpack.c.l.b16 %v5335
      %v5624 = vunpack.c.l.b16 %v5336
      %v5625 = vunpack.c.l.b16 %v5337
      %v5626 = vunpack.c.l.b16 %v5338
      %v5627 = vunpack.c.l.b16 %v5339
      %v5628 = vunpack.c.l.b16 %v5340
      %v5629 = vunpack.c.l.b16 %v5341
      %v5630 = vunpack.c.l.b16 %v5342
      %v5631 = vunpack.c.l.b16 %v5343
      %v5632 = vunpack.c.l.b16 %v5344
      %v5633 = vunpack.c.l.b16 %v5345
      %v5634 = vunpack.c.l.b16 %v5346
      %v5635 = vunpack.c.l.b16 %v5347
      %v5636 = vunpack.c.l.b16 %v5348
      %v5637 = vunpack.c.l.b16 %v5349
      %v5638 = vunpack.c.l.b16 %v5350
      %v5639 = vunpack.c.l.b16 %v5351
      %v5640 = vunpack.c.l.b16 %v5352
      %v5641 = vunpack.c.l.b16 %v5353
      %v5642 = vunpack.c.l.b16 %v5354
      %v5643 = vunpack.c.l.b16 %v5355
      %v5644 = vunpack.c.l.b16 %v5356
      %v5645 = vunpack.c.l.b16 %v5357
      %v5646 = vunpack.c.l.b16 %v5358
      %v5647 = vunpack.c.l.b16 %v5359
      %v5648 = vunpack.c.l.b16 %v5360
      %v5649 = vunpack.c.l.b16 %v5361
      %v5650 = vunpack.c.l.b16 %v5362
      %v5651 = vunpack.c.l.b16 %v5363
      %v5652 = vunpack.c.l.b16 %v5364
      %v5653 = vunpack.c.l.b16 %v5365
      %v5654 = vunpack.c.l.b16 %v5366
      %v5655 = vunpack.c.l.b16 %v5367
      %v5656 = vunpack.c.l.b16 %v5368
      %v5657 = vunpack.c.l.b16 %v5369
      %v5658 = vunpack.c.l.b16 %v5370
      %v5659 = vunpack.c.l.b16 %v5371
      %v5660 = vunpack.c.l.b16 %v5372
      %v5661 = vunpack.c.l.b16 %v5373
      %v5662 = vunpack.c.l.b16 %v5374
      %v5663 = vunpack.c.l.b16 %v5375
      %v5664 = vunpack.c.l.b16 %v5376
      %v5665 = vunpack.c.l.b16 %v5377
      %v5666 = vunpack.c.l.b16 %v5378
      %v5667 = vunpack.c.l.b16 %v5379
      %v5668 = vunpack.c.l.b16 %v5380
      %v5669 = vunpack.c.l.b16 %v5381
      %v5670 = vunpack.c.l.b16 %v5382
      %v5671 = vunpack.c.l.b16 %v5383
      %v5672 = vunpack.c.l.b16 %v5384
      %v5673 = vunpack.c.l.b16 %v5385
      %v5674 = vunpack.c.l.b16 %v5386
      %v5675 = vunpack.c.l.b16 %v5387
      %v5676 = vunpack.c.l.b16 %v5388
      %v5677 = vunpack.c.l.b16 %v5389
      %v5678 = vunpack.c.l.b16 %v5390
      %v5679 = vunpack.c.l.b16 %v5391
      %v5680 = vunpack.c.l.b16 %v5392
      %v5681 = vunpack.c.l.b16 %v5393
      %v5682 = vunpack.c.l.b16 %v5394
      %v5683 = vunpack.c.l.b16 %v5395
      %v5684 = vunpack.c.l.b16 %v5396
      %v5685 = vunpack.c.l.b16 %v5397
      %v5686 = vunpack.c.l.b16 %v5398
      %v5687 = vunpack.c.l.b16 %v5399
      %v5688 = vunpack.c.l.b16 %v5400
      %v5689 = vunpack.c.l.b16 %v5401
      %v5690 = vunpack.c.l.b16 %v5402
      %v5691 = vunpack.c.l.b16 %v5403
      %v5692 = vunpack.c.l.b16 %v5404
      %v5693 = vunpack.c.l.b16 %v5405
      %v5694 = vunpack.c.l.b16 %v5406
      %v5695 = vunpack.c.l.b16 %v5407
      %v5696 = vunpack.c.l.b16 %v5408
      %v5697 = vunpack.c.l.b16 %v5409
      %v5698 = vunpack.c.l.b16 %v5410
      %v5699 = vunpack.c.l.b16 %v5411
      %v5700 = vunpack.c.l.b16 %v5412
      %v5701 = vunpack.c.l.b16 %v5413
      %v5702 = vunpack.c.l.b16 %v5414
      %v5703 = vunpack.c.l.b16 %v5415
      %v5704 = vpack.c.b16 %v5561, %v5560
      %v5705 = vpack.c.b16 %v5563, %v5562
      %v5706 = vpack.c.b16 %v5565, %v5564
      %v5707 = vpack.c.b16 %v5567, %v5566
      %v5708 = vpack.c.b16 %v5569, %v5568
      %v5709 = vpack.c.b16 %v5571, %v5570
      %v5710 = vpack.c.b16 %v5573, %v5572
      %v5711 = vpack.c.b16 %v5575, %v5574
      %v5712 = vpack.c.b16 %v5577, %v5576
      %v5713 = vpack.c.b16 %v5579, %v5578
      %v5714 = vpack.c.b16 %v5581, %v5580
      %v5715 = vpack.c.b16 %v5583, %v5582
      %v5716 = vpack.c.b16 %v5585, %v5584
      %v5717 = vpack.c.b16 %v5587, %v5586
      %v5718 = vpack.c.b16 %v5589, %v5588
      %v5719 = vpack.c.b16 %v5591, %v5590
      %v5720 = vpack.c.b16 %v5593, %v5592
      %v5721 = vpack.c.b16 %v5595, %v5594
      %v5722 = vpack.c.b16 %v5597, %v5596
      %v5723 = vpack.c.b16 %v5599, %v5598
      %v5724 = vpack.c.b16 %v5601, %v5600
      %v5725 = vpack.c.b16 %v5603, %v5602
      %v5726 = vpack.c.b16 %v5605, %v5604
      %v5727 = vpack.c.b16 %v5607, %v5606
      %v5728 = vpack.c.b16 %v5609, %v5608
      %v5729 = vpack.c.b16 %v5611, %v5610
      %v5730 = vpack.c.b16 %v5613, %v5612
      %v5731 = vpack.c.b16 %v5615, %v5614
      %v5732 = vpack.c.b16 %v5617, %v5616
      %v5733 = vpack.c.b16 %v5619, %v5618
      %v5734 = vpack.c.b16 %v5621, %v5620
      %v5735 = vpack.c.b16 %v5623, %v5622
      %v5736 = vpack.c.b16 %v5625, %v5624
      %v5737 = vpack.c.b16 %v5627, %v5626
      %v5738 = vpack.c.b16 %v5629, %v5628
      %v5739 = vpack.c.b16 %v5631, %v5630
      %v5740 = vpack.c.b16 %v5633, %v5632
      %v5741 = vpack.c.b16 %v5635, %v5634
      %v5742 = vpack.c.b16 %v5637, %v5636
      %v5743 = vpack.c.b16 %v5639, %v5638
      %v5744 = vpack.c.b16 %v5641, %v5640
      %v5745 = vpack.c.b16 %v5643, %v5642
      %v5746 = vpack.c.b16 %v5645, %v5644
      %v5747 = vpack.c.b16 %v5647, %v5646
      %v5748 = vpack.c.b16 %v5649, %v5648
      %v5749 = vpack.c.b16 %v5651, %v5650
      %v5750 = vpack.c.b16 %v5653, %v5652
      %v5751 = vpack.c.b16 %v5655, %v5654
      %v5752 = vpack.c.b16 %v5657, %v5656
      %v5753 = vpack.c.b16 %v5659, %v5658
      %v5754 = vpack.c.b16 %v5661, %v5660
      %v5755 = vpack.c.b16 %v5663, %v5662
      %v5756 = vpack.c.b16 %v5665, %v5664
      %v5757 = vpack.c.b16 %v5667, %v5666
      %v5758 = vpack.c.b16 %v5669, %v5668
      %v5759 = vpack.c.b16 %v5671, %v5670
      %v5760 = vpack.c.b16 %v5673, %v5672
      %v5761 = vpack.c.b16 %v5675, %v5674
      %v5762 = vpack.c.b16 %v5677, %v5676
      %v5763 = vpack.c.b16 %v5679, %v5678
      %v5764 = vpack.c.b16 %v5681, %v5680
      %v5765 = vpack.c.b16 %v5683, %v5682
      %v5766 = vpack.c.b16 %v5685, %v5684
      %v5767 = vpack.c.b16 %v5687, %v5686
      %v5768 = vpack.c.b16 %v5689, %v5688
      %v5769 = vpack.c.b16 %v5691, %v5690
      %v5770 = vpack.c.b16 %v5693, %v5692
      %v5771 = vpack.c.b16 %v5695, %v5694
      %v5772 = vpack.c.b16 %v5697, %v5696
      %v5773 = vpack.c.b16 %v5699, %v5698
      %v5774 = vpack.c.b16 %v5701, %v5700
      %v5775 = vpack.c.b16 %v5703, %v5702
      %5848 = vmatprep.subr.bf16.mxu0 0
      %5849 = vmatpush1.bf16.msra.mxu0 %v5711
      %5850 = vmatprep.subr.bf16.mxu0 0
      %5851 = vmatpush1.bf16.msra.mxu0 %v5710
      %5852 = vmatprep.subr.bf16.mxu0 0
      %5853 = vmatpush1.bf16.msra.mxu0 %v5709
      %5854 = vmatprep.subr.bf16.mxu0 0
      %5855 = vmatpush1.bf16.msra.mxu0 %v5708
      %5856 = vmatprep.subr.bf16.mxu0 0
      %5857 = vmatpush1.bf16.msra.mxu0 %v5707
      %5858 = vmatprep.subr.bf16.mxu0 0
      %5859 = vmatpush1.bf16.msra.mxu0 %v5706
      %5860 = vmatprep.subr.bf16.mxu0 0
      %5861 = vmatpush1.bf16.msra.mxu0 %v5705
      %5862 = vmatprep.subr.bf16.mxu0 0
      %5863 = vmatpush1.bf16.msra.mxu0 %v5704
      %5864 = vmatprep.subr.bf16.mxu0 0
      %5865 = vmatpush2.bf16.msra.mxu0 %v5719
      %5866 = vmatprep.subr.bf16.mxu0 0
      %5867 = vmatpush2.bf16.msra.mxu0 %v5718
      %5868 = vmatprep.subr.bf16.mxu0 0
      %5869 = vmatpush2.bf16.msra.mxu0 %v5717
      %5870 = vmatprep.subr.bf16.mxu0 0
      %5871 = vmatpush2.bf16.msra.mxu0 %v5716
      %5872 = vmatprep.subr.bf16.mxu0 0
      %5873 = vmatpush2.bf16.msra.mxu0 %v5715
      %5874 = vmatprep.subr.bf16.mxu0 0
      %5875 = vmatpush2.bf16.msra.mxu0 %v5714
      %5876 = vmatprep.subr.bf16.mxu0 0
      %5877 = vmatpush2.bf16.msra.mxu0 %v5713
      %5878 = vmatprep.subr.bf16.mxu0 0
      %5879 = vmatpush2.bf16.msra.mxu0 %v5712
      %5880 = vmatprep.mubr.bf16.mxu0 %v4035
      %5881 = vmatmul.mubr.bf16.gmra.mxu0 %v3944
      %v5882 = vpop.f32.mrf.mxu0
      %v5883 = vadd.f32 0.0, %v5882
      %v5884 = vpop.f32.mrf.mxu0
      %v5885 = vpop.f32.mrf.mxu0
      %v5886 = vadd.f32 0.0, %v5885
      %v5887 = vpop.f32.mrf.mxu0
      %5888 = vmatprep.mubr.bf16.mxu0 %v4047
      %5889 = vmatmul.mubr.bf16.gmra.mxu0 %v3945
      %v5890 = vpop.f32.mrf.mxu0
      %v5891 = vadd.f32 0.0, %v5890
      %v5892 = vpop.f32.mrf.mxu0
      %v5893 = vpop.f32.mrf.mxu0
      %v5894 = vadd.f32 0.0, %v5893
      %v5895 = vpop.f32.mrf.mxu0
      %5896 = vmatprep.mubr.bf16.mxu0 %v4059
      %5897 = vmatmul.mubr.bf16.gmra.mxu0 %v3946
      %v5898 = vpop.f32.mrf.mxu0
      %v5899 = vadd.f32 0.0, %v5898
      %v5900 = vpop.f32.mrf.mxu0
      %v5901 = vpop.f32.mrf.mxu0
      %v5902 = vadd.f32 0.0, %v5901
      %v5903 = vpop.f32.mrf.mxu0
      %5904 = vmatprep.mubr.bf16.mxu0 %v4071
      %5905 = vmatmul.mubr.bf16.gmra.mxu0 %v3947
      %v5906 = vpop.f32.mrf.mxu0
      %v5907 = vadd.f32 0.0, %v5906
      %v5908 = vpop.f32.mrf.mxu0
      %v5909 = vpop.f32.mrf.mxu0
      %v5910 = vadd.f32 0.0, %v5909
      %v5911 = vpop.f32.mrf.mxu0
      %5912 = vmatprep.mubr.bf16.mxu0 %v4083
      %5913 = vmatmul.mubr.bf16.gmra.mxu0 %v3948
      %v5914 = vpop.f32.mrf.mxu0
      %v5915 = vadd.f32 0.0, %v5914
      %v5916 = vpop.f32.mrf.mxu0
      %v5917 = vpop.f32.mrf.mxu0
      %v5918 = vadd.f32 0.0, %v5917
      %v5919 = vpop.f32.mrf.mxu0
      %5920 = vmatprep.mubr.bf16.mxu0 %v4095
      %5921 = vmatmul.mubr.bf16.gmra.mxu0 %v3949
      %v5922 = vpop.f32.mrf.mxu0
      %v5923 = vadd.f32 0.0, %v5922
      %v5924 = vpop.f32.mrf.mxu0
      %v5925 = vpop.f32.mrf.mxu0
      %v5926 = vadd.f32 0.0, %v5925
      %v5927 = vpop.f32.mrf.mxu0
      %5928 = vmatprep.mubr.bf16.mxu0 %v4107
      %5929 = vmatmul.mubr.bf16.gmra.mxu0 %v3950
      %v5930 = vpop.f32.mrf.mxu0
      %v5931 = vadd.f32 0.0, %v5930
      %v5932 = vpop.f32.mrf.mxu0
      %v5933 = vpop.f32.mrf.mxu0
      %v5934 = vadd.f32 0.0, %v5933
      %v5935 = vpop.f32.mrf.mxu0
      %5936 = vmatprep.mubr.bf16.mxu0 %v4119
      %5937 = vmatmul.mubr.bf16.gmra.mxu0 %v3951
      %v5938 = vpop.f32.mrf.mxu0
      %v5939 = vadd.f32 0.0, %v5938
      %v5940 = vpop.f32.mrf.mxu0
      %v5941 = vpop.f32.mrf.mxu0
      %v5942 = vadd.f32 0.0, %v5941
      %v5943 = vpop.f32.mrf.mxu0
      %5944 = vmatprep.mubr.bf16.mxu0 %v4131
      %5945 = vmatmul.mubr.bf16.gmra.mxu0 %v3952
      %v5946 = vpop.f32.mrf.mxu0
      %v5947 = vadd.f32 0.0, %v5946
      %v5948 = vpop.f32.mrf.mxu0
      %v5949 = vpop.f32.mrf.mxu0
      %v5950 = vadd.f32 0.0, %v5949
      %v5951 = vpop.f32.mrf.mxu0
      %5952 = vmatprep.mubr.bf16.mxu0 %v4143
      %5953 = vmatmul.mubr.bf16.gmra.mxu0 %v3953
      %v5954 = vpop.f32.mrf.mxu0
      %v5955 = vadd.f32 0.0, %v5954
      %v5956 = vpop.f32.mrf.mxu0
      %v5957 = vpop.f32.mrf.mxu0
      %v5958 = vadd.f32 0.0, %v5957
      %v5959 = vpop.f32.mrf.mxu0
      %5960 = vmatprep.mubr.bf16.mxu0 %v4155
      %5961 = vmatmul.mubr.bf16.gmra.mxu0 %v3954
      %v5962 = vpop.f32.mrf.mxu0
      %v5963 = vadd.f32 0.0, %v5962
      %v5964 = vpop.f32.mrf.mxu0
      %v5965 = vpop.f32.mrf.mxu0
      %v5966 = vadd.f32 0.0, %v5965
      %v5967 = vpop.f32.mrf.mxu0
      %5968 = vmatprep.mubr.bf16.mxu0 %v4167
      %5969 = vmatmul.mubr.bf16.gmra.mxu0 %v3955
      %v5970 = vpop.f32.mrf.mxu0
      %v5971 = vadd.f32 0.0, %v5970
      %v5972 = vpop.f32.mrf.mxu0
      %v5973 = vpop.f32.mrf.mxu0
      %v5974 = vadd.f32 0.0, %v5973
      %v5975 = vpop.f32.mrf.mxu0
      %5976 = vmatprep.mubr.bf16.mxu0 %v4179
      %5977 = vmatmul.mubr.bf16.gmra.mxu0 %v3956
      %v5978 = vpop.f32.mrf.mxu0
      %v5979 = vadd.f32 0.0, %v5978
      %v5980 = vpop.f32.mrf.mxu0
      %v5981 = vpop.f32.mrf.mxu0
      %v5982 = vadd.f32 0.0, %v5981
      %v5983 = vpop.f32.mrf.mxu0
      %5984 = vmatprep.mubr.bf16.mxu0 %v4191
      %5985 = vmatmul.mubr.bf16.gmra.mxu0 %v3957
      %v5986 = vpop.f32.mrf.mxu0
      %v5987 = vadd.f32 0.0, %v5986
      %v5988 = vpop.f32.mrf.mxu0
      %v5989 = vpop.f32.mrf.mxu0
      %v5990 = vadd.f32 0.0, %v5989
      %v5991 = vpop.f32.mrf.mxu0
      %5992 = vmatprep.mubr.bf16.mxu0 %v4203
      %5993 = vmatmul.mubr.bf16.gmra.mxu0 %v3958
      %v5994 = vpop.f32.mrf.mxu0
      %v5995 = vadd.f32 0.0, %v5994
      %v5996 = vpop.f32.mrf.mxu0
      %v5997 = vpop.f32.mrf.mxu0
      %v5998 = vadd.f32 0.0, %v5997
      %v5999 = vpop.f32.mrf.mxu0
      %6000 = vmatprep.mubr.bf16.mxu0 %v4215
      %6001 = vmatmul.mubr.bf16.gmra.mxu0 %v3959
      %v6002 = vpop.f32.mrf.mxu0
      %v6003 = vadd.f32 0.0, %v6002
      %v6004 = vpop.f32.mrf.mxu0
      %v6005 = vpop.f32.mrf.mxu0
      %v6006 = vadd.f32 0.0, %v6005
      %v6007 = vpop.f32.mrf.mxu0
      %6008 = vdwg.mxu0
      %6009 = vmatprep.subr.bf16.mxu0 0
      %6010 = vmatpush1.bf16.msra.mxu0 %v5727
      %6011 = vmatprep.subr.bf16.mxu0 0
      %6012 = vmatpush1.bf16.msra.mxu0 %v5726
      %6013 = vmatprep.subr.bf16.mxu0 0
      %6014 = vmatpush1.bf16.msra.mxu0 %v5725
      %6015 = vmatprep.subr.bf16.mxu0 0
      %6016 = vmatpush1.bf16.msra.mxu0 %v5724
      %6017 = vmatprep.subr.bf16.mxu0 0
      %6018 = vmatpush1.bf16.msra.mxu0 %v5723
      %6019 = vmatprep.subr.bf16.mxu0 0
      %6020 = vmatpush1.bf16.msra.mxu0 %v5722
      %6021 = vmatprep.subr.bf16.mxu0 0
      %6022 = vmatpush1.bf16.msra.mxu0 %v5721
      %6023 = vmatprep.subr.bf16.mxu0 0
      %6024 = vmatpush1.bf16.msra.mxu0 %v5720
      %6025 = vmatprep.subr.bf16.mxu0 0
      %6026 = vmatpush2.bf16.msra.mxu0 %v5735
      %6027 = vmatprep.subr.bf16.mxu0 0
      %6028 = vmatpush2.bf16.msra.mxu0 %v5734
      %6029 = vmatprep.subr.bf16.mxu0 0
      %6030 = vmatpush2.bf16.msra.mxu0 %v5733
      %6031 = vmatprep.subr.bf16.mxu0 0
      %6032 = vmatpush2.bf16.msra.mxu0 %v5732
      %6033 = vmatprep.subr.bf16.mxu0 0
      %6034 = vmatpush2.bf16.msra.mxu0 %v5731
      %6035 = vmatprep.subr.bf16.mxu0 0
      %6036 = vmatpush2.bf16.msra.mxu0 %v5730
      %6037 = vmatprep.subr.bf16.mxu0 0
      %6038 = vmatpush2.bf16.msra.mxu0 %v5729
      %6039 = vmatprep.subr.bf16.mxu0 0
      %6040 = vmatpush2.bf16.msra.mxu0 %v5728
      %6041 = vmatprep.mubr.bf16.mxu0 %v4408
      %6042 = vmatmul.mubr.bf16.gmra.mxu0 %v4282
      %v6043 = vpop.f32.mrf.mxu0
      %v6044 = vadd.f32 %v5883, %v6043
      %v6045 = vpop.f32.mrf.mxu0
      %v6046 = vpop.f32.mrf.mxu0
      %v6047 = vadd.f32 %v5886, %v6046
      %v6048 = vpop.f32.mrf.mxu0
      %6049 = vmatprep.mubr.bf16.mxu0 %v4409
      %6050 = vmatmul.mubr.bf16.gmra.mxu0 %v4285
      %v6051 = vpop.f32.mrf.mxu0
      %v6052 = vadd.f32 %v5891, %v6051
      %v6053 = vpop.f32.mrf.mxu0
      %v6054 = vpop.f32.mrf.mxu0
      %v6055 = vadd.f32 %v5894, %v6054
      %v6056 = vpop.f32.mrf.mxu0
      %6057 = vmatprep.mubr.bf16.mxu0 %v4410
      %6058 = vmatmul.mubr.bf16.gmra.mxu0 %v4288
      %v6059 = vpop.f32.mrf.mxu0
      %v6060 = vadd.f32 %v5899, %v6059
      %v6061 = vpop.f32.mrf.mxu0
      %v6062 = vpop.f32.mrf.mxu0
      %v6063 = vadd.f32 %v5902, %v6062
      %v6064 = vpop.f32.mrf.mxu0
      %6065 = vmatprep.mubr.bf16.mxu0 %v4411
      %6066 = vmatmul.mubr.bf16.gmra.mxu0 %v4291
      %v6067 = vpop.f32.mrf.mxu0
      %v6068 = vadd.f32 %v5907, %v6067
      %v6069 = vpop.f32.mrf.mxu0
      %v6070 = vpop.f32.mrf.mxu0
      %v6071 = vadd.f32 %v5910, %v6070
      %v6072 = vpop.f32.mrf.mxu0
      %6073 = vmatprep.mubr.bf16.mxu0 %v4412
      %6074 = vmatmul.mubr.bf16.gmra.mxu0 %v4294
      %v6075 = vpop.f32.mrf.mxu0
      %v6076 = vadd.f32 %v5915, %v6075
      %v6077 = vpop.f32.mrf.mxu0
      %v6078 = vpop.f32.mrf.mxu0
      %v6079 = vadd.f32 %v5918, %v6078
      %v6080 = vpop.f32.mrf.mxu0
      %6081 = vmatprep.mubr.bf16.mxu0 %v4413
      %6082 = vmatmul.mubr.bf16.gmra.mxu0 %v4297
      %v6083 = vpop.f32.mrf.mxu0
      %v6084 = vadd.f32 %v5923, %v6083
      %v6085 = vpop.f32.mrf.mxu0
      %v6086 = vpop.f32.mrf.mxu0
      %v6087 = vadd.f32 %v5926, %v6086
      %v6088 = vpop.f32.mrf.mxu0
      %6089 = vmatprep.mubr.bf16.mxu0 %v4414
      %6090 = vmatmul.mubr.bf16.gmra.mxu0 %v4300
      %v6091 = vpop.f32.mrf.mxu0
      %v6092 = vadd.f32 %v5931, %v6091
      %v6093 = vpop.f32.mrf.mxu0
      %v6094 = vpop.f32.mrf.mxu0
      %v6095 = vadd.f32 %v5934, %v6094
      %v6096 = vpop.f32.mrf.mxu0
      %6097 = vmatprep.mubr.bf16.mxu0 %v4415
      %6098 = vmatmul.mubr.bf16.gmra.mxu0 %v4303
      %v6099 = vpop.f32.mrf.mxu0
      %v6100 = vadd.f32 %v5939, %v6099
      %v6101 = vpop.f32.mrf.mxu0
      %v6102 = vpop.f32.mrf.mxu0
      %v6103 = vadd.f32 %v5942, %v6102
      %v6104 = vpop.f32.mrf.mxu0
      %6105 = vmatprep.mubr.bf16.mxu0 %v4416
      %6106 = vmatmul.mubr.bf16.gmra.mxu0 %v4306
      %v6107 = vpop.f32.mrf.mxu0
      %v6108 = vadd.f32 %v5947, %v6107
      %v6109 = vpop.f32.mrf.mxu0
      %v6110 = vpop.f32.mrf.mxu0
      %v6111 = vadd.f32 %v5950, %v6110
      %v6112 = vpop.f32.mrf.mxu0
      %6113 = vmatprep.mubr.bf16.mxu0 %v4417
      %6114 = vmatmul.mubr.bf16.gmra.mxu0 %v4309
      %v6115 = vpop.f32.mrf.mxu0
      %v6116 = vadd.f32 %v5955, %v6115
      %v6117 = vpop.f32.mrf.mxu0
      %v6118 = vpop.f32.mrf.mxu0
      %v6119 = vadd.f32 %v5958, %v6118
      %v6120 = vpop.f32.mrf.mxu0
      %6121 = vmatprep.mubr.bf16.mxu0 %v4418
      %6122 = vmatmul.mubr.bf16.gmra.mxu0 %v4312
      %v6123 = vpop.f32.mrf.mxu0
      %v6124 = vadd.f32 %v5963, %v6123
      %v6125 = vpop.f32.mrf.mxu0
      %v6126 = vpop.f32.mrf.mxu0
      %v6127 = vadd.f32 %v5966, %v6126
      %v6128 = vpop.f32.mrf.mxu0
      %6129 = vmatprep.mubr.bf16.mxu0 %v4419
      %6130 = vmatmul.mubr.bf16.gmra.mxu0 %v4315
      %v6131 = vpop.f32.mrf.mxu0
      %v6132 = vadd.f32 %v5971, %v6131
      %v6133 = vpop.f32.mrf.mxu0
      %v6134 = vpop.f32.mrf.mxu0
      %v6135 = vadd.f32 %v5974, %v6134
      %v6136 = vpop.f32.mrf.mxu0
      %6137 = vmatprep.mubr.bf16.mxu0 %v4420
      %6138 = vmatmul.mubr.bf16.gmra.mxu0 %v4318
      %v6139 = vpop.f32.mrf.mxu0
      %v6140 = vadd.f32 %v5979, %v6139
      %v6141 = vpop.f32.mrf.mxu0
      %v6142 = vpop.f32.mrf.mxu0
      %v6143 = vadd.f32 %v5982, %v6142
      %v6144 = vpop.f32.mrf.mxu0
      %6145 = vmatprep.mubr.bf16.mxu0 %v4421
      %6146 = vmatmul.mubr.bf16.gmra.mxu0 %v4321
      %v6147 = vpop.f32.mrf.mxu0
      %v6148 = vadd.f32 %v5987, %v6147
      %v6149 = vpop.f32.mrf.mxu0
      %v6150 = vpop.f32.mrf.mxu0
      %v6151 = vadd.f32 %v5990, %v6150
      %v6152 = vpop.f32.mrf.mxu0
      %6153 = vmatprep.mubr.bf16.mxu0 %v4422
      %6154 = vmatmul.mubr.bf16.gmra.mxu0 %v4324
      %v6155 = vpop.f32.mrf.mxu0
      %v6156 = vadd.f32 %v5995, %v6155
      %v6157 = vpop.f32.mrf.mxu0
      %v6158 = vpop.f32.mrf.mxu0
      %v6159 = vadd.f32 %v5998, %v6158
      %v6160 = vpop.f32.mrf.mxu0
      %6161 = vmatprep.mubr.bf16.mxu0 %v4423
      %6162 = vmatmul.mubr.bf16.gmra.mxu0 %v4327
      %v6163 = vpop.f32.mrf.mxu0
      %v6164 = vadd.f32 %v6003, %v6163
      %v6165 = vpop.f32.mrf.mxu0
      %v6166 = vpop.f32.mrf.mxu0
      %v6167 = vadd.f32 %v6006, %v6166
      %v6168 = vpop.f32.mrf.mxu0
      %6169 = vdwg.mxu0
      %6170 = vmatprep.subr.bf16.mxu0 0
      %6171 = vmatpush1.bf16.msra.mxu0 %v5743
      %6172 = vmatprep.subr.bf16.mxu0 0
      %6173 = vmatpush1.bf16.msra.mxu0 %v5742
      %6174 = vmatprep.subr.bf16.mxu0 0
      %6175 = vmatpush1.bf16.msra.mxu0 %v5741
      %6176 = vmatprep.subr.bf16.mxu0 0
      %6177 = vmatpush1.bf16.msra.mxu0 %v5740
      %6178 = vmatprep.subr.bf16.mxu0 0
      %6179 = vmatpush1.bf16.msra.mxu0 %v5739
      %6180 = vmatprep.subr.bf16.mxu0 0
      %6181 = vmatpush1.bf16.msra.mxu0 %v5738
      %6182 = vmatprep.subr.bf16.mxu0 0
      %6183 = vmatpush1.bf16.msra.mxu0 %v5737
      %6184 = vmatprep.subr.bf16.mxu0 0
      %6185 = vmatpush1.bf16.msra.mxu0 %v5736
      %6186 = vmatprep.subr.bf16.mxu0 0
      %6187 = vmatpush2.bf16.msra.mxu0 %v5751
      %6188 = vmatprep.subr.bf16.mxu0 0
      %6189 = vmatpush2.bf16.msra.mxu0 %v5750
      %6190 = vmatprep.subr.bf16.mxu0 0
      %6191 = vmatpush2.bf16.msra.mxu0 %v5749
      %6192 = vmatprep.subr.bf16.mxu0 0
      %6193 = vmatpush2.bf16.msra.mxu0 %v5748
      %6194 = vmatprep.subr.bf16.mxu0 0
      %6195 = vmatpush2.bf16.msra.mxu0 %v5747
      %6196 = vmatprep.subr.bf16.mxu0 0
      %6197 = vmatpush2.bf16.msra.mxu0 %v5746
      %6198 = vmatprep.subr.bf16.mxu0 0
      %6199 = vmatpush2.bf16.msra.mxu0 %v5745
      %6200 = vmatprep.subr.bf16.mxu0 0
      %6201 = vmatpush2.bf16.msra.mxu0 %v5744
      %6202 = vmatprep.mubr.bf16.mxu0 %v4746
      %6203 = vmatmul.mubr.bf16.gmra.mxu0 %v4499
      %v6204 = vpop.f32.mrf.mxu0
      %v6205 = vadd.f32 %v6044, %v6204
      %v6206 = vpop.f32.mrf.mxu0
      %v6207 = vpop.f32.mrf.mxu0
      %v6208 = vadd.f32 %v6047, %v6207
      %v6209 = vpop.f32.mrf.mxu0
      %6210 = vmatprep.mubr.bf16.mxu0 %v4749
      %6211 = vmatmul.mubr.bf16.gmra.mxu0 %v4511
      %v6212 = vpop.f32.mrf.mxu0
      %v6213 = vadd.f32 %v6052, %v6212
      %v6214 = vpop.f32.mrf.mxu0
      %v6215 = vpop.f32.mrf.mxu0
      %v6216 = vadd.f32 %v6055, %v6215
      %v6217 = vpop.f32.mrf.mxu0
      %6218 = vmatprep.mubr.bf16.mxu0 %v4752
      %6219 = vmatmul.mubr.bf16.gmra.mxu0 %v4523
      %v6220 = vpop.f32.mrf.mxu0
      %v6221 = vadd.f32 %v6060, %v6220
      %v6222 = vpop.f32.mrf.mxu0
      %v6223 = vpop.f32.mrf.mxu0
      %v6224 = vadd.f32 %v6063, %v6223
      %v6225 = vpop.f32.mrf.mxu0
      %6226 = vmatprep.mubr.bf16.mxu0 %v4755
      %6227 = vmatmul.mubr.bf16.gmra.mxu0 %v4535
      %v6228 = vpop.f32.mrf.mxu0
      %v6229 = vadd.f32 %v6068, %v6228
      %v6230 = vpop.f32.mrf.mxu0
      %v6231 = vpop.f32.mrf.mxu0
      %v6232 = vadd.f32 %v6071, %v6231
      %v6233 = vpop.f32.mrf.mxu0
      %6234 = vmatprep.mubr.bf16.mxu0 %v4758
      %6235 = vmatmul.mubr.bf16.gmra.mxu0 %v4547
      %v6236 = vpop.f32.mrf.mxu0
      %v6237 = vadd.f32 %v6076, %v6236
      %v6238 = vpop.f32.mrf.mxu0
      %v6239 = vpop.f32.mrf.mxu0
      %v6240 = vadd.f32 %v6079, %v6239
      %v6241 = vpop.f32.mrf.mxu0
      %6242 = vmatprep.mubr.bf16.mxu0 %v4761
      %6243 = vmatmul.mubr.bf16.gmra.mxu0 %v4559
      %v6244 = vpop.f32.mrf.mxu0
      %v6245 = vadd.f32 %v6084, %v6244
      %v6246 = vpop.f32.mrf.mxu0
      %v6247 = vpop.f32.mrf.mxu0
      %v6248 = vadd.f32 %v6087, %v6247
      %v6249 = vpop.f32.mrf.mxu0
      %6250 = vmatprep.mubr.bf16.mxu0 %v4764
      %6251 = vmatmul.mubr.bf16.gmra.mxu0 %v4571
      %v6252 = vpop.f32.mrf.mxu0
      %v6253 = vadd.f32 %v6092, %v6252
      %v6254 = vpop.f32.mrf.mxu0
      %v6255 = vpop.f32.mrf.mxu0
      %v6256 = vadd.f32 %v6095, %v6255
      %v6257 = vpop.f32.mrf.mxu0
      %6258 = vmatprep.mubr.bf16.mxu0 %v4767
      %6259 = vmatmul.mubr.bf16.gmra.mxu0 %v4583
      %v6260 = vpop.f32.mrf.mxu0
      %v6261 = vadd.f32 %v6100, %v6260
      %v6262 = vpop.f32.mrf.mxu0
      %v6263 = vpop.f32.mrf.mxu0
      %v6264 = vadd.f32 %v6103, %v6263
      %v6265 = vpop.f32.mrf.mxu0
      %6266 = vmatprep.mubr.bf16.mxu0 %v4770
      %6267 = vmatmul.mubr.bf16.gmra.mxu0 %v4595
      %v6268 = vpop.f32.mrf.mxu0
      %v6269 = vadd.f32 %v6108, %v6268
      %v6270 = vpop.f32.mrf.mxu0
      %v6271 = vpop.f32.mrf.mxu0
      %v6272 = vadd.f32 %v6111, %v6271
      %v6273 = vpop.f32.mrf.mxu0
      %6274 = vmatprep.mubr.bf16.mxu0 %v4773
      %6275 = vmatmul.mubr.bf16.gmra.mxu0 %v4607
      %v6276 = vpop.f32.mrf.mxu0
      %v6277 = vadd.f32 %v6116, %v6276
      %v6278 = vpop.f32.mrf.mxu0
      %v6279 = vpop.f32.mrf.mxu0
      %v6280 = vadd.f32 %v6119, %v6279
      %v6281 = vpop.f32.mrf.mxu0
      %6282 = vmatprep.mubr.bf16.mxu0 %v4776
      %6283 = vmatmul.mubr.bf16.gmra.mxu0 %v4619
      %v6284 = vpop.f32.mrf.mxu0
      %v6285 = vadd.f32 %v6124, %v6284
      %v6286 = vpop.f32.mrf.mxu0
      %v6287 = vpop.f32.mrf.mxu0
      %v6288 = vadd.f32 %v6127, %v6287
      %v6289 = vpop.f32.mrf.mxu0
      %6290 = vmatprep.mubr.bf16.mxu0 %v4779
      %6291 = vmatmul.mubr.bf16.gmra.mxu0 %v4631
      %v6292 = vpop.f32.mrf.mxu0
      %v6293 = vadd.f32 %v6132, %v6292
      %v6294 = vpop.f32.mrf.mxu0
      %v6295 = vpop.f32.mrf.mxu0
      %v6296 = vadd.f32 %v6135, %v6295
      %v6297 = vpop.f32.mrf.mxu0
      %6298 = vmatprep.mubr.bf16.mxu0 %v4782
      %6299 = vmatmul.mubr.bf16.gmra.mxu0 %v4643
      %v6300 = vpop.f32.mrf.mxu0
      %v6301 = vadd.f32 %v6140, %v6300
      %v6302 = vpop.f32.mrf.mxu0
      %v6303 = vpop.f32.mrf.mxu0
      %v6304 = vadd.f32 %v6143, %v6303
      %v6305 = vpop.f32.mrf.mxu0
      %6306 = vmatprep.mubr.bf16.mxu0 %v4785
      %6307 = vmatmul.mubr.bf16.gmra.mxu0 %v4655
      %v6308 = vpop.f32.mrf.mxu0
      %v6309 = vadd.f32 %v6148, %v6308
      %v6310 = vpop.f32.mrf.mxu0
      %v6311 = vpop.f32.mrf.mxu0
      %v6312 = vadd.f32 %v6151, %v6311
      %v6313 = vpop.f32.mrf.mxu0
      %6314 = vmatprep.mubr.bf16.mxu0 %v4788
      %6315 = vmatmul.mubr.bf16.gmra.mxu0 %v4667
      %v6316 = vpop.f32.mrf.mxu0
      %v6317 = vadd.f32 %v6156, %v6316
      %v6318 = vpop.f32.mrf.mxu0
      %v6319 = vpop.f32.mrf.mxu0
      %v6320 = vadd.f32 %v6159, %v6319
      %v6321 = vpop.f32.mrf.mxu0
      %6322 = vmatprep.mubr.bf16.mxu0 %v4791
      %6323 = vmatmul.mubr.bf16.gmra.mxu0 %v4679
      %v6324 = vpop.f32.mrf.mxu0
      %v6325 = vadd.f32 %v6164, %v6324
      %v6326 = vpop.f32.mrf.mxu0
      %v6327 = vpop.f32.mrf.mxu0
      %v6328 = vadd.f32 %v6167, %v6327
      %v6329 = vpop.f32.mrf.mxu0
      %6330 = vdwg.mxu0
      %6331 = vmatprep.subr.bf16.mxu0 0
      %6332 = vmatpush1.bf16.msra.mxu0 %v5759
      %6333 = vmatprep.subr.bf16.mxu0 0
      %6334 = vmatpush1.bf16.msra.mxu0 %v5758
      %6335 = vmatprep.subr.bf16.mxu0 0
      %6336 = vmatpush1.bf16.msra.mxu0 %v5757
      %6337 = vmatprep.subr.bf16.mxu0 0
      %6338 = vmatpush1.bf16.msra.mxu0 %v5756
      %6339 = vmatprep.subr.bf16.mxu0 0
      %6340 = vmatpush1.bf16.msra.mxu0 %v5755
      %6341 = vmatprep.subr.bf16.mxu0 0
      %6342 = vmatpush1.bf16.msra.mxu0 %v5754
      %6343 = vmatprep.subr.bf16.mxu0 0
      %6344 = vmatpush1.bf16.msra.mxu0 %v5753
      %6345 = vmatprep.subr.bf16.mxu0 0
      %6346 = vmatpush1.bf16.msra.mxu0 %v5752
      %6347 = vmatprep.subr.bf16.mxu0 0
      %6348 = vmatpush2.bf16.msra.mxu0 %v5767
      %6349 = vmatprep.subr.bf16.mxu0 0
      %6350 = vmatpush2.bf16.msra.mxu0 %v5766
      %6351 = vmatprep.subr.bf16.mxu0 0
      %6352 = vmatpush2.bf16.msra.mxu0 %v5765
      %6353 = vmatprep.subr.bf16.mxu0 0
      %6354 = vmatpush2.bf16.msra.mxu0 %v5764
      %6355 = vmatprep.subr.bf16.mxu0 0
      %6356 = vmatpush2.bf16.msra.mxu0 %v5763
      %6357 = vmatprep.subr.bf16.mxu0 0
      %6358 = vmatpush2.bf16.msra.mxu0 %v5762
      %6359 = vmatprep.subr.bf16.mxu0 0
      %6360 = vmatpush2.bf16.msra.mxu0 %v5761
      %6361 = vmatprep.subr.bf16.mxu0 0
      %6362 = vmatpush2.bf16.msra.mxu0 %v5760
      %6363 = vmatprep.mubr.bf16.mxu0 %v4963
      %6364 = vmatmul.mubr.bf16.gmra.mxu0 %v4872
      %v6365 = vpop.f32.mrf.mxu0
      %v6366 = vadd.f32 %v6205, %v6365
      %v6367 = vpop.f32.mrf.mxu0
      %v6368 = vpop.f32.mrf.mxu0
      %v6369 = vadd.f32 %v6208, %v6368
      %v6370 = vpop.f32.mrf.mxu0
      %6371 = vmatprep.mubr.bf16.mxu0 %v4975
      %6372 = vmatmul.mubr.bf16.gmra.mxu0 %v4873
      %v6373 = vpop.f32.mrf.mxu0
      %v6374 = vadd.f32 %v6213, %v6373
      %v6375 = vpop.f32.mrf.mxu0
      %v6376 = vpop.f32.mrf.mxu0
      %v6377 = vadd.f32 %v6216, %v6376
      %v6378 = vpop.f32.mrf.mxu0
      %6379 = vmatprep.mubr.bf16.mxu0 %v4987
      %6380 = vmatmul.mubr.bf16.gmra.mxu0 %v4874
      %v6381 = vpop.f32.mrf.mxu0
      %v6382 = vadd.f32 %v6221, %v6381
      %v6383 = vpop.f32.mrf.mxu0
      %v6384 = vpop.f32.mrf.mxu0
      %v6385 = vadd.f32 %v6224, %v6384
      %v6386 = vpop.f32.mrf.mxu0
      %6387 = vmatprep.mubr.bf16.mxu0 %v4999
      %6388 = vmatmul.mubr.bf16.gmra.mxu0 %v4875
      %v6389 = vpop.f32.mrf.mxu0
      %v6390 = vadd.f32 %v6229, %v6389
      %v6391 = vpop.f32.mrf.mxu0
      %v6392 = vpop.f32.mrf.mxu0
      %v6393 = vadd.f32 %v6232, %v6392
      %v6394 = vpop.f32.mrf.mxu0
      %6395 = vmatprep.mubr.bf16.mxu0 %v5011
      %6396 = vmatmul.mubr.bf16.gmra.mxu0 %v4876
      %v6397 = vpop.f32.mrf.mxu0
      %v6398 = vadd.f32 %v6237, %v6397
      %v6399 = vpop.f32.mrf.mxu0
      %v6400 = vpop.f32.mrf.mxu0
      %v6401 = vadd.f32 %v6240, %v6400
      %v6402 = vpop.f32.mrf.mxu0
      %6403 = vmatprep.mubr.bf16.mxu0 %v5023
      %6404 = vmatmul.mubr.bf16.gmra.mxu0 %v4877
      %v6405 = vpop.f32.mrf.mxu0
      %v6406 = vadd.f32 %v6245, %v6405
      %v6407 = vpop.f32.mrf.mxu0
      %v6408 = vpop.f32.mrf.mxu0
      %v6409 = vadd.f32 %v6248, %v6408
      %v6410 = vpop.f32.mrf.mxu0
      %6411 = vmatprep.mubr.bf16.mxu0 %v5035
      %6412 = vmatmul.mubr.bf16.gmra.mxu0 %v4878
      %v6413 = vpop.f32.mrf.mxu0
      %v6414 = vadd.f32 %v6253, %v6413
      %v6415 = vpop.f32.mrf.mxu0
      %v6416 = vpop.f32.mrf.mxu0
      %v6417 = vadd.f32 %v6256, %v6416
      %v6418 = vpop.f32.mrf.mxu0
      %6419 = vmatprep.mubr.bf16.mxu0 %v5047
      %6420 = vmatmul.mubr.bf16.gmra.mxu0 %v4879
      %v6421 = vpop.f32.mrf.mxu0
      %v6422 = vadd.f32 %v6261, %v6421
      %v6423 = vpop.f32.mrf.mxu0
      %v6424 = vpop.f32.mrf.mxu0
      %v6425 = vadd.f32 %v6264, %v6424
      %v6426 = vpop.f32.mrf.mxu0
      %6427 = vmatprep.mubr.bf16.mxu0 %v5059
      %6428 = vmatmul.mubr.bf16.gmra.mxu0 %v4880
      %v6429 = vpop.f32.mrf.mxu0
      %v6430 = vadd.f32 %v6269, %v6429
      %v6431 = vpop.f32.mrf.mxu0
      %v6432 = vpop.f32.mrf.mxu0
      %v6433 = vadd.f32 %v6272, %v6432
      %v6434 = vpop.f32.mrf.mxu0
      %6435 = vmatprep.mubr.bf16.mxu0 %v5071
      %6436 = vmatmul.mubr.bf16.gmra.mxu0 %v4881
      %v6437 = vpop.f32.mrf.mxu0
      %v6438 = vadd.f32 %v6277, %v6437
      %v6439 = vpop.f32.mrf.mxu0
      %v6440 = vpop.f32.mrf.mxu0
      %v6441 = vadd.f32 %v6280, %v6440
      %v6442 = vpop.f32.mrf.mxu0
      %6443 = vmatprep.mubr.bf16.mxu0 %v5083
      %6444 = vmatmul.mubr.bf16.gmra.mxu0 %v4882
      %v6445 = vpop.f32.mrf.mxu0
      %v6446 = vadd.f32 %v6285, %v6445
      %v6447 = vpop.f32.mrf.mxu0
      %v6448 = vpop.f32.mrf.mxu0
      %v6449 = vadd.f32 %v6288, %v6448
      %v6450 = vpop.f32.mrf.mxu0
      %6451 = vmatprep.mubr.bf16.mxu0 %v5095
      %6452 = vmatmul.mubr.bf16.gmra.mxu0 %v4883
      %v6453 = vpop.f32.mrf.mxu0
      %v6454 = vadd.f32 %v6293, %v6453
      %v6455 = vpop.f32.mrf.mxu0
      %v6456 = vpop.f32.mrf.mxu0
      %v6457 = vadd.f32 %v6296, %v6456
      %v6458 = vpop.f32.mrf.mxu0
      %6459 = vmatprep.mubr.bf16.mxu0 %v5107
      %6460 = vmatmul.mubr.bf16.gmra.mxu0 %v4884
      %v6461 = vpop.f32.mrf.mxu0
      %v6462 = vadd.f32 %v6301, %v6461
      %v6463 = vpop.f32.mrf.mxu0
      %v6464 = vpop.f32.mrf.mxu0
      %v6465 = vadd.f32 %v6304, %v6464
      %v6466 = vpop.f32.mrf.mxu0
      %6467 = vmatprep.mubr.bf16.mxu0 %v5119
      %6468 = vmatmul.mubr.bf16.gmra.mxu0 %v4885
      %v6469 = vpop.f32.mrf.mxu0
      %v6470 = vadd.f32 %v6309, %v6469
      %v6471 = vpop.f32.mrf.mxu0
      %v6472 = vpop.f32.mrf.mxu0
      %v6473 = vadd.f32 %v6312, %v6472
      %v6474 = vpop.f32.mrf.mxu0
      %6475 = vmatprep.mubr.bf16.mxu0 %v5131
      %6476 = vmatmul.mubr.bf16.gmra.mxu0 %v4886
      %v6477 = vpop.f32.mrf.mxu0
      %v6478 = vadd.f32 %v6317, %v6477
      %v6479 = vpop.f32.mrf.mxu0
      %v6480 = vpop.f32.mrf.mxu0
      %v6481 = vadd.f32 %v6320, %v6480
      %v6482 = vpop.f32.mrf.mxu0
      %6483 = vmatprep.mubr.bf16.mxu0 %v5143
      %6484 = vmatmul.mubr.bf16.gmra.mxu0 %v4887
      %v6485 = vpop.f32.mrf.mxu0
      %v6486 = vadd.f32 %v6325, %v6485
      %v6487 = vpop.f32.mrf.mxu0
      %v6488 = vpop.f32.mrf.mxu0
      %v6489 = vadd.f32 %v6328, %v6488
      %v6490 = vpop.f32.mrf.mxu0
      %6491 = vdwg.mxu0
      %6492 = vmatprep.subr.bf16.mxu0 0
      %6493 = vmatpush1.bf16.msra.mxu0 %v5775
      %6494 = vmatprep.subr.bf16.mxu0 0
      %6495 = vmatpush1.bf16.msra.mxu0 %v5774
      %6496 = vmatprep.subr.bf16.mxu0 0
      %6497 = vmatpush1.bf16.msra.mxu0 %v5773
      %6498 = vmatprep.subr.bf16.mxu0 0
      %6499 = vmatpush1.bf16.msra.mxu0 %v5772
      %6500 = vmatprep.subr.bf16.mxu0 0
      %6501 = vmatpush1.bf16.msra.mxu0 %v5771
      %6502 = vmatprep.subr.bf16.mxu0 0
      %6503 = vmatpush1.bf16.msra.mxu0 %v5770
      %6504 = vmatprep.subr.bf16.mxu0 0
      %6505 = vmatpush1.bf16.msra.mxu0 %v5769
      %6506 = vmatprep.subr.bf16.mxu0 0
      %6507 = vmatpush1.bf16.msra.mxu0 %v5768
      %6508 = vmatprep.subr.bf16.mxu0 0
      %6509 = vmatpush2.bf16.msra.mxu0 0
      %6510 = vmatprep.subr.bf16.mxu0 0
      %6511 = vmatpush2.bf16.msra.mxu0 0
      %6512 = vmatprep.subr.bf16.mxu0 0
      %6513 = vmatpush2.bf16.msra.mxu0 0
      %6514 = vmatprep.subr.bf16.mxu0 0
      %6515 = vmatpush2.bf16.msra.mxu0 0
      %6516 = vmatprep.subr.bf16.mxu0 0
      %6517 = vmatpush2.bf16.msra.mxu0 0
      %6518 = vmatprep.subr.bf16.mxu0 0
      %6519 = vmatpush2.bf16.msra.mxu0 0
      %6520 = vmatprep.subr.bf16.mxu0 0
      %6521 = vmatpush2.bf16.msra.mxu0 0
      %6522 = vmatprep.subr.bf16.mxu0 0
      %6523 = vmatpush2.bf16.msra.mxu0 0
      %6524 = vmatprep.mubr.bf16.mxu0 0
      %6525 = vmatmul.mubr.bf16.gmra.mxu0 %v5210
      %v6526 = vpop.f32.mrf.mxu0
      %v6527 = vadd.f32 %v6366, %v6526
      %v6528 = vpop.f32.mrf.mxu0
      %v6529 = vpop.f32.mrf.mxu0
      %v6530 = vadd.f32 %v6369, %v6529
      %v6531 = vpop.f32.mrf.mxu0
      %6532 = vmatprep.mubr.bf16.mxu0 0
      %6533 = vmatmul.mubr.bf16.gmra.mxu0 %v5213
      %v6534 = vpop.f32.mrf.mxu0
      %v6535 = vadd.f32 %v6374, %v6534
      %v6536 = vpop.f32.mrf.mxu0
      %v6537 = vpop.f32.mrf.mxu0
      %v6538 = vadd.f32 %v6377, %v6537
      %v6539 = vpop.f32.mrf.mxu0
      %6540 = vmatprep.mubr.bf16.mxu0 0
      %6541 = vmatmul.mubr.bf16.gmra.mxu0 %v5216
      %v6542 = vpop.f32.mrf.mxu0
      %v6543 = vadd.f32 %v6382, %v6542
      %v6544 = vpop.f32.mrf.mxu0
      %v6545 = vpop.f32.mrf.mxu0
      %v6546 = vadd.f32 %v6385, %v6545
      %v6547 = vpop.f32.mrf.mxu0
      %6548 = vmatprep.mubr.bf16.mxu0 0
      %6549 = vmatmul.mubr.bf16.gmra.mxu0 %v5219
      %v6550 = vpop.f32.mrf.mxu0
      %v6551 = vadd.f32 %v6390, %v6550
      %v6552 = vpop.f32.mrf.mxu0
      %v6553 = vpop.f32.mrf.mxu0
      %v6554 = vadd.f32 %v6393, %v6553
      %v6555 = vpop.f32.mrf.mxu0
      %6556 = vmatprep.mubr.bf16.mxu0 0
      %6557 = vmatmul.mubr.bf16.gmra.mxu0 %v5222
      %v6558 = vpop.f32.mrf.mxu0
      %v6559 = vadd.f32 %v6398, %v6558
      %v6560 = vpop.f32.mrf.mxu0
      %v6561 = vpop.f32.mrf.mxu0
      %v6562 = vadd.f32 %v6401, %v6561
      %v6563 = vpop.f32.mrf.mxu0
      %6564 = vmatprep.mubr.bf16.mxu0 0
      %6565 = vmatmul.mubr.bf16.gmra.mxu0 %v5225
      %v6566 = vpop.f32.mrf.mxu0
      %v6567 = vadd.f32 %v6406, %v6566
      %v6568 = vpop.f32.mrf.mxu0
      %v6569 = vpop.f32.mrf.mxu0
      %v6570 = vadd.f32 %v6409, %v6569
      %v6571 = vpop.f32.mrf.mxu0
      %6572 = vmatprep.mubr.bf16.mxu0 0
      %6573 = vmatmul.mubr.bf16.gmra.mxu0 %v5228
      %v6574 = vpop.f32.mrf.mxu0
      %v6575 = vadd.f32 %v6414, %v6574
      %v6576 = vpop.f32.mrf.mxu0
      %v6577 = vpop.f32.mrf.mxu0
      %v6578 = vadd.f32 %v6417, %v6577
      %v6579 = vpop.f32.mrf.mxu0
      %6580 = vmatprep.mubr.bf16.mxu0 0
      %6581 = vmatmul.mubr.bf16.gmra.mxu0 %v5231
      %v6582 = vpop.f32.mrf.mxu0
      %v6583 = vadd.f32 %v6422, %v6582
      %v6584 = vpop.f32.mrf.mxu0
      %v6585 = vpop.f32.mrf.mxu0
      %v6586 = vadd.f32 %v6425, %v6585
      %v6587 = vpop.f32.mrf.mxu0
      %6588 = vmatprep.mubr.bf16.mxu0 0
      %6589 = vmatmul.mubr.bf16.gmra.mxu0 %v5234
      %v6590 = vpop.f32.mrf.mxu0
      %v6591 = vadd.f32 %v6430, %v6590
      %v6592 = vpop.f32.mrf.mxu0
      %v6593 = vpop.f32.mrf.mxu0
      %v6594 = vadd.f32 %v6433, %v6593
      %v6595 = vpop.f32.mrf.mxu0
      %6596 = vmatprep.mubr.bf16.mxu0 0
      %6597 = vmatmul.mubr.bf16.gmra.mxu0 %v5237
      %v6598 = vpop.f32.mrf.mxu0
      %v6599 = vadd.f32 %v6438, %v6598
      %v6600 = vpop.f32.mrf.mxu0
      %v6601 = vpop.f32.mrf.mxu0
      %v6602 = vadd.f32 %v6441, %v6601
      %v6603 = vpop.f32.mrf.mxu0
      %6604 = vmatprep.mubr.bf16.mxu0 0
      %6605 = vmatmul.mubr.bf16.gmra.mxu0 %v5240
      %v6606 = vpop.f32.mrf.mxu0
      %v6607 = vadd.f32 %v6446, %v6606
      %v6608 = vpop.f32.mrf.mxu0
      %v6609 = vpop.f32.mrf.mxu0
      %v6610 = vadd.f32 %v6449, %v6609
      %v6611 = vpop.f32.mrf.mxu0
      %6612 = vmatprep.mubr.bf16.mxu0 0
      %6613 = vmatmul.mubr.bf16.gmra.mxu0 %v5243
      %v6614 = vpop.f32.mrf.mxu0
      %v6615 = vadd.f32 %v6454, %v6614
      %v6616 = vpop.f32.mrf.mxu0
      %v6617 = vpop.f32.mrf.mxu0
      %v6618 = vadd.f32 %v6457, %v6617
      %v6619 = vpop.f32.mrf.mxu0
      %6620 = vmatprep.mubr.bf16.mxu0 0
      %6621 = vmatmul.mubr.bf16.gmra.mxu0 %v5246
      %v6622 = vpop.f32.mrf.mxu0
      %v6623 = vadd.f32 %v6462, %v6622
      %v6624 = vpop.f32.mrf.mxu0
      %v6625 = vpop.f32.mrf.mxu0
      %v6626 = vadd.f32 %v6465, %v6625
      %v6627 = vpop.f32.mrf.mxu0
      %6628 = vmatprep.mubr.bf16.mxu0 0
      %6629 = vmatmul.mubr.bf16.gmra.mxu0 %v5249
      %v6630 = vpop.f32.mrf.mxu0
      %v6631 = vadd.f32 %v6470, %v6630
      %v6632 = vpop.f32.mrf.mxu0
      %v6633 = vpop.f32.mrf.mxu0
      %v6634 = vadd.f32 %v6473, %v6633
      %v6635 = vpop.f32.mrf.mxu0
      %6636 = vmatprep.mubr.bf16.mxu0 0
      %6637 = vmatmul.mubr.bf16.gmra.mxu0 %v5252
      %v6638 = vpop.f32.mrf.mxu0
      %v6639 = vadd.f32 %v6478, %v6638
      %v6640 = vpop.f32.mrf.mxu0
      %v6641 = vpop.f32.mrf.mxu0
      %v6642 = vadd.f32 %v6481, %v6641
      %v6643 = vpop.f32.mrf.mxu0
      %6644 = vmatprep.mubr.bf16.mxu0 0
      %6645 = vmatmul.mubr.bf16.gmra.mxu0 %v5255
      %v6646 = vpop.f32.mrf.mxu0
      %v6647 = vadd.f32 %v6486, %v6646
      %v6648 = vpop.f32.mrf.mxu0
      %v6649 = vpop.f32.mrf.mxu0
      %v6650 = vadd.f32 %v6489, %v6649
      %v6651 = vpop.f32.mrf.mxu0
      %6652 = vdwg.mxu0
      %v6653 = vld [vmem:[%s5] sm:$0x1]
      %v6655 = vlaneseq
      %v6656 = vshrl.u32 %v6655, 7
      %v6657 = vsub.s32 0, %v6656
      %v6658 = vrot.slane %v6653, %v6657
      %v6660 = vmul.f32 %v6527, %v6658
      %v6661 = vmul.f32 %v6530, %v6658
      %v6662 = vmul.f32 %v6535, %v6658
      %v6663 = vmul.f32 %v6538, %v6658
      %v6664 = vmul.f32 %v6543, %v6658
      %v6665 = vmul.f32 %v6546, %v6658
      %v6666 = vmul.f32 %v6551, %v6658
      %v6667 = vmul.f32 %v6554, %v6658
      %v6668 = vmul.f32 %v6559, %v6658
      %v6669 = vmul.f32 %v6562, %v6658
      %v6670 = vmul.f32 %v6567, %v6658
      %v6671 = vmul.f32 %v6570, %v6658
      %v6672 = vmul.f32 %v6575, %v6658
      %v6673 = vmul.f32 %v6578, %v6658
      %v6674 = vmul.f32 %v6583, %v6658
      %v6675 = vmul.f32 %v6586, %v6658
      %v6676 = vmul.f32 %v6591, %v6658
      %v6677 = vmul.f32 %v6594, %v6658
      %v6678 = vmul.f32 %v6599, %v6658
      %v6679 = vmul.f32 %v6602, %v6658
      %v6680 = vmul.f32 %v6607, %v6658
      %v6681 = vmul.f32 %v6610, %v6658
      %v6682 = vmul.f32 %v6615, %v6658
      %v6683 = vmul.f32 %v6618, %v6658
      %v6684 = vmul.f32 %v6623, %v6658
      %v6685 = vmul.f32 %v6626, %v6658
      %v6686 = vmul.f32 %v6631, %v6658
      %v6687 = vmul.f32 %v6634, %v6658
      %v6688 = vmul.f32 %v6639, %v6658
      %v6689 = vmul.f32 %v6642, %v6658
      %v6690 = vmul.f32 %v6647, %v6658
      %v6691 = vmul.f32 %v6650, %v6658
      %v6692 = vld [vmem:[%s6] sm:$0x1]
      %v6694 = vlaneseq
      %v6695 = vshrl.u32 %v6694, 7
      %v6696 = vsub.s32 0, %v6695
      %v6697 = vrot.slane %v6692, %v6696
      %v6699 = vadd.f32 %v6660, %v6697
      %v6700 = vadd.f32 %v6661, %v6697
      %v6701 = vadd.f32 %v6662, %v6697
      %v6702 = vadd.f32 %v6663, %v6697
      %v6703 = vadd.f32 %v6664, %v6697
      %v6704 = vadd.f32 %v6665, %v6697
      %v6705 = vadd.f32 %v6666, %v6697
      %v6706 = vadd.f32 %v6667, %v6697
      %v6707 = vadd.f32 %v6668, %v6697
      %v6708 = vadd.f32 %v6669, %v6697
      %v6709 = vadd.f32 %v6670, %v6697
      %v6710 = vadd.f32 %v6671, %v6697
      %v6711 = vadd.f32 %v6672, %v6697
      %v6712 = vadd.f32 %v6673, %v6697
      %v6713 = vadd.f32 %v6674, %v6697
      %v6714 = vadd.f32 %v6675, %v6697
      %v6715 = vadd.f32 %v6676, %v6697
      %v6716 = vadd.f32 %v6677, %v6697
      %v6717 = vadd.f32 %v6678, %v6697
      %v6718 = vadd.f32 %v6679, %v6697
      %v6719 = vadd.f32 %v6680, %v6697
      %v6720 = vadd.f32 %v6681, %v6697
      %v6721 = vadd.f32 %v6682, %v6697
      %v6722 = vadd.f32 %v6683, %v6697
      %v6723 = vadd.f32 %v6684, %v6697
      %v6724 = vadd.f32 %v6685, %v6697
      %v6725 = vadd.f32 %v6686, %v6697
      %v6726 = vadd.f32 %v6687, %v6697
      %v6727 = vadd.f32 %v6688, %v6697
      %v6728 = vadd.f32 %v6689, %v6697
      %v6729 = vadd.f32 %v6690, %v6697
      %v6730 = vadd.f32 %v6691, %v6697
      %v6731 = vmax.f32 %v6699, 0.0
      %v6732 = vmax.f32 %v6700, 0.0
      %v6733 = vmax.f32 %v6701, 0.0
      %v6734 = vmax.f32 %v6702, 0.0
      %v6735 = vmax.f32 %v6703, 0.0
      %v6736 = vmax.f32 %v6704, 0.0
      %v6737 = vmax.f32 %v6705, 0.0
      %v6738 = vmax.f32 %v6706, 0.0
      %v6739 = vmax.f32 %v6707, 0.0
      %v6740 = vmax.f32 %v6708, 0.0
      %v6741 = vmax.f32 %v6709, 0.0
      %v6742 = vmax.f32 %v6710, 0.0
      %v6743 = vmax.f32 %v6711, 0.0
      %v6744 = vmax.f32 %v6712, 0.0
      %v6745 = vmax.f32 %v6713, 0.0
      %v6746 = vmax.f32 %v6714, 0.0
      %v6747 = vmax.f32 %v6715, 0.0
      %v6748 = vmax.f32 %v6716, 0.0
      %v6749 = vmax.f32 %v6717, 0.0
      %v6750 = vmax.f32 %v6718, 0.0
      %v6751 = vmax.f32 %v6719, 0.0
      %v6752 = vmax.f32 %v6720, 0.0
      %v6753 = vmax.f32 %v6721, 0.0
      %v6754 = vmax.f32 %v6722, 0.0
      %v6755 = vmax.f32 %v6723, 0.0
      %v6756 = vmax.f32 %v6724, 0.0
      %v6757 = vmax.f32 %v6725, 0.0
      %v6758 = vmax.f32 %v6726, 0.0
      %v6759 = vmax.f32 %v6727, 0.0
      %v6760 = vmax.f32 %v6728, 0.0
      %v6761 = vmax.f32 %v6729, 0.0
      %v6762 = vmax.f32 %v6730, 0.0
      %6763 = vxpose.xlu0.b32.start [1/16] %v6731, 128
      %6764 = vxpose.xlu0.b32.cont [2/16] %v6732, 128
      %6765 = vxpose.xlu0.b32.cont [3/16] %v6733, 128
      %6766 = vxpose.xlu0.b32.cont [4/16] %v6734, 128
      %6767 = vxpose.xlu0.b32.cont [5/16] %v6735, 128
      %6768 = vxpose.xlu0.b32.cont [6/16] %v6736, 128
      %6769 = vxpose.xlu0.b32.cont [7/16] %v6737, 128
      %6770 = vxpose.xlu0.b32.cont [8/16] %v6738, 128
      %6771 = vxpose.xlu0.b32.cont [9/16] %v6739, 128
      %6772 = vxpose.xlu0.b32.cont [10/16] %v6740, 128
      %6773 = vxpose.xlu0.b32.cont [11/16] %v6741, 128
      %6774 = vxpose.xlu0.b32.cont [12/16] %v6742, 128
      %6775 = vxpose.xlu0.b32.cont [13/16] %v6743, 128
      %6776 = vxpose.xlu0.b32.cont [14/16] %v6744, 128
      %6777 = vxpose.xlu0.b32.cont [15/16] %v6745, 128
      %6778 = vxpose.xlu0.b32.end [16/16] %v6746, 128
      %v6779 = vpop.trf.xlu0
      %v6780 = vpop.trf.xlu0
      %v6781 = vpop.trf.xlu0
      %v6782 = vpop.trf.xlu0
      %v6783 = vpop.trf.xlu0
      %v6784 = vpop.trf.xlu0
      %v6785 = vpop.trf.xlu0
      %v6786 = vpop.trf.xlu0
      %v6787 = vpop.trf.xlu0
      %v6788 = vpop.trf.xlu0
      %v6789 = vpop.trf.xlu0
      %v6790 = vpop.trf.xlu0
      %v6791 = vpop.trf.xlu0
      %v6792 = vpop.trf.xlu0
      %v6793 = vpop.trf.xlu0
      %v6794 = vpop.trf.xlu0
      %6795 = vxpose.xlu0.b32.start [1/16] %v6747, 128
      %6796 = vxpose.xlu0.b32.cont [2/16] %v6748, 128
      %6797 = vxpose.xlu0.b32.cont [3/16] %v6749, 128
      %6798 = vxpose.xlu0.b32.cont [4/16] %v6750, 128
      %6799 = vxpose.xlu0.b32.cont [5/16] %v6751, 128
      %6800 = vxpose.xlu0.b32.cont [6/16] %v6752, 128
      %6801 = vxpose.xlu0.b32.cont [7/16] %v6753, 128
      %6802 = vxpose.xlu0.b32.cont [8/16] %v6754, 128
      %6803 = vxpose.xlu0.b32.cont [9/16] %v6755, 128
      %6804 = vxpose.xlu0.b32.cont [10/16] %v6756, 128
      %6805 = vxpose.xlu0.b32.cont [11/16] %v6757, 128
      %6806 = vxpose.xlu0.b32.cont [12/16] %v6758, 128
      %6807 = vxpose.xlu0.b32.cont [13/16] %v6759, 128
      %6808 = vxpose.xlu0.b32.cont [14/16] %v6760, 128
      %6809 = vxpose.xlu0.b32.cont [15/16] %v6761, 128
      %6810 = vxpose.xlu0.b32.end [16/16] %v6762, 128
      %v6811 = vpop.trf.xlu0
      %v6812 = vpop.trf.xlu0
      %v6813 = vpop.trf.xlu0
      %v6814 = vpop.trf.xlu0
      %v6815 = vpop.trf.xlu0
      %v6816 = vpop.trf.xlu0
      %v6817 = vpop.trf.xlu0
      %v6818 = vpop.trf.xlu0
      %v6819 = vpop.trf.xlu0
      %v6820 = vpop.trf.xlu0
      %v6821 = vpop.trf.xlu0
      %v6822 = vpop.trf.xlu0
      %v6823 = vpop.trf.xlu0
      %v6824 = vpop.trf.xlu0
      %v6825 = vpop.trf.xlu0
      %v6826 = vpop.trf.xlu0
      %6827 = vst [vmem:[%s278] sm:$0xff] %v6779
      %6828 = vst [vmem:[%s278 + $0x8] sm:$0xff] %v6811
      %p6829 = scmp.lt.s32.totalorder %s18, 1
      %s6830 = scalar_select %p6829, %s18, 1
      %s6831 = smul.addr %s6830, 2
      %s6832 = smul.addr %s6831, 8
      %s6833 = scalar_lea.vmem %s7, %s6832
      // Predicated region
      $region49: #{double_conv_forward.1} parent=47 // pred_check
        %p6834 = pneg %p188
      $region50: #{double_conv_forward.1} parent=47 // pred_check_branch
        %6836 = sbr.rel (%p6834) target = $region52
      $region51: #{double_conv_forward.1} parent=47 // pred_region
        _
      $region52: #{double_conv_forward.1} parent=47 // pred_fallthru
        _
    $region48: #{double_conv_forward.1} parent=5 // pred_fallthru
      _
    %p6837 = scmp.le.s32.totalorder 2, %s13
    // Predicated region
    $region53: #{double_conv_forward.1} parent=5 // pred_check
      %p6838 = pneg %p6837
    $region54: #{double_conv_forward.1} parent=5 // pred_check_branch
      %6840 = sbr.rel (%p6838) target = $region56
    $region55: #{double_conv_forward.1} parent=5 // pred_region
      %s6841 = ssub.s32 %s13, 2
      // Predicated region
      $region57: #{double_conv_forward.1} parent=55 // pred_check
        %p6842 = pneg %p194
      $region58: #{double_conv_forward.1} parent=55 // pred_check_branch
        %6844 = sbr.rel (%p6842) target = $region60
      $region59: #{double_conv_forward.1} parent=55 // pred_region
        %p6845 = scmp.lt.s32.totalorder %s19, 1
        %s6846 = scalar_select %p6845, %s19, 1
        %s6847 = smul.addr %s6846, 2
        %s6848 = smul.addr %s6847, 8
        %s6849 = scalar_lea.vmem %s7, %s6848
      $region60: #{double_conv_forward.1} parent=55 // pred_fallthru
        _
    $region56: #{double_conv_forward.1} parent=5 // pred_fallthru
      _
  $region6: #{double_conv_forward.1} parent=0 // loop_footer
    %s17 = sadd.s32 1, %s13
  $region7: #{double_conv_forward.1} parent=0 // loop_footer_branch
    %12 = sbr.rel target = $region3
  $region8: #{double_conv_forward.1} parent=0 // loop_exit
    _

</llo_original>
